<compile_context>
chip_gen: v5e
topology: v5e:2x2
jax: 0.10.0
libtpu: 0.0.40
codegen_flags: <defaults>
</compile_context>

<pallas_src>
import jax
import jax.numpy as jnp
from jax import lax
from jax.experimental import pallas as pl
from jax.experimental.pallas import tpu as pltpu


def _full_spec(shape):
    nd = len(shape)
    return pl.BlockSpec(shape, lambda *_: (0,) * nd)


# ----------------------------------------------------------------------------
# One fused kernel: dual interleaved DynamicLSTM + mean pool + 2x bi-linear
# attention + vis2text + dense head.
#   DynamicLSTM semantics: outputs past the valid length are zeroed
#   (packed-sequence), hidden/cell state frozen past the length.
#   Single combined bias b == b_ih + b_hh of torch.nn.LSTM (i,f,g,o gate order).
#   Attention(hidden_dim, 'bi_linear'), single head, eval mode (dropout = id):
#     kx = Wk k + bk ; qx = Wq q + bq ; score = (qx W) kx^T
#     masked softmax over valid memory length ; out = proj(score @ kx).
# ----------------------------------------------------------------------------
def mmian_kernel(x_ctx_ref, x_asp_ref,
                 tlen_col_ref, alen_col_ref, tlen_row_ref, alen_row_ref,
                 wih_c_ref, whh_c_ref, b_c_ref,
                 wih_a_ref, whh_a_ref, b_a_ref,
                 wk_a_ref, bk_a_ref, wq_a_ref, bq_a_ref,
                 wbil_a_ref, wproj_a_ref, bproj_a_ref,
                 wk_c_ref, bk_c_ref, wq_c_ref, bq_c_ref,
                 wbil_c_ref, wproj_c_ref, bproj_c_ref,
                 vis_ref, wv_ref, bv_ref, wd_ref, bd_ref,
                 out_ref, ctx_scr, asp_scr):
    Lt, B, E = x_ctx_ref.shape          # time-major (L, B, E)
    La = x_asp_ref.shape[0]
    H = whh_c_ref.shape[0]

    # ---- hoisted input projections: one big MXU matmul per LSTM, kept as
    # traced values (a few vregs) -- no scratch store/reload in front of step 0.
    pre_c = (jnp.dot(x_ctx_ref[...].reshape(Lt * B, E), wih_c_ref[...],
                     preferred_element_type=jnp.float32)
             + b_c_ref[...]).reshape(Lt, B, 4 * H)
    pre_a = (jnp.dot(x_asp_ref[...].reshape(La * B, E), wih_a_ref[...],
                     preferred_element_type=jnp.float32)
             + b_a_ref[...]).reshape(La, B, 4 * H)

    whh_c = whh_c_ref[...]              # (H, 4H)
    whh_a = whh_a_ref[...]
    tlen = tlen_col_ref[...]            # (B, 1) int32
    alen = alen_col_ref[...]

    # Hoisted lane-index mask selecting the tanh (g) block of the fused gates.
    lane = lax.broadcasted_iota(jnp.int32, (B, 4 * H), 1)
    g_mask = (lane >= 2 * H) & (lane < 3 * H)

    def cell(gates, c):
        # One full-width sigmoid + one full-width tanh (2 EUP pushes/step)
        # blended by the hoisted lane mask, instead of 4 per-slice pushes.
        act = jnp.where(g_mask, jnp.tanh(gates), jax.nn.sigmoid(gates))
        i = act[:, 0 * H:1 * H]
        f = act[:, 1 * H:2 * H]
        g = act[:, 2 * H:3 * H]
        o = act[:, 3 * H:4 * H]
        c_new = f * c + i * g
        h_new = o * jnp.tanh(c_new)
        return h_new, c_new

    h_c = jnp.zeros((B, H), jnp.float32)
    c_c = jnp.zeros((B, H), jnp.float32)
    h_a = jnp.zeros((B, H), jnp.float32)
    c_a = jnp.zeros((B, H), jnp.float32)

    # Statically-unrolled, interleaved recurrences: two independent
    # MXU-push -> EUP -> VPU chains per iteration hide each other's latency.
    # The aspect LSTM only runs its own La steps (no padding to Lt).
    for t in range(max(Lt, La)):
        if t < Lt:
            gates = pre_c[t] + jnp.dot(h_c, whh_c,
                                       preferred_element_type=jnp.float32)
            hn, cn = cell(gates, c_c)
            valid = t < tlen                       # (B,1), broadcasts over lanes
            h_c = jnp.where(valid, hn, h_c)
            c_c = jnp.where(valid, cn, c_c)
            ctx_scr[t] = jnp.where(valid, hn, 0.0)
        if t < La:
            gates = pre_a[t] + jnp.dot(h_a, whh_a,
                                       preferred_element_type=jnp.float32)
            hn, cn = cell(gates, c_a)
            valid = t < alen
            h_a = jnp.where(valid, hn, h_a)
            c_a = jnp.where(valid, cn, c_a)
            asp_scr[t] = jnp.where(valid, hn, 0.0)

    # ---- mean pooling over time (padded steps already zeroed) ----
    ctx_all = ctx_scr[...]                         # (Lt, B, H)
    asp_all = asp_scr[...]                         # (La, B, H)
    tlen_f = jnp.maximum(tlen.astype(jnp.float32), 1.0)   # (B,1)
    alen_f = jnp.maximum(alen.astype(jnp.float32), 1.0)
    avg_context = jnp.sum(ctx_all, axis=0) / tlen_f        # (B,H)
    avg_aspect = jnp.sum(asp_all, axis=0) / alen_f

    # ---- bi-linear attention (masked softmax over valid memory length) ----
    def bi_linear_attn(keys, Lk, q, len_row_ref,
                       wk, bk, wq, bq, wbil, wproj, bproj):
        kx = (jnp.dot(keys.reshape(Lk * B, H), wk[...],
                      preferred_element_type=jnp.float32)
              + bk[...]).reshape(Lk, B, H)
        qx = jnp.dot(q, wq[...], preferred_element_type=jnp.float32) + bq[...]
        qw = jnp.dot(qx, wbil[...], preferred_element_type=jnp.float32)  # (B,H)
        # score[l,b] = <kx[l,b,:], qw[b,:]>; time-major, no transposes.
        # TODO(synk): at production H (~300) turn these two reductions into
        # batched lax.dot_general contractions on the MXU.
        score = jnp.sum(kx * qw[None, :, :], axis=-1)      # (Lk, B)
        pos = lax.broadcasted_iota(jnp.int32, (Lk, B), 0)
        mask = pos < len_row_ref[...]                       # (1,B) broadcast
        score = jnp.where(mask, score, -1e30)
        score = score - jnp.max(score, axis=0, keepdims=True)
        e = jnp.where(mask, jnp.exp(score), 0.0)
        denom = jnp.maximum(jnp.sum(e, axis=0, keepdims=True), 1e-30)
        attn = e / denom                                    # (Lk, B)
        ctx = jnp.sum(attn[:, :, None] * kx, axis=0)        # (B, H)
        return jnp.dot(ctx, wproj[...],
                       preferred_element_type=jnp.float32) + bproj[...]

    # attention_aspect : keys = aspect LSTM, query = avg_context, mask = asp_len
    aspect_final = bi_linear_attn(asp_all, La, avg_context, alen_row_ref,
                                  wk_a_ref, bk_a_ref, wq_a_ref, bq_a_ref,
                                  wbil_a_ref, wproj_a_ref, bproj_a_ref)
    # attention_context: keys = context LSTM, query = avg_aspect, mask = text_len
    context_final = bi_linear_attn(ctx_all, Lt, avg_aspect, tlen_row_ref,
                                   wk_c_ref, bk_c_ref, wq_c_ref, bq_c_ref,
                                   wbil_c_ref, wproj_c_ref, bproj_c_ref)

    # ---- head: vis2text(tanh(vis)); dense([aspect_final, context_final, conv])
    conv = (jnp.dot(jnp.tanh(vis_ref[...]), wv_ref[...],
                    preferred_element_type=jnp.float32) + bv_ref[...])  # (B,H)
    feats = jnp.concatenate([aspect_final, context_final, conv], axis=-1)  # (B,3H)
    out_ref[...] = (jnp.dot(feats, wd_ref[...],
                            preferred_element_type=jnp.float32) + bd_ref[...])


def run_mmian(x_ctx, x_asp, tlen_col, alen_col, tlen_row, alen_row,
              lstm_c, lstm_a, attn_a, attn_c, vis, wv, bv, wd, bd):
    Lt, B, _ = x_ctx.shape
    La = x_asp.shape[0]
    H = lstm_c[1].shape[0]
    P = wd.shape[1]
    args = (x_ctx, x_asp, tlen_col, alen_col, tlen_row, alen_row,
            *lstm_c, *lstm_a, *attn_a, *attn_c, vis, wv, bv, wd, bd)
    return pl.pallas_call(
        mmian_kernel,
        out_shape=jax.ShapeDtypeStruct((B, P), jnp.float32),
        in_specs=[_full_spec(a.shape) for a in args],
        out_specs=_full_spec((B, P)),
        scratch_shapes=[pltpu.VMEM((Lt, B, H), jnp.float32),   # context LSTM out
                        pltpu.VMEM((La, B, H), jnp.float32)],  # aspect LSTM out
    )(*args)


# ----------------------------------------------------------------------------
# One-time (outside jit) parameter layout prep: bias rows -> (1, N).
# ----------------------------------------------------------------------------
def prepare_params(p):
    def attn(ap):
        wk, bk, wq, bq, wbil, wproj, bproj = ap
        return (wk, bk.reshape(1, -1), wq, bq.reshape(1, -1), wbil,
                wproj, bproj.reshape(1, -1))

    return {
        "embed": p["embed"],
        "lstm_c": (p["wih_c"], p["whh_c"], p["b_c"].reshape(1, -1)),
        "lstm_a": (p["wih_a"], p["whh_a"], p["b_a"].reshape(1, -1)),
        "attn_aspect": attn(p["attn_aspect"]),
        "attn_context": attn(p["attn_context"]),
        "w_v2t": p["w_v2t"], "b_v2t": p["b_v2t"].reshape(1, -1),
        "w_dense": p["w_dense"], "b_dense": p["b_dense"].reshape(1, -1),
    }


# ----------------------------------------------------------------------------
# Full MMIAN forward (eval mode; dropout = identity).  Takes prepared params.
# ----------------------------------------------------------------------------
def mmian_forward(pp, text_idx, aspect_idx, vis_global):
    B = text_idx.shape[0]

    text_len = jnp.sum(text_idx != 0, axis=-1).astype(jnp.int32)
    asp_len = jnp.sum(aspect_idx != 0, axis=-1).astype(jnp.int32)

    # Embedding gather (plain JAX / HBM), emitted directly time-major: only the
    # tiny int32 index tensors are transposed, never the float activations.
    x_ctx = pp["embed"][text_idx.T]       # (Lt, B, E)
    x_asp = pp["embed"][aspect_idx.T]     # (La, B, E)   -- NOT padded up to Lt

    out = run_mmian(
        x_ctx, x_asp,
        text_len.reshape(B, 1), asp_len.reshape(B, 1),
        text_len.reshape(1, B), asp_len.reshape(1, B),
        pp["lstm_c"], pp["lstm_a"], pp["attn_aspect"], pp["attn_context"],
        vis_global, pp["w_v2t"], pp["b_v2t"], pp["w_dense"], pp["b_dense"])
    # TODO(synk): the PyTorch module also returns unused LSTM (h_n, c_n)
    # placeholders; only the logits carry semantics, so we return just `out`.
    return out


def init_params(key, vocab, E, H, P):
    ks = iter(jax.random.split(key, 32))

    def nrm(shape, scale=0.1):
        return scale * jax.random.normal(next(ks), shape, jnp.float32)

    embed = nrm((vocab, E)).at[0].set(0.0)   # padding_idx-style zero row

    def attn_params():
        return (nrm((H, H)), nrm((H,)),       # w_k, b_k
                nrm((H, H)), nrm((H,)),       # w_q, b_q
                nrm((H, H)),                  # bi_linear weight
                nrm((H, H)), nrm((H,)))       # proj

    return {
        "embed": embed,
        "wih_c": nrm((E, 4 * H)), "whh_c": nrm((H, 4 * H)), "b_c": nrm((4 * H,)),
        "wih_a": nrm((E, 4 * H)), "whh_a": nrm((H, 4 * H)), "b_a": nrm((4 * H,)),
        "attn_aspect": attn_params(),
        "attn_context": attn_params(),
        "w_v2t": nrm((2048, H)), "b_v2t": nrm((H,)),
        "w_dense": nrm((3 * H, P)), "b_dense": nrm((P,)),
    }


if __name__ == "__main__":
    B, L_TEXT, L_ASP = 2, 12, 4
    VOCAB, E, H, P = 50, 32, 32, 3

    key = jax.random.PRNGKey(0)
    kp, kv = jax.random.split(key)
    params = init_params(kp, VOCAB, E, H, P)
    prepped = prepare_params(params)     # hoisted out of the jitted forward

    # padded index sequences (0 = PAD): lengths 10/5 (text) and 3/2 (aspect)
    text_idx = jnp.array([[3, 7, 9, 12, 5, 8, 2, 11, 4, 6, 0, 0],
                          [10, 2, 2, 15, 7, 0, 0, 0, 0, 0, 0, 0]], dtype=jnp.int32)
    aspect_idx = jnp.array([[4, 9, 3, 0],
                            [8, 5, 0, 0]], dtype=jnp.int32)
    visual_embeds_global = 0.1 * jax.random.normal(kv, (B, 2048), jnp.float32)

    fwd = jax.jit(mmian_forward)
    out = fwd(prepped, text_idx, aspect_idx, visual_embeds_global)
    out = jax.block_until_ready(out)
    assert out.shape == (B, P)
    print("KERNEL_OK")
</pallas_src>

<mosaic_0001>
module attributes {stable_mosaic.version = 11 : i64} {
  func.func @mmian_kernel(%arg0: memref<12x2x32xf32, #tpu.memory_space<vmem>>, %arg1: memref<4x2x32xf32, #tpu.memory_space<vmem>>, %arg2: memref<2x1xi32, #tpu.memory_space<vmem>>, %arg3: memref<2x1xi32, #tpu.memory_space<vmem>>, %arg4: memref<1x2xi32, #tpu.memory_space<vmem>>, %arg5: memref<1x2xi32, #tpu.memory_space<vmem>>, %arg6: memref<32x128xf32, #tpu.memory_space<vmem>>, %arg7: memref<32x128xf32, #tpu.memory_space<vmem>>, %arg8: memref<1x128xf32, #tpu.memory_space<vmem>>, %arg9: memref<32x128xf32, #tpu.memory_space<vmem>>, %arg10: memref<32x128xf32, #tpu.memory_space<vmem>>, %arg11: memref<1x128xf32, #tpu.memory_space<vmem>>, %arg12: memref<32x32xf32, #tpu.memory_space<vmem>>, %arg13: memref<1x32xf32, #tpu.memory_space<vmem>>, %arg14: memref<32x32xf32, #tpu.memory_space<vmem>>, %arg15: memref<1x32xf32, #tpu.memory_space<vmem>>, %arg16: memref<32x32xf32, #tpu.memory_space<vmem>>, %arg17: memref<32x32xf32, #tpu.memory_space<vmem>>, %arg18: memref<1x32xf32, #tpu.memory_space<vmem>>, %arg19: memref<32x32xf32, #tpu.memory_space<vmem>>, %arg20: memref<1x32xf32, #tpu.memory_space<vmem>>, %arg21: memref<32x32xf32, #tpu.memory_space<vmem>>, %arg22: memref<1x32xf32, #tpu.memory_space<vmem>>, %arg23: memref<32x32xf32, #tpu.memory_space<vmem>>, %arg24: memref<32x32xf32, #tpu.memory_space<vmem>>, %arg25: memref<1x32xf32, #tpu.memory_space<vmem>>, %arg26: memref<2x2048xf32, #tpu.memory_space<vmem>>, %arg27: memref<2048x32xf32, #tpu.memory_space<vmem>>, %arg28: memref<1x32xf32, #tpu.memory_space<vmem>>, %arg29: memref<96x3xf32, #tpu.memory_space<vmem>>, %arg30: memref<1x3xf32, #tpu.memory_space<vmem>>, %arg31: memref<2x3xf32, #tpu.memory_space<vmem>>, %arg32: memref<12x2x32xf32, #tpu.memory_space<vmem>>, %arg33: memref<4x2x32xf32, #tpu.memory_space<vmem>>) attributes {dimension_semantics = [], scalar_prefetch = 0 : i64, scratch_operands = 2 : i64, tpu.core_type = #tpu.core_type<tc>} {
    %c0 = arith.constant 0 : index
    %c0_0 = arith.constant 0 : index
    %c0_1 = arith.constant 0 : index
    %0 = vector.load %arg0[%c0, %c0_0, %c0_1] : memref<12x2x32xf32, #tpu.memory_space<vmem>>, vector<12x2x32xf32>
    %1 = vector.shape_cast %0 : vector<12x2x32xf32> to vector<24x32xf32>
    %c0_2 = arith.constant 0 : index
    %c0_3 = arith.constant 0 : index
    %2 = vector.load %arg6[%c0_2, %c0_3] : memref<32x128xf32, #tpu.memory_space<vmem>>, vector<32x128xf32>
    %cst = arith.constant dense<0.000000e+00> : vector<24x128xf32>
    %3 = tpu.matmul %1, %2, %cst {dimension_numbers = #tpu.dot_dimension_numbers<[1], [0], [0], [1], [0, 0, 1, 1], [], []>} : vector<24x32xf32>, vector<32x128xf32>, vector<24x128xf32> -> vector<24x128xf32>
    %c0_4 = arith.constant 0 : index
    %c0_5 = arith.constant 0 : index
    %4 = vector.load %arg8[%c0_4, %c0_5] : memref<1x128xf32, #tpu.memory_space<vmem>>, vector<1x128xf32>
    %5 = vector.broadcast %4 : vector<1x128xf32> to vector<24x128xf32>
    %6 = arith.addf %3, %5 : vector<24x128xf32>
    %7 = vector.shape_cast %6 : vector<24x128xf32> to vector<12x2x128xf32>
    %c0_6 = arith.constant 0 : index
    %c0_7 = arith.constant 0 : index
    %c0_8 = arith.constant 0 : index
    %8 = vector.load %arg1[%c0_6, %c0_7, %c0_8] : memref<4x2x32xf32, #tpu.memory_space<vmem>>, vector<4x2x32xf32>
    %9 = vector.shape_cast %8 : vector<4x2x32xf32> to vector<8x32xf32>
    %c0_9 = arith.constant 0 : index
    %c0_10 = arith.constant 0 : index
    %10 = vector.load %arg9[%c0_9, %c0_10] : memref<32x128xf32, #tpu.memory_space<vmem>>, vector<32x128xf32>
    %cst_11 = arith.constant dense<0.000000e+00> : vector<8x128xf32>
    %11 = tpu.matmul %9, %10, %cst_11 {dimension_numbers = #tpu.dot_dimension_numbers<[1], [0], [0], [1], [0, 0, 1, 1], [], []>} : vector<8x32xf32>, vector<32x128xf32>, vector<8x128xf32> -> vector<8x128xf32>
    %c0_12 = arith.constant 0 : index
    %c0_13 = arith.constant 0 : index
    %12 = vector.load %arg11[%c0_12, %c0_13] : memref<1x128xf32, #tpu.memory_space<vmem>>, vector<1x128xf32>
    %13 = vector.broadcast %12 : vector<1x128xf32> to vector<8x128xf32>
    %14 = arith.addf %11, %13 : vector<8x128xf32>
    %15 = vector.shape_cast %14 : vector<8x128xf32> to vector<4x2x128xf32>
    %c0_14 = arith.constant 0 : index
    %c0_15 = arith.constant 0 : index
    %16 = vector.load %arg7[%c0_14, %c0_15] : memref<32x128xf32, #tpu.memory_space<vmem>>, vector<32x128xf32>
    %c0_16 = arith.constant 0 : index
    %c0_17 = arith.constant 0 : index
    %17 = vector.load %arg10[%c0_16, %c0_17] : memref<32x128xf32, #tpu.memory_space<vmem>>, vector<32x128xf32>
    %c0_18 = arith.constant 0 : index
    %c0_19 = arith.constant 0 : index
    %18 = vector.load %arg2[%c0_18, %c0_19] : memref<2x1xi32, #tpu.memory_space<vmem>>, vector<2x1xi32>
    %c0_20 = arith.constant 0 : index
    %c0_21 = arith.constant 0 : index
    %19 = vector.load %arg3[%c0_20, %c0_21] : memref<2x1xi32, #tpu.memory_space<vmem>>, vector<2x1xi32>
    %20 = tpu.iota {dimensions = array<i32: 1>} : vector<2x128xi32>
    %c64_i32 = arith.constant 64 : i32
    %21 = vector.broadcast %c64_i32 : i32 to vector<2x128xi32>
    %22 = arith.cmpi sge, %20, %21 : vector<2x128xi32>
    %c96_i32 = arith.constant 96 : i32
    %23 = vector.broadcast %c96_i32 : i32 to vector<2x128xi32>
    %24 = arith.cmpi slt, %20, %23 : vector<2x128xi32>
    %25 = arith.andi %22, %24 : vector<2x128xi1>
    %cst_22 = arith.constant 0.000000e+00 : f32
    %26 = vector.broadcast %cst_22 : f32 to vector<2x32xf32>
    %cst_23 = arith.constant 0.000000e+00 : f32
    %27 = vector.broadcast %cst_23 : f32 to vector<2x32xf32>
    %cst_24 = arith.constant 0.000000e+00 : f32
    %28 = vector.broadcast %cst_24 : f32 to vector<2x32xf32>
    %cst_25 = arith.constant 0.000000e+00 : f32
    %29 = vector.broadcast %cst_25 : f32 to vector<2x32xf32>
    %30 = vector.extract_strided_slice %7 {offsets = [0, 0, 0], sizes = [1, 2, 128], strides = [1, 1, 1]} : vector<12x2x128xf32> to vector<1x2x128xf32>
    %31 = vector.shape_cast %30 : vector<1x2x128xf32> to vector<2x128xf32>
    %cst_26 = arith.constant dense<0.000000e+00> : vector<2x128xf32>
    %32 = tpu.matmul %26, %16, %cst_26 {dimension_numbers = #tpu.dot_dimension_numbers<[1], [0], [0], [1], [0, 0, 1, 1], [], []>} : vector<2x32xf32>, vector<32x128xf32>, vector<2x128xf32> -> vector<2x128xf32>
    %33 = arith.addf %31, %32 : vector<2x128xf32>
    %34 = math.tanh %33 : vector<2x128xf32>
    %35 = arith.negf %33 : vector<2x128xf32>
    %36 = math.exp %35 : vector<2x128xf32>
    %cst_27 = arith.constant 1.000000e+00 : f32
    %37 = vector.broadcast %cst_27 : f32 to vector<2x128xf32>
    %38 = arith.addf %37, %36 : vector<2x128xf32>
    %39 = arith.divf %37, %38 : vector<2x128xf32>
    %40 = arith.select %25, %34, %39 : vector<2x128xi1>, vector<2x128xf32>
    %41 = vector.extract_strided_slice %40 {offsets = [0, 0], sizes = [2, 32], strides = [1, 1]} : vector<2x128xf32> to vector<2x32xf32>
    %42 = vector.extract_strided_slice %40 {offsets = [0, 32], sizes = [2, 32], strides = [1, 1]} : vector<2x128xf32> to vector<2x32xf32>
    %43 = vector.extract_strided_slice %40 {offsets = [0, 64], sizes = [2, 32], strides = [1, 1]} : vector<2x128xf32> to vector<2x32xf32>
    %44 = vector.extract_strided_slice %40 {offsets = [0, 96], sizes = [2, 32], strides = [1, 1]} : vector<2x128xf32> to vector<2x32xf32>
    %45 = arith.mulf %42, %27 : vector<2x32xf32>
    %46 = arith.mulf %41, %43 : vector<2x32xf32>
    %47 = arith.addf %45, %46 : vector<2x32xf32>
    %48 = math.tanh %47 : vector<2x32xf32>
    %49 = arith.mulf %44, %48 : vector<2x32xf32>
    %c0_i32 = arith.constant 0 : i32
    %50 = vector.broadcast %c0_i32 : i32 to vector<2x1xi32>
    %51 = arith.cmpi sgt, %18, %50 : vector<2x1xi32>
    %52 = vector.shape_cast %51 : vector<2x1xi1> to vector<2x1xi1>
    %53 = vector.broadcast %52 : vector<2x1xi1> to vector<2x32xi1>
    %54 = arith.select %53, %49, %26 : vector<2x32xi1>, vector<2x32xf32>
    %55 = vector.shape_cast %51 : vector<2x1xi1> to vector<2x1xi1>
    %56 = vector.broadcast %55 : vector<2x1xi1> to vector<2x32xi1>
    %57 = arith.select %56, %47, %27 : vector<2x32xi1>, vector<2x32xf32>
    %cst_28 = arith.constant 0.000000e+00 : f32
    %58 = vector.shape_cast %51 : vector<2x1xi1> to vector<2x1xi1>
    %59 = vector.broadcast %58 : vector<2x1xi1> to vector<2x32xi1>
    %60 = vector.broadcast %cst_28 : f32 to vector<2x32xf32>
    %61 = arith.select %59, %49, %60 : vector<2x32xi1>, vector<2x32xf32>
    %c0_29 = arith.constant 0 : index
    %c0_30 = arith.constant 0 : index
    %c0_31 = arith.constant 0 : index
    %62 = vector.load %arg32[%c0_29, %c0_30, %c0_31] : memref<12x2x32xf32, #tpu.memory_space<vmem>>, vector<1x2x32xf32>
    %63 = vector.shape_cast %62 : vector<1x2x32xf32> to vector<2x32xf32>
    %64 = vector.shape_cast %61 : vector<2x32xf32> to vector<1x2x32xf32>
    tpu.vector_store %arg32[%c0_29, %c0_30, %c0_31], %64 {strides = array<i32>} : memref<12x2x32xf32, #tpu.memory_space<vmem>>, vector<1x2x32xf32>,
    %65 = vector.extract_strided_slice %15 {offsets = [0, 0, 0], sizes = [1, 2, 128], strides = [1, 1, 1]} : vector<4x2x128xf32> to vector<1x2x128xf32>
    %66 = vector.shape_cast %65 : vector<1x2x128xf32> to vector<2x128xf32>
    %cst_32 = arith.constant dense<0.000000e+00> : vector<2x128xf32>
    %67 = tpu.matmul %28, %17, %cst_32 {dimension_numbers = #tpu.dot_dimension_numbers<[1], [0], [0], [1], [0, 0, 1, 1], [], []>} : vector<2x32xf32>, vector<32x128xf32>, vector<2x128xf32> -> vector<2x128xf32>
    %68 = arith.addf %66, %67 : vector<2x128xf32>
    %69 = math.tanh %68 : vector<2x128xf32>
    %70 = arith.negf %68 : vector<2x128xf32>
    %71 = math.exp %70 : vector<2x128xf32>
    %cst_33 = arith.constant 1.000000e+00 : f32
    %72 = vector.broadcast %cst_33 : f32 to vector<2x128xf32>
    %73 = arith.addf %72, %71 : vector<2x128xf32>
    %74 = arith.divf %72, %73 : vector<2x128xf32>
    %75 = arith.select %25, %69, %74 : vector<2x128xi1>, vector<2x128xf32>
    %76 = vector.extract_strided_slice %75 {offsets = [0, 0], sizes = [2, 32], strides = [1, 1]} : vector<2x128xf32> to vector<2x32xf32>
    %77 = vector.extract_strided_slice %75 {offsets = [0, 32], sizes = [2, 32], strides = [1, 1]} : vector<2x128xf32> to vector<2x32xf32>
    %78 = vector.extract_strided_slice %75 {offsets = [0, 64], sizes = [2, 32], strides = [1, 1]} : vector<2x128xf32> to vector<2x32xf32>
    %79 = vector.extract_strided_slice %75 {offsets = [0, 96], sizes = [2, 32], strides = [1, 1]} : vector<2x128xf32> to vector<2x32xf32>
    %80 = arith.mulf %77, %29 : vector<2x32xf32>
    %81 = arith.mulf %76, %78 : vector<2x32xf32>
    %82 = arith.addf %80, %81 : vector<2x32xf32>
    %83 = math.tanh %82 : vector<2x32xf32>
    %84 = arith.mulf %79, %83 : vector<2x32xf32>
    %c0_i32_34 = arith.constant 0 : i32
    %85 = vector.broadcast %c0_i32_34 : i32 to vector<2x1xi32>
    %86 = arith.cmpi sgt, %19, %85 : vector<2x1xi32>
    %87 = vector.shape_cast %86 : vector<2x1xi1> to vector<2x1xi1>
    %88 = vector.broadcast %87 : vector<2x1xi1> to vector<2x32xi1>
    %89 = arith.select %88, %84, %28 : vector<2x32xi1>, vector<2x32xf32>
    %90 = vector.shape_cast %86 : vector<2x1xi1> to vector<2x1xi1>
    %91 = vector.broadcast %90 : vector<2x1xi1> to vector<2x32xi1>
    %92 = arith.select %91, %82, %29 : vector<2x32xi1>, vector<2x32xf32>
    %cst_35 = arith.constant 0.000000e+00 : f32
    %93 = vector.shape_cast %86 : vector<2x1xi1> to vector<2x1xi1>
    %94 = vector.broadcast %93 : vector<2x1xi1> to vector<2x32xi1>
    %95 = vector.broadcast %cst_35 : f32 to vector<2x32xf32>
    %96 = arith.select %94, %84, %95 : vector<2x32xi1>, vector<2x32xf32>
    %c0_36 = arith.constant 0 : index
    %c0_37 = arith.constant 0 : index
    %c0_38 = arith.constant 0 : index
    %97 = vector.load %arg33[%c0_36, %c0_37, %c0_38] : memref<4x2x32xf32, #tpu.memory_space<vmem>>, vector<1x2x32xf32>
    %98 = vector.shape_cast %97 : vector<1x2x32xf32> to vector<2x32xf32>
    %99 = vector.shape_cast %96 : vector<2x32xf32> to vector<1x2x32xf32>
    tpu.vector_store %arg33[%c0_36, %c0_37, %c0_38], %99 {strides = array<i32>} : memref<4x2x32xf32, #tpu.memory_space<vmem>>, vector<1x2x32xf32>,
    %100 = vector.extract_strided_slice %7 {offsets = [1, 0, 0], sizes = [1, 2, 128], strides = [1, 1, 1]} : vector<12x2x128xf32> to vector<1x2x128xf32>
    %101 = vector.shape_cast %100 : vector<1x2x128xf32> to vector<2x128xf32>
    %cst_39 = arith.constant dense<0.000000e+00> : vector<2x128xf32>
    %102 = tpu.matmul %54, %16, %cst_39 {dimension_numbers = #tpu.dot_dimension_numbers<[1], [0], [0], [1], [0, 0, 1, 1], [], []>} : vector<2x32xf32>, vector<32x128xf32>, vector<2x128xf32> -> vector<2x128xf32>
    %103 = arith.addf %101, %102 : vector<2x128xf32>
    %104 = math.tanh %103 : vector<2x128xf32>
    %105 = arith.negf %103 : vector<2x128xf32>
    %106 = math.exp %105 : vector<2x128xf32>
    %cst_40 = arith.constant 1.000000e+00 : f32
    %107 = vector.broadcast %cst_40 : f32 to vector<2x128xf32>
    %108 = arith.addf %107, %106 : vector<2x128xf32>
    %109 = arith.divf %107, %108 : vector<2x128xf32>
    %110 = arith.select %25, %104, %109 : vector<2x128xi1>, vector<2x128xf32>
    %111 = vector.extract_strided_slice %110 {offsets = [0, 0], sizes = [2, 32], strides = [1, 1]} : vector<2x128xf32> to vector<2x32xf32>
    %112 = vector.extract_strided_slice %110 {offsets = [0, 32], sizes = [2, 32], strides = [1, 1]} : vector<2x128xf32> to vector<2x32xf32>
    %113 = vector.extract_strided_slice %110 {offsets = [0, 64], sizes = [2, 32], strides = [1, 1]} : vector<2x128xf32> to vector<2x32xf32>
    %114 = vector.extract_strided_slice %110 {offsets = [0, 96], sizes = [2, 32], strides = [1, 1]} : vector<2x128xf32> to vector<2x32xf32>
    %115 = arith.mulf %112, %57 : vector<2x32xf32>
    %116 = arith.mulf %111, %113 : vector<2x32xf32>
    %117 = arith.addf %115, %116 : vector<2x32xf32>
    %118 = math.tanh %117 : vector<2x32xf32>
    %119 = arith.mulf %114, %118 : vector<2x32xf32>
    %c1_i32 = arith.constant 1 : i32
    %120 = vector.broadcast %c1_i32 : i32 to vector<2x1xi32>
    %121 = arith.cmpi sgt, %18, %120 : vector<2x1xi32>
    %122 = vector.shape_cast %121 : vector<2x1xi1> to vector<2x1xi1>
    %123 = vector.broadcast %122 : vector<2x1xi1> to vector<2x32xi1>
    %124 = arith.select %123, %119, %54 : vector<2x32xi1>, vector<2x32xf32>
    %125 = vector.shape_cast %121 : vector<2x1xi1> to vector<2x1xi1>
    %126 = vector.broadcast %125 : vector<2x1xi1> to vector<2x32xi1>
    %127 = arith.select %126, %117, %57 : vector<2x32xi1>, vector<2x32xf32>
    %cst_41 = arith.constant 0.000000e+00 : f32
    %128 = vector.shape_cast %121 : vector<2x1xi1> to vector<2x1xi1>
    %129 = vector.broadcast %128 : vector<2x1xi1> to vector<2x32xi1>
    %130 = vector.broadcast %cst_41 : f32 to vector<2x32xf32>
    %131 = arith.select %129, %119, %130 : vector<2x32xi1>, vector<2x32xf32>
    %c1 = arith.constant 1 : index
    %c0_42 = arith.constant 0 : index
    %c0_43 = arith.constant 0 : index
    %132 = vector.load %arg32[%c1, %c0_42, %c0_43] : memref<12x2x32xf32, #tpu.memory_space<vmem>>, vector<1x2x32xf32>
    %133 = vector.shape_cast %132 : vector<1x2x32xf32> to vector<2x32xf32>
    %134 = vector.shape_cast %131 : vector<2x32xf32> to vector<1x2x32xf32>
    tpu.vector_store %arg32[%c1, %c0_42, %c0_43], %134 {strides = array<i32>} : memref<12x2x32xf32, #tpu.memory_space<vmem>>, vector<1x2x32xf32>,
    %135 = vector.extract_strided_slice %15 {offsets = [1, 0, 0], sizes = [1, 2, 128], strides = [1, 1, 1]} : vector<4x2x128xf32> to vector<1x2x128xf32>
    %136 = vector.shape_cast %135 : vector<1x2x128xf32> to vector<2x128xf32>
    %cst_44 = arith.constant dense<0.000000e+00> : vector<2x128xf32>
    %137 = tpu.matmul %89, %17, %cst_44 {dimension_numbers = #tpu.dot_dimension_numbers<[1], [0], [0], [1], [0, 0, 1, 1], [], []>} : vector<2x32xf32>, vector<32x128xf32>, vector<2x128xf32> -> vector<2x128xf32>
    %138 = arith.addf %136, %137 : vector<2x128xf32>
    %139 = math.tanh %138 : vector<2x128xf32>
    %140 = arith.negf %138 : vector<2x128xf32>
    %141 = math.exp %140 : vector<2x128xf32>
    %cst_45 = arith.constant 1.000000e+00 : f32
    %142 = vector.broadcast %cst_45 : f32 to vector<2x128xf32>
    %143 = arith.addf %142, %141 : vector<2x128xf32>
    %144 = arith.divf %142, %143 : vector<2x128xf32>
    %145 = arith.select %25, %139, %144 : vector<2x128xi1>, vector<2x128xf32>
    %146 = vector.extract_strided_slice %145 {offsets = [0, 0], sizes = [2, 32], strides = [1, 1]} : vector<2x128xf32> to vector<2x32xf32>
    %147 = vector.extract_strided_slice %145 {offsets = [0, 32], sizes = [2, 32], strides = [1, 1]} : vector<2x128xf32> to vector<2x32xf32>
    %148 = vector.extract_strided_slice %145 {offsets = [0, 64], sizes = [2, 32], strides = [1, 1]} : vector<2x128xf32> to vector<2x32xf32>
    %149 = vector.extract_strided_slice %145 {offsets = [0, 96], sizes = [2, 32], strides = [1, 1]} : vector<2x128xf32> to vector<2x32xf32>
    %150 = arith.mulf %147, %92 : vector<2x32xf32>
    %151 = arith.mulf %146, %148 : vector<2x32xf32>
    %152 = arith.addf %150, %151 : vector<2x32xf32>
    %153 = math.tanh %152 : vector<2x32xf32>
    %154 = arith.mulf %149, %153 : vector<2x32xf32>
    %c1_i32_46 = arith.constant 1 : i32
    %155 = vector.broadcast %c1_i32_46 : i32 to vector<2x1xi32>
    %156 = arith.cmpi sgt, %19, %155 : vector<2x1xi32>
    %157 = vector.shape_cast %156 : vector<2x1xi1> to vector<2x1xi1>
    %158 = vector.broadcast %157 : vector<2x1xi1> to vector<2x32xi1>
    %159 = arith.select %158, %154, %89 : vector<2x32xi1>, vector<2x32xf32>
    %160 = vector.shape_cast %156 : vector<2x1xi1> to vector<2x1xi1>
    %161 = vector.broadcast %160 : vector<2x1xi1> to vector<2x32xi1>
    %162 = arith.select %161, %152, %92 : vector<2x32xi1>, vector<2x32xf32>
    %cst_47 = arith.constant 0.000000e+00 : f32
    %163 = vector.shape_cast %156 : vector<2x1xi1> to vector<2x1xi1>
    %164 = vector.broadcast %163 : vector<2x1xi1> to vector<2x32xi1>
    %165 = vector.broadcast %cst_47 : f32 to vector<2x32xf32>
    %166 = arith.select %164, %154, %165 : vector<2x32xi1>, vector<2x32xf32>
    %c1_48 = arith.constant 1 : index
    %c0_49 = arith.constant 0 : index
    %c0_50 = arith.constant 0 : index
    %167 = vector.load %arg33[%c1_48, %c0_49, %c0_50] : memref<4x2x32xf32, #tpu.memory_space<vmem>>, vector<1x2x32xf32>
    %168 = vector.shape_cast %167 : vector<1x2x32xf32> to vector<2x32xf32>
    %169 = vector.shape_cast %166 : vector<2x32xf32> to vector<1x2x32xf32>
    tpu.vector_store %arg33[%c1_48, %c0_49, %c0_50], %169 {strides = array<i32>} : memref<4x2x32xf32, #tpu.memory_space<vmem>>, vector<1x2x32xf32>,
    %170 = vector.extract_strided_slice %7 {offsets = [2, 0, 0], sizes = [1, 2, 128], strides = [1, 1, 1]} : vector<12x2x128xf32> to vector<1x2x128xf32>
    %171 = vector.shape_cast %170 : vector<1x2x128xf32> to vector<2x128xf32>
    %cst_51 = arith.constant dense<0.000000e+00> : vector<2x128xf32>
    %172 = tpu.matmul %124, %16, %cst_51 {dimension_numbers = #tpu.dot_dimension_numbers<[1], [0], [0], [1], [0, 0, 1, 1], [], []>} : vector<2x32xf32>, vector<32x128xf32>, vector<2x128xf32> -> vector<2x128xf32>
    %173 = arith.addf %171, %172 : vector<2x128xf32>
    %174 = math.tanh %173 : vector<2x128xf32>
    %175 = arith.negf %173 : vector<2x128xf32>
    %176 = math.exp %175 : vector<2x128xf32>
    %cst_52 = arith.constant 1.000000e+00 : f32
    %177 = vector.broadcast %cst_52 : f32 to vector<2x128xf32>
    %178 = arith.addf %177, %176 : vector<2x128xf32>
    %179 = arith.divf %177, %178 : vector<2x128xf32>
    %180 = arith.select %25, %174, %179 : vector<2x128xi1>, vector<2x128xf32>
    %181 = vector.extract_strided_slice %180 {offsets = [0, 0], sizes = [2, 32], strides = [1, 1]} : vector<2x128xf32> to vector<2x32xf32>
    %182 = vector.extract_strided_slice %180 {offsets = [0, 32], sizes = [2, 32], strides = [1, 1]} : vector<2x128xf32> to vector<2x32xf32>
    %183 = vector.extract_strided_slice %180 {offsets = [0, 64], sizes = [2, 32], strides = [1, 1]} : vector<2x128xf32> to vector<2x32xf32>
    %184 = vector.extract_strided_slice %180 {offsets = [0, 96], sizes = [2, 32], strides = [1, 1]} : vector<2x128xf32> to vector<2x32xf32>
    %185 = arith.mulf %182, %127 : vector<2x32xf32>
    %186 = arith.mulf %181, %183 : vector<2x32xf32>
    %187 = arith.addf %185, %186 : vector<2x32xf32>
    %188 = math.tanh %187 : vector<2x32xf32>
    %189 = arith.mulf %184, %188 : vector<2x32xf32>
    %c2_i32 = arith.constant 2 : i32
    %190 = vector.broadcast %c2_i32 : i32 to vector<2x1xi32>
    %191 = arith.cmpi sgt, %18, %190 : vector<2x1xi32>
    %192 = vector.shape_cast %191 : vector<2x1xi1> to vector<2x1xi1>
    %193 = vector.broadcast %192 : vector<2x1xi1> to vector<2x32xi1>
    %194 = arith.select %193, %189, %124 : vector<2x32xi1>, vector<2x32xf32>
    %195 = vector.shape_cast %191 : vector<2x1xi1> to vector<2x1xi1>
    %196 = vector.broadcast %195 : vector<2x1xi1> to vector<2x32xi1>
    %197 = arith.select %196, %187, %127 : vector<2x32xi1>, vector<2x32xf32>
    %cst_53 = arith.constant 0.000000e+00 : f32
    %198 = vector.shape_cast %191 : vector<2x1xi1> to vector<2x1xi1>
    %199 = vector.broadcast %198 : vector<2x1xi1> to vector<2x32xi1>
    %200 = vector.broadcast %cst_53 : f32 to vector<2x32xf32>
    %201 = arith.select %199, %189, %200 : vector<2x32xi1>, vector<2x32xf32>
    %c2 = arith.constant 2 : index
    %c0_54 = arith.constant 0 : index
    %c0_55 = arith.constant 0 : index
    %202 = vector.load %arg32[%c2, %c0_54, %c0_55] : memref<12x2x32xf32, #tpu.memory_space<vmem>>, vector<1x2x32xf32>
    %203 = vector.shape_cast %202 : vector<1x2x32xf32> to vector<2x32xf32>
    %204 = vector.shape_cast %201 : vector<2x32xf32> to vector<1x2x32xf32>
    tpu.vector_store %arg32[%c2, %c0_54, %c0_55], %204 {strides = array<i32>} : memref<12x2x32xf32, #tpu.memory_space<vmem>>, vector<1x2x32xf32>,
    %205 = vector.extract_strided_slice %15 {offsets = [2, 0, 0], sizes = [1, 2, 128], strides = [1, 1, 1]} : vector<4x2x128xf32> to vector<1x2x128xf32>
    %206 = vector.shape_cast %205 : vector<1x2x128xf32> to vector<2x128xf32>
    %cst_56 = arith.constant dense<0.000000e+00> : vector<2x128xf32>
    %207 = tpu.matmul %159, %17, %cst_56 {dimension_numbers = #tpu.dot_dimension_numbers<[1], [0], [0], [1], [0, 0, 1, 1], [], []>} : vector<2x32xf32>, vector<32x128xf32>, vector<2x128xf32> -> vector<2x128xf32>
    %208 = arith.addf %206, %207 : vector<2x128xf32>
    %209 = math.tanh %208 : vector<2x128xf32>
    %210 = arith.negf %208 : vector<2x128xf32>
    %211 = math.exp %210 : vector<2x128xf32>
    %cst_57 = arith.constant 1.000000e+00 : f32
    %212 = vector.broadcast %cst_57 : f32 to vector<2x128xf32>
    %213 = arith.addf %212, %211 : vector<2x128xf32>
    %214 = arith.divf %212, %213 : vector<2x128xf32>
    %215 = arith.select %25, %209, %214 : vector<2x128xi1>, vector<2x128xf32>
    %216 = vector.extract_strided_slice %215 {offsets = [0, 0], sizes = [2, 32], strides = [1, 1]} : vector<2x128xf32> to vector<2x32xf32>
    %217 = vector.extract_strided_slice %215 {offsets = [0, 32], sizes = [2, 32], strides = [1, 1]} : vector<2x128xf32> to vector<2x32xf32>
    %218 = vector.extract_strided_slice %215 {offsets = [0, 64], sizes = [2, 32], strides = [1, 1]} : vector<2x128xf32> to vector<2x32xf32>
    %219 = vector.extract_strided_slice %215 {offsets = [0, 96], sizes = [2, 32], strides = [1, 1]} : vector<2x128xf32> to vector<2x32xf32>
    %220 = arith.mulf %217, %162 : vector<2x32xf32>
    %221 = arith.mulf %216, %218 : vector<2x32xf32>
    %222 = arith.addf %220, %221 : vector<2x32xf32>
    %223 = math.tanh %222 : vector<2x32xf32>
    %224 = arith.mulf %219, %223 : vector<2x32xf32>
    %c2_i32_58 = arith.constant 2 : i32
    %225 = vector.broadcast %c2_i32_58 : i32 to vector<2x1xi32>
    %226 = arith.cmpi sgt, %19, %225 : vector<2x1xi32>
    %227 = vector.shape_cast %226 : vector<2x1xi1> to vector<2x1xi1>
    %228 = vector.broadcast %227 : vector<2x1xi1> to vector<2x32xi1>
    %229 = arith.select %228, %224, %159 : vector<2x32xi1>, vector<2x32xf32>
    %230 = vector.shape_cast %226 : vector<2x1xi1> to vector<2x1xi1>
    %231 = vector.broadcast %230 : vector<2x1xi1> to vector<2x32xi1>
    %232 = arith.select %231, %222, %162 : vector<2x32xi1>, vector<2x32xf32>
    %cst_59 = arith.constant 0.000000e+00 : f32
    %233 = vector.shape_cast %226 : vector<2x1xi1> to vector<2x1xi1>
    %234 = vector.broadcast %233 : vector<2x1xi1> to vector<2x32xi1>
    %235 = vector.broadcast %cst_59 : f32 to vector<2x32xf32>
    %236 = arith.select %234, %224, %235 : vector<2x32xi1>, vector<2x32xf32>
    %c2_60 = arith.constant 2 : index
    %c0_61 = arith.constant 0 : index
    %c0_62 = arith.constant 0 : index
    %237 = vector.load %arg33[%c2_60, %c0_61, %c0_62] : memref<4x2x32xf32, #tpu.memory_space<vmem>>, vector<1x2x32xf32>
    %238 = vector.shape_cast %237 : vector<1x2x32xf32> to vector<2x32xf32>
    %239 = vector.shape_cast %236 : vector<2x32xf32> to vector<1x2x32xf32>
    tpu.vector_store %arg33[%c2_60, %c0_61, %c0_62], %239 {strides = array<i32>} : memref<4x2x32xf32, #tpu.memory_space<vmem>>, vector<1x2x32xf32>,
    %240 = vector.extract_strided_slice %7 {offsets = [3, 0, 0], sizes = [1, 2, 128], strides = [1, 1, 1]} : vector<12x2x128xf32> to vector<1x2x128xf32>
    %241 = vector.shape_cast %240 : vector<1x2x128xf32> to vector<2x128xf32>
    %cst_63 = arith.constant dense<0.000000e+00> : vector<2x128xf32>
    %242 = tpu.matmul %194, %16, %cst_63 {dimension_numbers = #tpu.dot_dimension_numbers<[1], [0], [0], [1], [0, 0, 1, 1], [], []>} : vector<2x32xf32>, vector<32x128xf32>, vector<2x128xf32> -> vector<2x128xf32>
    %243 = arith.addf %241, %242 : vector<2x128xf32>
    %244 = math.tanh %243 : vector<2x128xf32>
    %245 = arith.negf %243 : vector<2x128xf32>
    %246 = math.exp %245 : vector<2x128xf32>
    %cst_64 = arith.constant 1.000000e+00 : f32
    %247 = vector.broadcast %cst_64 : f32 to vector<2x128xf32>
    %248 = arith.addf %247, %246 : vector<2x128xf32>
    %249 = arith.divf %247, %248 : vector<2x128xf32>
    %250 = arith.select %25, %244, %249 : vector<2x128xi1>, vector<2x128xf32>
    %251 = vector.extract_strided_slice %250 {offsets = [0, 0], sizes = [2, 32], strides = [1, 1]} : vector<2x128xf32> to vector<2x32xf32>
    %252 = vector.extract_strided_slice %250 {offsets = [0, 32], sizes = [2, 32], strides = [1, 1]} : vector<2x128xf32> to vector<2x32xf32>
    %253 = vector.extract_strided_slice %250 {offsets = [0, 64], sizes = [2, 32], strides = [1, 1]} : vector<2x128xf32> to vector<2x32xf32>
    %254 = vector.extract_strided_slice %250 {offsets = [0, 96], sizes = [2, 32], strides = [1, 1]} : vector<2x128xf32> to vector<2x32xf32>
    %255 = arith.mulf %252, %197 : vector<2x32xf32>
    %256 = arith.mulf %251, %253 : vector<2x32xf32>
    %257 = arith.addf %255, %256 : vector<2x32xf32>
    %258 = math.tanh %257 : vector<2x32xf32>
    %259 = arith.mulf %254, %258 : vector<2x32xf32>
    %c3_i32 = arith.constant 3 : i32
    %260 = vector.broadcast %c3_i32 : i32 to vector<2x1xi32>
    %261 = arith.cmpi sgt, %18, %260 : vector<2x1xi32>
    %262 = vector.shape_cast %261 : vector<2x1xi1> to vector<2x1xi1>
    %263 = vector.broadcast %262 : vector<2x1xi1> to vector<2x32xi1>
    %264 = arith.select %263, %259, %194 : vector<2x32xi1>, vector<2x32xf32>
    %265 = vector.shape_cast %261 : vector<2x1xi1> to vector<2x1xi1>
    %266 = vector.broadcast %265 : vector<2x1xi1> to vector<2x32xi1>
    %267 = arith.select %266, %257, %197 : vector<2x32xi1>, vector<2x32xf32>
    %cst_65 = arith.constant 0.000000e+00 : f32
    %268 = vector.shape_cast %261 : vector<2x1xi1> to vector<2x1xi1>
    %269 = vector.broadcast %268 : vector<2x1xi1> to vector<2x32xi1>
    %270 = vector.broadcast %cst_65 : f32 to vector<2x32xf32>
    %271 = arith.select %269, %259, %270 : vector<2x32xi1>, vector<2x32xf32>
    %c3 = arith.constant 3 : index
    %c0_66 = arith.constant 0 : index
    %c0_67 = arith.constant 0 : index
    %272 = vector.load %arg32[%c3, %c0_66, %c0_67] : memref<12x2x32xf32, #tpu.memory_space<vmem>>, vector<1x2x32xf32>
    %273 = vector.shape_cast %272 : vector<1x2x32xf32> to vector<2x32xf32>
    %274 = vector.shape_cast %271 : vector<2x32xf32> to vector<1x2x32xf32>
    tpu.vector_store %arg32[%c3, %c0_66, %c0_67], %274 {strides = array<i32>} : memref<12x2x32xf32, #tpu.memory_space<vmem>>, vector<1x2x32xf32>,
    %275 = vector.extract_strided_slice %15 {offsets = [3, 0, 0], sizes = [1, 2, 128], strides = [1, 1, 1]} : vector<4x2x128xf32> to vector<1x2x128xf32>
    %276 = vector.shape_cast %275 : vector<1x2x128xf32> to vector<2x128xf32>
    %cst_68 = arith.constant dense<0.000000e+00> : vector<2x128xf32>
    %277 = tpu.matmul %229, %17, %cst_68 {dimension_numbers = #tpu.dot_dimension_numbers<[1], [0], [0], [1], [0, 0, 1, 1], [], []>} : vector<2x32xf32>, vector<32x128xf32>, vector<2x128xf32> -> vector<2x128xf32>
    %278 = arith.addf %276, %277 : vector<2x128xf32>
    %279 = math.tanh %278 : vector<2x128xf32>
    %280 = arith.negf %278 : vector<2x128xf32>
    %281 = math.exp %280 : vector<2x128xf32>
    %cst_69 = arith.constant 1.000000e+00 : f32
    %282 = vector.broadcast %cst_69 : f32 to vector<2x128xf32>
    %283 = arith.addf %282, %281 : vector<2x128xf32>
    %284 = arith.divf %282, %283 : vector<2x128xf32>
    %285 = arith.select %25, %279, %284 : vector<2x128xi1>, vector<2x128xf32>
    %286 = vector.extract_strided_slice %285 {offsets = [0, 0], sizes = [2, 32], strides = [1, 1]} : vector<2x128xf32> to vector<2x32xf32>
    %287 = vector.extract_strided_slice %285 {offsets = [0, 32], sizes = [2, 32], strides = [1, 1]} : vector<2x128xf32> to vector<2x32xf32>
    %288 = vector.extract_strided_slice %285 {offsets = [0, 64], sizes = [2, 32], strides = [1, 1]} : vector<2x128xf32> to vector<2x32xf32>
    %289 = vector.extract_strided_slice %285 {offsets = [0, 96], sizes = [2, 32], strides = [1, 1]} : vector<2x128xf32> to vector<2x32xf32>
    %290 = arith.mulf %287, %232 : vector<2x32xf32>
    %291 = arith.mulf %286, %288 : vector<2x32xf32>
    %292 = arith.addf %290, %291 : vector<2x32xf32>
    %293 = math.tanh %292 : vector<2x32xf32>
    %294 = arith.mulf %289, %293 : vector<2x32xf32>
    %c3_i32_70 = arith.constant 3 : i32
    %295 = vector.broadcast %c3_i32_70 : i32 to vector<2x1xi32>
    %296 = arith.cmpi sgt, %19, %295 : vector<2x1xi32>
    %cst_71 = arith.constant 0.000000e+00 : f32
    %297 = vector.shape_cast %296 : vector<2x1xi1> to vector<2x1xi1>
    %298 = vector.broadcast %297 : vector<2x1xi1> to vector<2x32xi1>
    %299 = vector.broadcast %cst_71 : f32 to vector<2x32xf32>
    %300 = arith.select %298, %294, %299 : vector<2x32xi1>, vector<2x32xf32>
    %c3_72 = arith.constant 3 : index
    %c0_73 = arith.constant 0 : index
    %c0_74 = arith.constant 0 : index
    %301 = vector.load %arg33[%c3_72, %c0_73, %c0_74] : memref<4x2x32xf32, #tpu.memory_space<vmem>>, vector<1x2x32xf32>
    %302 = vector.shape_cast %301 : vector<1x2x32xf32> to vector<2x32xf32>
    %303 = vector.shape_cast %300 : vector<2x32xf32> to vector<1x2x32xf32>
    tpu.vector_store %arg33[%c3_72, %c0_73, %c0_74], %303 {strides = array<i32>} : memref<4x2x32xf32, #tpu.memory_space<vmem>>, vector<1x2x32xf32>,
    %304 = vector.extract_strided_slice %7 {offsets = [4, 0, 0], sizes = [1, 2, 128], strides = [1, 1, 1]} : vector<12x2x128xf32> to vector<1x2x128xf32>
    %305 = vector.shape_cast %304 : vector<1x2x128xf32> to vector<2x128xf32>
    %cst_75 = arith.constant dense<0.000000e+00> : vector<2x128xf32>
    %306 = tpu.matmul %264, %16, %cst_75 {dimension_numbers = #tpu.dot_dimension_numbers<[1], [0], [0], [1], [0, 0, 1, 1], [], []>} : vector<2x32xf32>, vector<32x128xf32>, vector<2x128xf32> -> vector<2x128xf32>
    %307 = arith.addf %305, %306 : vector<2x128xf32>
    %308 = math.tanh %307 : vector<2x128xf32>
    %309 = arith.negf %307 : vector<2x128xf32>
    %310 = math.exp %309 : vector<2x128xf32>
    %cst_76 = arith.constant 1.000000e+00 : f32
    %311 = vector.broadcast %cst_76 : f32 to vector<2x128xf32>
    %312 = arith.addf %311, %310 : vector<2x128xf32>
    %313 = arith.divf %311, %312 : vector<2x128xf32>
    %314 = arith.select %25, %308, %313 : vector<2x128xi1>, vector<2x128xf32>
    %315 = vector.extract_strided_slice %314 {offsets = [0, 0], sizes = [2, 32], strides = [1, 1]} : vector<2x128xf32> to vector<2x32xf32>
    %316 = vector.extract_strided_slice %314 {offsets = [0, 32], sizes = [2, 32], strides = [1, 1]} : vector<2x128xf32> to vector<2x32xf32>
    %317 = vector.extract_strided_slice %314 {offsets = [0, 64], sizes = [2, 32], strides = [1, 1]} : vector<2x128xf32> to vector<2x32xf32>
    %318 = vector.extract_strided_slice %314 {offsets = [0, 96], sizes = [2, 32], strides = [1, 1]} : vector<2x128xf32> to vector<2x32xf32>
    %319 = arith.mulf %316, %267 : vector<2x32xf32>
    %320 = arith.mulf %315, %317 : vector<2x32xf32>
    %321 = arith.addf %319, %320 : vector<2x32xf32>
    %322 = math.tanh %321 : vector<2x32xf32>
    %323 = arith.mulf %318, %322 : vector<2x32xf32>
    %c4_i32 = arith.constant 4 : i32
    %324 = vector.broadcast %c4_i32 : i32 to vector<2x1xi32>
    %325 = arith.cmpi sgt, %18, %324 : vector<2x1xi32>
    %326 = vector.shape_cast %325 : vector<2x1xi1> to vector<2x1xi1>
    %327 = vector.broadcast %326 : vector<2x1xi1> to vector<2x32xi1>
    %328 = arith.select %327, %323, %264 : vector<2x32xi1>, vector<2x32xf32>
    %329 = vector.shape_cast %325 : vector<2x1xi1> to vector<2x1xi1>
    %330 = vector.broadcast %329 : vector<2x1xi1> to vector<2x32xi1>
    %331 = arith.select %330, %321, %267 : vector<2x32xi1>, vector<2x32xf32>
    %cst_77 = arith.constant 0.000000e+00 : f32
    %332 = vector.shape_cast %325 : vector<2x1xi1> to vector<2x1xi1>
    %333 = vector.broadcast %332 : vector<2x1xi1> to vector<2x32xi1>
    %334 = vector.broadcast %cst_77 : f32 to vector<2x32xf32>
    %335 = arith.select %333, %323, %334 : vector<2x32xi1>, vector<2x32xf32>
    %c4 = arith.constant 4 : index
    %c0_78 = arith.constant 0 : index
    %c0_79 = arith.constant 0 : index
    %336 = vector.load %arg32[%c4, %c0_78, %c0_79] : memref<12x2x32xf32, #tpu.memory_space<vmem>>, vector<1x2x32xf32>
    %337 = vector.shape_cast %336 : vector<1x2x32xf32> to vector<2x32xf32>
    %338 = vector.shape_cast %335 : vector<2x32xf32> to vector<1x2x32xf32>
    tpu.vector_store %arg32[%c4, %c0_78, %c0_79], %338 {strides = array<i32>} : memref<12x2x32xf32, #tpu.memory_space<vmem>>, vector<1x2x32xf32>,
    %339 = vector.extract_strided_slice %7 {offsets = [5, 0, 0], sizes = [1, 2, 128], strides = [1, 1, 1]} : vector<12x2x128xf32> to vector<1x2x128xf32>
    %340 = vector.shape_cast %339 : vector<1x2x128xf32> to vector<2x128xf32>
    %cst_80 = arith.constant dense<0.000000e+00> : vector<2x128xf32>
    %341 = tpu.matmul %328, %16, %cst_80 {dimension_numbers = #tpu.dot_dimension_numbers<[1], [0], [0], [1], [0, 0, 1, 1], [], []>} : vector<2x32xf32>, vector<32x128xf32>, vector<2x128xf32> -> vector<2x128xf32>
    %342 = arith.addf %340, %341 : vector<2x128xf32>
    %343 = math.tanh %342 : vector<2x128xf32>
    %344 = arith.negf %342 : vector<2x128xf32>
    %345 = math.exp %344 : vector<2x128xf32>
    %cst_81 = arith.constant 1.000000e+00 : f32
    %346 = vector.broadcast %cst_81 : f32 to vector<2x128xf32>
    %347 = arith.addf %346, %345 : vector<2x128xf32>
    %348 = arith.divf %346, %347 : vector<2x128xf32>
    %349 = arith.select %25, %343, %348 : vector<2x128xi1>, vector<2x128xf32>
    %350 = vector.extract_strided_slice %349 {offsets = [0, 0], sizes = [2, 32], strides = [1, 1]} : vector<2x128xf32> to vector<2x32xf32>
    %351 = vector.extract_strided_slice %349 {offsets = [0, 32], sizes = [2, 32], strides = [1, 1]} : vector<2x128xf32> to vector<2x32xf32>
    %352 = vector.extract_strided_slice %349 {offsets = [0, 64], sizes = [2, 32], strides = [1, 1]} : vector<2x128xf32> to vector<2x32xf32>
    %353 = vector.extract_strided_slice %349 {offsets = [0, 96], sizes = [2, 32], strides = [1, 1]} : vector<2x128xf32> to vector<2x32xf32>
    %354 = arith.mulf %351, %331 : vector<2x32xf32>
    %355 = arith.mulf %350, %352 : vector<2x32xf32>
    %356 = arith.addf %354, %355 : vector<2x32xf32>
    %357 = math.tanh %356 : vector<2x32xf32>
    %358 = arith.mulf %353, %357 : vector<2x32xf32>
    %c5_i32 = arith.constant 5 : i32
    %359 = vector.broadcast %c5_i32 : i32 to vector<2x1xi32>
    %360 = arith.cmpi sgt, %18, %359 : vector<2x1xi32>
    %361 = vector.shape_cast %360 : vector<2x1xi1> to vector<2x1xi1>
    %362 = vector.broadcast %361 : vector<2x1xi1> to vector<2x32xi1>
    %363 = arith.select %362, %358, %328 : vector<2x32xi1>, vector<2x32xf32>
    %364 = vector.shape_cast %360 : vector<2x1xi1> to vector<2x1xi1>
    %365 = vector.broadcast %364 : vector<2x1xi1> to vector<2x32xi1>
    %366 = arith.select %365, %356, %331 : vector<2x32xi1>, vector<2x32xf32>
    %cst_82 = arith.constant 0.000000e+00 : f32
    %367 = vector.shape_cast %360 : vector<2x1xi1> to vector<2x1xi1>
    %368 = vector.broadcast %367 : vector<2x1xi1> to vector<2x32xi1>
    %369 = vector.broadcast %cst_82 : f32 to vector<2x32xf32>
    %370 = arith.select %368, %358, %369 : vector<2x32xi1>, vector<2x32xf32>
    %c5 = arith.constant 5 : index
    %c0_83 = arith.constant 0 : index
    %c0_84 = arith.constant 0 : index
    %371 = vector.load %arg32[%c5, %c0_83, %c0_84] : memref<12x2x32xf32, #tpu.memory_space<vmem>>, vector<1x2x32xf32>
    %372 = vector.shape_cast %371 : vector<1x2x32xf32> to vector<2x32xf32>
    %373 = vector.shape_cast %370 : vector<2x32xf32> to vector<1x2x32xf32>
    tpu.vector_store %arg32[%c5, %c0_83, %c0_84], %373 {strides = array<i32>} : memref<12x2x32xf32, #tpu.memory_space<vmem>>, vector<1x2x32xf32>,
    %374 = vector.extract_strided_slice %7 {offsets = [6, 0, 0], sizes = [1, 2, 128], strides = [1, 1, 1]} : vector<12x2x128xf32> to vector<1x2x128xf32>
    %375 = vector.shape_cast %374 : vector<1x2x128xf32> to vector<2x128xf32>
    %cst_85 = arith.constant dense<0.000000e+00> : vector<2x128xf32>
    %376 = tpu.matmul %363, %16, %cst_85 {dimension_numbers = #tpu.dot_dimension_numbers<[1], [0], [0], [1], [0, 0, 1, 1], [], []>} : vector<2x32xf32>, vector<32x128xf32>, vector<2x128xf32> -> vector<2x128xf32>
    %377 = arith.addf %375, %376 : vector<2x128xf32>
    %378 = math.tanh %377 : vector<2x128xf32>
    %379 = arith.negf %377 : vector<2x128xf32>
    %380 = math.exp %379 : vector<2x128xf32>
    %cst_86 = arith.constant 1.000000e+00 : f32
    %381 = vector.broadcast %cst_86 : f32 to vector<2x128xf32>
    %382 = arith.addf %381, %380 : vector<2x128xf32>
    %383 = arith.divf %381, %382 : vector<2x128xf32>
    %384 = arith.select %25, %378, %383 : vector<2x128xi1>, vector<2x128xf32>
    %385 = vector.extract_strided_slice %384 {offsets = [0, 0], sizes = [2, 32], strides = [1, 1]} : vector<2x128xf32> to vector<2x32xf32>
    %386 = vector.extract_strided_slice %384 {offsets = [0, 32], sizes = [2, 32], strides = [1, 1]} : vector<2x128xf32> to vector<2x32xf32>
    %387 = vector.extract_strided_slice %384 {offsets = [0, 64], sizes = [2, 32], strides = [1, 1]} : vector<2x128xf32> to vector<2x32xf32>
    %388 = vector.extract_strided_slice %384 {offsets = [0, 96], sizes = [2, 32], strides = [1, 1]} : vector<2x128xf32> to vector<2x32xf32>
    %389 = arith.mulf %386, %366 : vector<2x32xf32>
    %390 = arith.mulf %385, %387 : vector<2x32xf32>
    %391 = arith.addf %389, %390 : vector<2x32xf32>
    %392 = math.tanh %391 : vector<2x32xf32>
    %393 = arith.mulf %388, %392 : vector<2x32xf32>
    %c6_i32 = arith.constant 6 : i32
    %394 = vector.broadcast %c6_i32 : i32 to vector<2x1xi32>
    %395 = arith.cmpi sgt, %18, %394 : vector<2x1xi32>
    %396 = vector.shape_cast %395 : vector<2x1xi1> to vector<2x1xi1>
    %397 = vector.broadcast %396 : vector<2x1xi1> to vector<2x32xi1>
    %398 = arith.select %397, %393, %363 : vector<2x32xi1>, vector<2x32xf32>
    %399 = vector.shape_cast %395 : vector<2x1xi1> to vector<2x1xi1>
    %400 = vector.broadcast %399 : vector<2x1xi1> to vector<2x32xi1>
    %401 = arith.select %400, %391, %366 : vector<2x32xi1>, vector<2x32xf32>
    %cst_87 = arith.constant 0.000000e+00 : f32
    %402 = vector.shape_cast %395 : vector<2x1xi1> to vector<2x1xi1>
    %403 = vector.broadcast %402 : vector<2x1xi1> to vector<2x32xi1>
    %404 = vector.broadcast %cst_87 : f32 to vector<2x32xf32>
    %405 = arith.select %403, %393, %404 : vector<2x32xi1>, vector<2x32xf32>
    %c6 = arith.constant 6 : index
    %c0_88 = arith.constant 0 : index
    %c0_89 = arith.constant 0 : index
    %406 = vector.load %arg32[%c6, %c0_88, %c0_89] : memref<12x2x32xf32, #tpu.memory_space<vmem>>, vector<1x2x32xf32>
    %407 = vector.shape_cast %406 : vector<1x2x32xf32> to vector<2x32xf32>
    %408 = vector.shape_cast %405 : vector<2x32xf32> to vector<1x2x32xf32>
    tpu.vector_store %arg32[%c6, %c0_88, %c0_89], %408 {strides = array<i32>} : memref<12x2x32xf32, #tpu.memory_space<vmem>>, vector<1x2x32xf32>,
    %409 = vector.extract_strided_slice %7 {offsets = [7, 0, 0], sizes = [1, 2, 128], strides = [1, 1, 1]} : vector<12x2x128xf32> to vector<1x2x128xf32>
    %410 = vector.shape_cast %409 : vector<1x2x128xf32> to vector<2x128xf32>
    %cst_90 = arith.constant dense<0.000000e+00> : vector<2x128xf32>
    %411 = tpu.matmul %398, %16, %cst_90 {dimension_numbers = #tpu.dot_dimension_numbers<[1], [0], [0], [1], [0, 0, 1, 1], [], []>} : vector<2x32xf32>, vector<32x128xf32>, vector<2x128xf32> -> vector<2x128xf32>
    %412 = arith.addf %410, %411 : vector<2x128xf32>
    %413 = math.tanh %412 : vector<2x128xf32>
    %414 = arith.negf %412 : vector<2x128xf32>
    %415 = math.exp %414 : vector<2x128xf32>
    %cst_91 = arith.constant 1.000000e+00 : f32
    %416 = vector.broadcast %cst_91 : f32 to vector<2x128xf32>
    %417 = arith.addf %416, %415 : vector<2x128xf32>
    %418 = arith.divf %416, %417 : vector<2x128xf32>
    %419 = arith.select %25, %413, %418 : vector<2x128xi1>, vector<2x128xf32>
    %420 = vector.extract_strided_slice %419 {offsets = [0, 0], sizes = [2, 32], strides = [1, 1]} : vector<2x128xf32> to vector<2x32xf32>
    %421 = vector.extract_strided_slice %419 {offsets = [0, 32], sizes = [2, 32], strides = [1, 1]} : vector<2x128xf32> to vector<2x32xf32>
    %422 = vector.extract_strided_slice %419 {offsets = [0, 64], sizes = [2, 32], strides = [1, 1]} : vector<2x128xf32> to vector<2x32xf32>
    %423 = vector.extract_strided_slice %419 {offsets = [0, 96], sizes = [2, 32], strides = [1, 1]} : vector<2x128xf32> to vector<2x32xf32>
    %424 = arith.mulf %421, %401 : vector<2x32xf32>
    %425 = arith.mulf %420, %422 : vector<2x32xf32>
    %426 = arith.addf %424, %425 : vector<2x32xf32>
    %427 = math.tanh %426 : vector<2x32xf32>
    %428 = arith.mulf %423, %427 : vector<2x32xf32>
    %c7_i32 = arith.constant 7 : i32
    %429 = vector.broadcast %c7_i32 : i32 to vector<2x1xi32>
    %430 = arith.cmpi sgt, %18, %429 : vector<2x1xi32>
    %431 = vector.shape_cast %430 : vector<2x1xi1> to vector<2x1xi1>
    %432 = vector.broadcast %431 : vector<2x1xi1> to vector<2x32xi1>
    %433 = arith.select %432, %428, %398 : vector<2x32xi1>, vector<2x32xf32>
    %434 = vector.shape_cast %430 : vector<2x1xi1> to vector<2x1xi1>
    %435 = vector.broadcast %434 : vector<2x1xi1> to vector<2x32xi1>
    %436 = arith.select %435, %426, %401 : vector<2x32xi1>, vector<2x32xf32>
    %cst_92 = arith.constant 0.000000e+00 : f32
    %437 = vector.shape_cast %430 : vector<2x1xi1> to vector<2x1xi1>
    %438 = vector.broadcast %437 : vector<2x1xi1> to vector<2x32xi1>
    %439 = vector.broadcast %cst_92 : f32 to vector<2x32xf32>
    %440 = arith.select %438, %428, %439 : vector<2x32xi1>, vector<2x32xf32>
    %c7 = arith.constant 7 : index
    %c0_93 = arith.constant 0 : index
    %c0_94 = arith.constant 0 : index
    %441 = vector.load %arg32[%c7, %c0_93, %c0_94] : memref<12x2x32xf32, #tpu.memory_space<vmem>>, vector<1x2x32xf32>
    %442 = vector.shape_cast %441 : vector<1x2x32xf32> to vector<2x32xf32>
    %443 = vector.shape_cast %440 : vector<2x32xf32> to vector<1x2x32xf32>
    tpu.vector_store %arg32[%c7, %c0_93, %c0_94], %443 {strides = array<i32>} : memref<12x2x32xf32, #tpu.memory_space<vmem>>, vector<1x2x32xf32>,
    %444 = vector.extract_strided_slice %7 {offsets = [8, 0, 0], sizes = [1, 2, 128], strides = [1, 1, 1]} : vector<12x2x128xf32> to vector<1x2x128xf32>
    %445 = vector.shape_cast %444 : vector<1x2x128xf32> to vector<2x128xf32>
    %cst_95 = arith.constant dense<0.000000e+00> : vector<2x128xf32>
    %446 = tpu.matmul %433, %16, %cst_95 {dimension_numbers = #tpu.dot_dimension_numbers<[1], [0], [0], [1], [0, 0, 1, 1], [], []>} : vector<2x32xf32>, vector<32x128xf32>, vector<2x128xf32> -> vector<2x128xf32>
    %447 = arith.addf %445, %446 : vector<2x128xf32>
    %448 = math.tanh %447 : vector<2x128xf32>
    %449 = arith.negf %447 : vector<2x128xf32>
    %450 = math.exp %449 : vector<2x128xf32>
    %cst_96 = arith.constant 1.000000e+00 : f32
    %451 = vector.broadcast %cst_96 : f32 to vector<2x128xf32>
    %452 = arith.addf %451, %450 : vector<2x128xf32>
    %453 = arith.divf %451, %452 : vector<2x128xf32>
    %454 = arith.select %25, %448, %453 : vector<2x128xi1>, vector<2x128xf32>
    %455 = vector.extract_strided_slice %454 {offsets = [0, 0], sizes = [2, 32], strides = [1, 1]} : vector<2x128xf32> to vector<2x32xf32>
    %456 = vector.extract_strided_slice %454 {offsets = [0, 32], sizes = [2, 32], strides = [1, 1]} : vector<2x128xf32> to vector<2x32xf32>
    %457 = vector.extract_strided_slice %454 {offsets = [0, 64], sizes = [2, 32], strides = [1, 1]} : vector<2x128xf32> to vector<2x32xf32>
    %458 = vector.extract_strided_slice %454 {offsets = [0, 96], sizes = [2, 32], strides = [1, 1]} : vector<2x128xf32> to vector<2x32xf32>
    %459 = arith.mulf %456, %436 : vector<2x32xf32>
    %460 = arith.mulf %455, %457 : vector<2x32xf32>
    %461 = arith.addf %459, %460 : vector<2x32xf32>
    %462 = math.tanh %461 : vector<2x32xf32>
    %463 = arith.mulf %458, %462 : vector<2x32xf32>
    %c8_i32 = arith.constant 8 : i32
    %464 = vector.broadcast %c8_i32 : i32 to vector<2x1xi32>
    %465 = arith.cmpi sgt, %18, %464 : vector<2x1xi32>
    %466 = vector.shape_cast %465 : vector<2x1xi1> to vector<2x1xi1>
    %467 = vector.broadcast %466 : vector<2x1xi1> to vector<2x32xi1>
    %468 = arith.select %467, %463, %433 : vector<2x32xi1>, vector<2x32xf32>
    %469 = vector.shape_cast %465 : vector<2x1xi1> to vector<2x1xi1>
    %470 = vector.broadcast %469 : vector<2x1xi1> to vector<2x32xi1>
    %471 = arith.select %470, %461, %436 : vector<2x32xi1>, vector<2x32xf32>
    %cst_97 = arith.constant 0.000000e+00 : f32
    %472 = vector.shape_cast %465 : vector<2x1xi1> to vector<2x1xi1>
    %473 = vector.broadcast %472 : vector<2x1xi1> to vector<2x32xi1>
    %474 = vector.broadcast %cst_97 : f32 to vector<2x32xf32>
    %475 = arith.select %473, %463, %474 : vector<2x32xi1>, vector<2x32xf32>
    %c8 = arith.constant 8 : index
    %c0_98 = arith.constant 0 : index
    %c0_99 = arith.constant 0 : index
    %476 = vector.load %arg32[%c8, %c0_98, %c0_99] : memref<12x2x32xf32, #tpu.memory_space<vmem>>, vector<1x2x32xf32>
    %477 = vector.shape_cast %476 : vector<1x2x32xf32> to vector<2x32xf32>
    %478 = vector.shape_cast %475 : vector<2x32xf32> to vector<1x2x32xf32>
    tpu.vector_store %arg32[%c8, %c0_98, %c0_99], %478 {strides = array<i32>} : memref<12x2x32xf32, #tpu.memory_space<vmem>>, vector<1x2x32xf32>,
    %479 = vector.extract_strided_slice %7 {offsets = [9, 0, 0], sizes = [1, 2, 128], strides = [1, 1, 1]} : vector<12x2x128xf32> to vector<1x2x128xf32>
    %480 = vector.shape_cast %479 : vector<1x2x128xf32> to vector<2x128xf32>
    %cst_100 = arith.constant dense<0.000000e+00> : vector<2x128xf32>
    %481 = tpu.matmul %468, %16, %cst_100 {dimension_numbers = #tpu.dot_dimension_numbers<[1], [0], [0], [1], [0, 0, 1, 1], [], []>} : vector<2x32xf32>, vector<32x128xf32>, vector<2x128xf32> -> vector<2x128xf32>
    %482 = arith.addf %480, %481 : vector<2x128xf32>
    %483 = math.tanh %482 : vector<2x128xf32>
    %484 = arith.negf %482 : vector<2x128xf32>
    %485 = math.exp %484 : vector<2x128xf32>
    %cst_101 = arith.constant 1.000000e+00 : f32
    %486 = vector.broadcast %cst_101 : f32 to vector<2x128xf32>
    %487 = arith.addf %486, %485 : vector<2x128xf32>
    %488 = arith.divf %486, %487 : vector<2x128xf32>
    %489 = arith.select %25, %483, %488 : vector<2x128xi1>, vector<2x128xf32>
    %490 = vector.extract_strided_slice %489 {offsets = [0, 0], sizes = [2, 32], strides = [1, 1]} : vector<2x128xf32> to vector<2x32xf32>
    %491 = vector.extract_strided_slice %489 {offsets = [0, 32], sizes = [2, 32], strides = [1, 1]} : vector<2x128xf32> to vector<2x32xf32>
    %492 = vector.extract_strided_slice %489 {offsets = [0, 64], sizes = [2, 32], strides = [1, 1]} : vector<2x128xf32> to vector<2x32xf32>
    %493 = vector.extract_strided_slice %489 {offsets = [0, 96], sizes = [2, 32], strides = [1, 1]} : vector<2x128xf32> to vector<2x32xf32>
    %494 = arith.mulf %491, %471 : vector<2x32xf32>
    %495 = arith.mulf %490, %492 : vector<2x32xf32>
    %496 = arith.addf %494, %495 : vector<2x32xf32>
    %497 = math.tanh %496 : vector<2x32xf32>
    %498 = arith.mulf %493, %497 : vector<2x32xf32>
    %c9_i32 = arith.constant 9 : i32
    %499 = vector.broadcast %c9_i32 : i32 to vector<2x1xi32>
    %500 = arith.cmpi sgt, %18, %499 : vector<2x1xi32>
    %501 = vector.shape_cast %500 : vector<2x1xi1> to vector<2x1xi1>
    %502 = vector.broadcast %501 : vector<2x1xi1> to vector<2x32xi1>
    %503 = arith.select %502, %498, %468 : vector<2x32xi1>, vector<2x32xf32>
    %504 = vector.shape_cast %500 : vector<2x1xi1> to vector<2x1xi1>
    %505 = vector.broadcast %504 : vector<2x1xi1> to vector<2x32xi1>
    %506 = arith.select %505, %496, %471 : vector<2x32xi1>, vector<2x32xf32>
    %cst_102 = arith.constant 0.000000e+00 : f32
    %507 = vector.shape_cast %500 : vector<2x1xi1> to vector<2x1xi1>
    %508 = vector.broadcast %507 : vector<2x1xi1> to vector<2x32xi1>
    %509 = vector.broadcast %cst_102 : f32 to vector<2x32xf32>
    %510 = arith.select %508, %498, %509 : vector<2x32xi1>, vector<2x32xf32>
    %c9 = arith.constant 9 : index
    %c0_103 = arith.constant 0 : index
    %c0_104 = arith.constant 0 : index
    %511 = vector.load %arg32[%c9, %c0_103, %c0_104] : memref<12x2x32xf32, #tpu.memory_space<vmem>>, vector<1x2x32xf32>
    %512 = vector.shape_cast %511 : vector<1x2x32xf32> to vector<2x32xf32>
    %513 = vector.shape_cast %510 : vector<2x32xf32> to vector<1x2x32xf32>
    tpu.vector_store %arg32[%c9, %c0_103, %c0_104], %513 {strides = array<i32>} : memref<12x2x32xf32, #tpu.memory_space<vmem>>, vector<1x2x32xf32>,
    %514 = vector.extract_strided_slice %7 {offsets = [10, 0, 0], sizes = [1, 2, 128], strides = [1, 1, 1]} : vector<12x2x128xf32> to vector<1x2x128xf32>
    %515 = vector.shape_cast %514 : vector<1x2x128xf32> to vector<2x128xf32>
    %cst_105 = arith.constant dense<0.000000e+00> : vector<2x128xf32>
    %516 = tpu.matmul %503, %16, %cst_105 {dimension_numbers = #tpu.dot_dimension_numbers<[1], [0], [0], [1], [0, 0, 1, 1], [], []>} : vector<2x32xf32>, vector<32x128xf32>, vector<2x128xf32> -> vector<2x128xf32>
    %517 = arith.addf %515, %516 : vector<2x128xf32>
    %518 = math.tanh %517 : vector<2x128xf32>
    %519 = arith.negf %517 : vector<2x128xf32>
    %520 = math.exp %519 : vector<2x128xf32>
    %cst_106 = arith.constant 1.000000e+00 : f32
    %521 = vector.broadcast %cst_106 : f32 to vector<2x128xf32>
    %522 = arith.addf %521, %520 : vector<2x128xf32>
    %523 = arith.divf %521, %522 : vector<2x128xf32>
    %524 = arith.select %25, %518, %523 : vector<2x128xi1>, vector<2x128xf32>
    %525 = vector.extract_strided_slice %524 {offsets = [0, 0], sizes = [2, 32], strides = [1, 1]} : vector<2x128xf32> to vector<2x32xf32>
    %526 = vector.extract_strided_slice %524 {offsets = [0, 32], sizes = [2, 32], strides = [1, 1]} : vector<2x128xf32> to vector<2x32xf32>
    %527 = vector.extract_strided_slice %524 {offsets = [0, 64], sizes = [2, 32], strides = [1, 1]} : vector<2x128xf32> to vector<2x32xf32>
    %528 = vector.extract_strided_slice %524 {offsets = [0, 96], sizes = [2, 32], strides = [1, 1]} : vector<2x128xf32> to vector<2x32xf32>
    %529 = arith.mulf %526, %506 : vector<2x32xf32>
    %530 = arith.mulf %525, %527 : vector<2x32xf32>
    %531 = arith.addf %529, %530 : vector<2x32xf32>
    %532 = math.tanh %531 : vector<2x32xf32>
    %533 = arith.mulf %528, %532 : vector<2x32xf32>
    %c10_i32 = arith.constant 10 : i32
    %534 = vector.broadcast %c10_i32 : i32 to vector<2x1xi32>
    %535 = arith.cmpi sgt, %18, %534 : vector<2x1xi32>
    %536 = vector.shape_cast %535 : vector<2x1xi1> to vector<2x1xi1>
    %537 = vector.broadcast %536 : vector<2x1xi1> to vector<2x32xi1>
    %538 = arith.select %537, %533, %503 : vector<2x32xi1>, vector<2x32xf32>
    %539 = vector.shape_cast %535 : vector<2x1xi1> to vector<2x1xi1>
    %540 = vector.broadcast %539 : vector<2x1xi1> to vector<2x32xi1>
    %541 = arith.select %540, %531, %506 : vector<2x32xi1>, vector<2x32xf32>
    %cst_107 = arith.constant 0.000000e+00 : f32
    %542 = vector.shape_cast %535 : vector<2x1xi1> to vector<2x1xi1>
    %543 = vector.broadcast %542 : vector<2x1xi1> to vector<2x32xi1>
    %544 = vector.broadcast %cst_107 : f32 to vector<2x32xf32>
    %545 = arith.select %543, %533, %544 : vector<2x32xi1>, vector<2x32xf32>
    %c10 = arith.constant 10 : index
    %c0_108 = arith.constant 0 : index
    %c0_109 = arith.constant 0 : index
    %546 = vector.load %arg32[%c10, %c0_108, %c0_109] : memref<12x2x32xf32, #tpu.memory_space<vmem>>, vector<1x2x32xf32>
    %547 = vector.shape_cast %546 : vector<1x2x32xf32> to vector<2x32xf32>
    %548 = vector.shape_cast %545 : vector<2x32xf32> to vector<1x2x32xf32>
    tpu.vector_store %arg32[%c10, %c0_108, %c0_109], %548 {strides = array<i32>} : memref<12x2x32xf32, #tpu.memory_space<vmem>>, vector<1x2x32xf32>,
    %549 = vector.extract_strided_slice %7 {offsets = [11, 0, 0], sizes = [1, 2, 128], strides = [1, 1, 1]} : vector<12x2x128xf32> to vector<1x2x128xf32>
    %550 = vector.shape_cast %549 : vector<1x2x128xf32> to vector<2x128xf32>
    %cst_110 = arith.constant dense<0.000000e+00> : vector<2x128xf32>
    %551 = tpu.matmul %538, %16, %cst_110 {dimension_numbers = #tpu.dot_dimension_numbers<[1], [0], [0], [1], [0, 0, 1, 1], [], []>} : vector<2x32xf32>, vector<32x128xf32>, vector<2x128xf32> -> vector<2x128xf32>
    %552 = arith.addf %550, %551 : vector<2x128xf32>
    %553 = math.tanh %552 : vector<2x128xf32>
    %554 = arith.negf %552 : vector<2x128xf32>
    %555 = math.exp %554 : vector<2x128xf32>
    %cst_111 = arith.constant 1.000000e+00 : f32
    %556 = vector.broadcast %cst_111 : f32 to vector<2x128xf32>
    %557 = arith.addf %556, %555 : vector<2x128xf32>
    %558 = arith.divf %556, %557 : vector<2x128xf32>
    %559 = arith.select %25, %553, %558 : vector<2x128xi1>, vector<2x128xf32>
    %560 = vector.extract_strided_slice %559 {offsets = [0, 0], sizes = [2, 32], strides = [1, 1]} : vector<2x128xf32> to vector<2x32xf32>
    %561 = vector.extract_strided_slice %559 {offsets = [0, 32], sizes = [2, 32], strides = [1, 1]} : vector<2x128xf32> to vector<2x32xf32>
    %562 = vector.extract_strided_slice %559 {offsets = [0, 64], sizes = [2, 32], strides = [1, 1]} : vector<2x128xf32> to vector<2x32xf32>
    %563 = vector.extract_strided_slice %559 {offsets = [0, 96], sizes = [2, 32], strides = [1, 1]} : vector<2x128xf32> to vector<2x32xf32>
    %564 = arith.mulf %561, %541 : vector<2x32xf32>
    %565 = arith.mulf %560, %562 : vector<2x32xf32>
    %566 = arith.addf %564, %565 : vector<2x32xf32>
    %567 = math.tanh %566 : vector<2x32xf32>
    %568 = arith.mulf %563, %567 : vector<2x32xf32>
    %c11_i32 = arith.constant 11 : i32
    %569 = vector.broadcast %c11_i32 : i32 to vector<2x1xi32>
    %570 = arith.cmpi sgt, %18, %569 : vector<2x1xi32>
    %cst_112 = arith.constant 0.000000e+00 : f32
    %571 = vector.shape_cast %570 : vector<2x1xi1> to vector<2x1xi1>
    %572 = vector.broadcast %571 : vector<2x1xi1> to vector<2x32xi1>
    %573 = vector.broadcast %cst_112 : f32 to vector<2x32xf32>
    %574 = arith.select %572, %568, %573 : vector<2x32xi1>, vector<2x32xf32>
    %c11 = arith.constant 11 : index
    %c0_113 = arith.constant 0 : index
    %c0_114 = arith.constant 0 : index
    %575 = vector.load %arg32[%c11, %c0_113, %c0_114] : memref<12x2x32xf32, #tpu.memory_space<vmem>>, vector<1x2x32xf32>
    %576 = vector.shape_cast %575 : vector<1x2x32xf32> to vector<2x32xf32>
    %577 = vector.shape_cast %574 : vector<2x32xf32> to vector<1x2x32xf32>
    tpu.vector_store %arg32[%c11, %c0_113, %c0_114], %577 {strides = array<i32>} : memref<12x2x32xf32, #tpu.memory_space<vmem>>, vector<1x2x32xf32>,
    %c0_115 = arith.constant 0 : index
    %c0_116 = arith.constant 0 : index
    %c0_117 = arith.constant 0 : index
    %578 = vector.load %arg32[%c0_115, %c0_116, %c0_117] : memref<12x2x32xf32, #tpu.memory_space<vmem>>, vector<12x2x32xf32>
    %c0_118 = arith.constant 0 : index
    %c0_119 = arith.constant 0 : index
    %c0_120 = arith.constant 0 : index
    %579 = vector.load %arg33[%c0_118, %c0_119, %c0_120] : memref<4x2x32xf32, #tpu.memory_space<vmem>>, vector<4x2x32xf32>
    %580 = arith.sitofp %18 : vector<2x1xi32> to vector<2x1xf32>
    %cst_121 = arith.constant 1.000000e+00 : f32
    %581 = vector.broadcast %cst_121 : f32 to vector<2x1xf32>
    %582 = arith.maximumf %580, %581 : vector<2x1xf32>
    %583 = arith.sitofp %19 : vector<2x1xi32> to vector<2x1xf32>
    %cst_122 = arith.constant 1.000000e+00 : f32
    %584 = vector.broadcast %cst_122 : f32 to vector<2x1xf32>
    %585 = arith.maximumf %583, %584 : vector<2x1xf32>
    %cst_123 = arith.constant dense<0.000000e+00> : vector<2x32xf32>
    %586 = vector.multi_reduction <add>, %578, %cst_123 [0] : vector<12x2x32xf32> to vector<2x32xf32>
    %587 = vector.broadcast %582 : vector<2x1xf32> to vector<2x32xf32>
    %588 = arith.divf %586, %587 : vector<2x32xf32>
    %cst_124 = arith.constant dense<0.000000e+00> : vector<2x32xf32>
    %589 = vector.multi_reduction <add>, %579, %cst_124 [0] : vector<4x2x32xf32> to vector<2x32xf32>
    %590 = vector.broadcast %585 : vector<2x1xf32> to vector<2x32xf32>
    %591 = arith.divf %589, %590 : vector<2x32xf32>
    %592 = vector.shape_cast %579 : vector<4x2x32xf32> to vector<8x32xf32>
    %c0_125 = arith.constant 0 : index
    %c0_126 = arith.constant 0 : index
    %593 = vector.load %arg12[%c0_125, %c0_126] : memref<32x32xf32, #tpu.memory_space<vmem>>, vector<32x32xf32>
    %cst_127 = arith.constant dense<0.000000e+00> : vector<8x32xf32>
    %594 = tpu.matmul %592, %593, %cst_127 {dimension_numbers = #tpu.dot_dimension_numbers<[1], [0], [0], [1], [0, 0, 1, 1], [], []>} : vector<8x32xf32>, vector<32x32xf32>, vector<8x32xf32> -> vector<8x32xf32>
    %c0_128 = arith.constant 0 : index
    %c0_129 = arith.constant 0 : index
    %595 = vector.load %arg13[%c0_128, %c0_129] : memref<1x32xf32, #tpu.memory_space<vmem>>, vector<1x32xf32>
    %596 = vector.broadcast %595 : vector<1x32xf32> to vector<8x32xf32>
    %597 = arith.addf %594, %596 : vector<8x32xf32>
    %598 = vector.shape_cast %597 : vector<8x32xf32> to vector<4x2x32xf32>
    %c0_130 = arith.constant 0 : index
    %c0_131 = arith.constant 0 : index
    %599 = vector.load %arg14[%c0_130, %c0_131] : memref<32x32xf32, #tpu.memory_space<vmem>>, vector<32x32xf32>
    %cst_132 = arith.constant dense<0.000000e+00> : vector<2x32xf32>
    %600 = tpu.matmul %588, %599, %cst_132 {dimension_numbers = #tpu.dot_dimension_numbers<[1], [0], [0], [1], [0, 0, 1, 1], [], []>} : vector<2x32xf32>, vector<32x32xf32>, vector<2x32xf32> -> vector<2x32xf32>
    %c0_133 = arith.constant 0 : index
    %c0_134 = arith.constant 0 : index
    %601 = vector.load %arg15[%c0_133, %c0_134] : memref<1x32xf32, #tpu.memory_space<vmem>>, vector<1x32xf32>
    %602 = vector.broadcast %601 : vector<1x32xf32> to vector<2x32xf32>
    %603 = arith.addf %600, %602 : vector<2x32xf32>
    %c0_135 = arith.constant 0 : index
    %c0_136 = arith.constant 0 : index
    %604 = vector.load %arg16[%c0_135, %c0_136] : memref<32x32xf32, #tpu.memory_space<vmem>>, vector<32x32xf32>
    %cst_137 = arith.constant dense<0.000000e+00> : vector<2x32xf32>
    %605 = tpu.matmul %603, %604, %cst_137 {dimension_numbers = #tpu.dot_dimension_numbers<[1], [0], [0], [1], [0, 0, 1, 1], [], []>} : vector<2x32xf32>, vector<32x32xf32>, vector<2x32xf32> -> vector<2x32xf32>
    %606 = vector.shape_cast %605 : vector<2x32xf32> to vector<1x2x32xf32>
    %607 = vector.broadcast %606 : vector<1x2x32xf32> to vector<4x2x32xf32>
    %608 = arith.mulf %598, %607 : vector<4x2x32xf32>
    %cst_138 = arith.constant dense<0.000000e+00> : vector<4x2xf32>
    %609 = vector.multi_reduction <add>, %608, %cst_138 [2] : vector<4x2x32xf32> to vector<4x2xf32>
    %610 = tpu.iota {dimensions = array<i32: 0>} : vector<4x2xi32>
    %c0_139 = arith.constant 0 : index
    %c0_140 = arith.constant 0 : index
    %611 = vector.load %arg5[%c0_139, %c0_140] : memref<1x2xi32, #tpu.memory_space<vmem>>, vector<1x2xi32>
    %612 = vector.broadcast %611 : vector<1x2xi32> to vector<4x2xi32>
    %613 = arith.cmpi slt, %610, %612 : vector<4x2xi32>
    %cst_141 = arith.constant -1.000000e+30 : f32
    %614 = vector.broadcast %cst_141 : f32 to vector<4x2xf32>
    %615 = arith.select %613, %609, %614 : vector<4x2xi1>, vector<4x2xf32>
    %cst_142 = arith.constant dense<0xFF800000> : vector<2xf32>
    %616 = vector.multi_reduction <maximumf>, %615, %cst_142 [0] : vector<4x2xf32> to vector<2xf32>
    %617 = vector.shape_cast %616 : vector<2xf32> to vector<1x2xf32>
    %618 = vector.broadcast %617 : vector<1x2xf32> to vector<4x2xf32>
    %619 = arith.subf %615, %618 : vector<4x2xf32>
    %620 = math.exp %619 : vector<4x2xf32>
    %cst_143 = arith.constant 0.000000e+00 : f32
    %621 = vector.broadcast %cst_143 : f32 to vector<4x2xf32>
    %622 = arith.select %613, %620, %621 : vector<4x2xi1>, vector<4x2xf32>
    %cst_144 = arith.constant dense<0.000000e+00> : vector<2xf32>
    %623 = vector.multi_reduction <add>, %622, %cst_144 [0] : vector<4x2xf32> to vector<2xf32>
    %624 = vector.shape_cast %623 : vector<2xf32> to vector<1x2xf32>
    %cst_145 = arith.constant 1.000000e-30 : f32
    %625 = vector.broadcast %cst_145 : f32 to vector<1x2xf32>
    %626 = arith.maximumf %624, %625 : vector<1x2xf32>
    %627 = vector.broadcast %626 : vector<1x2xf32> to vector<4x2xf32>
    %628 = arith.divf %622, %627 : vector<4x2xf32>
    %629 = vector.shape_cast %628 : vector<4x2xf32> to vector<4x2x1xf32>
    %630 = vector.broadcast %629 : vector<4x2x1xf32> to vector<4x2x32xf32>
    %631 = arith.mulf %630, %598 : vector<4x2x32xf32>
    %cst_146 = arith.constant dense<0.000000e+00> : vector<2x32xf32>
    %632 = vector.multi_reduction <add>, %631, %cst_146 [0] : vector<4x2x32xf32> to vector<2x32xf32>
    %c0_147 = arith.constant 0 : index
    %c0_148 = arith.constant 0 : index
    %633 = vector.load %arg17[%c0_147, %c0_148] : memref<32x32xf32, #tpu.memory_space<vmem>>, vector<32x32xf32>
    %cst_149 = arith.constant dense<0.000000e+00> : vector<2x32xf32>
    %634 = tpu.matmul %632, %633, %cst_149 {dimension_numbers = #tpu.dot_dimension_numbers<[1], [0], [0], [1], [0, 0, 1, 1], [], []>} : vector<2x32xf32>, vector<32x32xf32>, vector<2x32xf32> -> vector<2x32xf32>
    %c0_150 = arith.constant 0 : index
    %c0_151 = arith.constant 0 : index
    %635 = vector.load %arg18[%c0_150, %c0_151] : memref<1x32xf32, #tpu.memory_space<vmem>>, vector<1x32xf32>
    %636 = vector.broadcast %635 : vector<1x32xf32> to vector<2x32xf32>
    %637 = arith.addf %634, %636 : vector<2x32xf32>
    %638 = vector.shape_cast %578 : vector<12x2x32xf32> to vector<24x32xf32>
    %c0_152 = arith.constant 0 : index
    %c0_153 = arith.constant 0 : index
    %639 = vector.load %arg19[%c0_152, %c0_153] : memref<32x32xf32, #tpu.memory_space<vmem>>, vector<32x32xf32>
    %cst_154 = arith.constant dense<0.000000e+00> : vector<24x32xf32>
    %640 = tpu.matmul %638, %639, %cst_154 {dimension_numbers = #tpu.dot_dimension_numbers<[1], [0], [0], [1], [0, 0, 1, 1], [], []>} : vector<24x32xf32>, vector<32x32xf32>, vector<24x32xf32> -> vector<24x32xf32>
    %c0_155 = arith.constant 0 : index
    %c0_156 = arith.constant 0 : index
    %641 = vector.load %arg20[%c0_155, %c0_156] : memref<1x32xf32, #tpu.memory_space<vmem>>, vector<1x32xf32>
    %642 = vector.broadcast %641 : vector<1x32xf32> to vector<24x32xf32>
    %643 = arith.addf %640, %642 : vector<24x32xf32>
    %644 = vector.shape_cast %643 : vector<24x32xf32> to vector<12x2x32xf32>
    %c0_157 = arith.constant 0 : index
    %c0_158 = arith.constant 0 : index
    %645 = vector.load %arg21[%c0_157, %c0_158] : memref<32x32xf32, #tpu.memory_space<vmem>>, vector<32x32xf32>
    %cst_159 = arith.constant dense<0.000000e+00> : vector<2x32xf32>
    %646 = tpu.matmul %591, %645, %cst_159 {dimension_numbers = #tpu.dot_dimension_numbers<[1], [0], [0], [1], [0, 0, 1, 1], [], []>} : vector<2x32xf32>, vector<32x32xf32>, vector<2x32xf32> -> vector<2x32xf32>
    %c0_160 = arith.constant 0 : index
    %c0_161 = arith.constant 0 : index
    %647 = vector.load %arg22[%c0_160, %c0_161] : memref<1x32xf32, #tpu.memory_space<vmem>>, vector<1x32xf32>
    %648 = vector.broadcast %647 : vector<1x32xf32> to vector<2x32xf32>
    %649 = arith.addf %646, %648 : vector<2x32xf32>
    %c0_162 = arith.constant 0 : index
    %c0_163 = arith.constant 0 : index
    %650 = vector.load %arg23[%c0_162, %c0_163] : memref<32x32xf32, #tpu.memory_space<vmem>>, vector<32x32xf32>
    %cst_164 = arith.constant dense<0.000000e+00> : vector<2x32xf32>
    %651 = tpu.matmul %649, %650, %cst_164 {dimension_numbers = #tpu.dot_dimension_numbers<[1], [0], [0], [1], [0, 0, 1, 1], [], []>} : vector<2x32xf32>, vector<32x32xf32>, vector<2x32xf32> -> vector<2x32xf32>
    %652 = vector.shape_cast %651 : vector<2x32xf32> to vector<1x2x32xf32>
    %653 = vector.broadcast %652 : vector<1x2x32xf32> to vector<12x2x32xf32>
    %654 = arith.mulf %644, %653 : vector<12x2x32xf32>
    %cst_165 = arith.constant dense<0.000000e+00> : vector<12x2xf32>
    %655 = vector.multi_reduction <add>, %654, %cst_165 [2] : vector<12x2x32xf32> to vector<12x2xf32>
    %656 = tpu.iota {dimensions = array<i32: 0>} : vector<12x2xi32>
    %c0_166 = arith.constant 0 : index
    %c0_167 = arith.constant 0 : index
    %657 = vector.load %arg4[%c0_166, %c0_167] : memref<1x2xi32, #tpu.memory_space<vmem>>, vector<1x2xi32>
    %658 = vector.broadcast %657 : vector<1x2xi32> to vector<12x2xi32>
    %659 = arith.cmpi slt, %656, %658 : vector<12x2xi32>
    %cst_168 = arith.constant -1.000000e+30 : f32
    %660 = vector.broadcast %cst_168 : f32 to vector<12x2xf32>
    %661 = arith.select %659, %655, %660 : vector<12x2xi1>, vector<12x2xf32>
    %cst_169 = arith.constant dense<0xFF800000> : vector<2xf32>
    %662 = vector.multi_reduction <maximumf>, %661, %cst_169 [0] : vector<12x2xf32> to vector<2xf32>
    %663 = vector.shape_cast %662 : vector<2xf32> to vector<1x2xf32>
    %664 = vector.broadcast %663 : vector<1x2xf32> to vector<12x2xf32>
    %665 = arith.subf %661, %664 : vector<12x2xf32>
    %666 = math.exp %665 : vector<12x2xf32>
    %cst_170 = arith.constant 0.000000e+00 : f32
    %667 = vector.broadcast %cst_170 : f32 to vector<12x2xf32>
    %668 = arith.select %659, %666, %667 : vector<12x2xi1>, vector<12x2xf32>
    %cst_171 = arith.constant dense<0.000000e+00> : vector<2xf32>
    %669 = vector.multi_reduction <add>, %668, %cst_171 [0] : vector<12x2xf32> to vector<2xf32>
    %670 = vector.shape_cast %669 : vector<2xf32> to vector<1x2xf32>
    %cst_172 = arith.constant 1.000000e-30 : f32
    %671 = vector.broadcast %cst_172 : f32 to vector<1x2xf32>
    %672 = arith.maximumf %670, %671 : vector<1x2xf32>
    %673 = vector.broadcast %672 : vector<1x2xf32> to vector<12x2xf32>
    %674 = arith.divf %668, %673 : vector<12x2xf32>
    %675 = vector.shape_cast %674 : vector<12x2xf32> to vector<12x2x1xf32>
    %676 = vector.broadcast %675 : vector<12x2x1xf32> to vector<12x2x32xf32>
    %677 = arith.mulf %676, %644 : vector<12x2x32xf32>
    %cst_173 = arith.constant dense<0.000000e+00> : vector<2x32xf32>
    %678 = vector.multi_reduction <add>, %677, %cst_173 [0] : vector<12x2x32xf32> to vector<2x32xf32>
    %c0_174 = arith.constant 0 : index
    %c0_175 = arith.constant 0 : index
    %679 = vector.load %arg24[%c0_174, %c0_175] : memref<32x32xf32, #tpu.memory_space<vmem>>, vector<32x32xf32>
    %cst_176 = arith.constant dense<0.000000e+00> : vector<2x32xf32>
    %680 = tpu.matmul %678, %679, %cst_176 {dimension_numbers = #tpu.dot_dimension_numbers<[1], [0], [0], [1], [0, 0, 1, 1], [], []>} : vector<2x32xf32>, vector<32x32xf32>, vector<2x32xf32> -> vector<2x32xf32>
    %c0_177 = arith.constant 0 : index
    %c0_178 = arith.constant 0 : index
    %681 = vector.load %arg25[%c0_177, %c0_178] : memref<1x32xf32, #tpu.memory_space<vmem>>, vector<1x32xf32>
    %682 = vector.broadcast %681 : vector<1x32xf32> to vector<2x32xf32>
    %683 = arith.addf %680, %682 : vector<2x32xf32>
    %c0_179 = arith.constant 0 : index
    %c0_180 = arith.constant 0 : index
    %684 = vector.load %arg26[%c0_179, %c0_180] : memref<2x2048xf32, #tpu.memory_space<vmem>>, vector<2x2048xf32>
    %685 = math.tanh %684 : vector<2x2048xf32>
    %c0_181 = arith.constant 0 : index
    %c0_182 = arith.constant 0 : index
    %686 = vector.load %arg27[%c0_181, %c0_182] : memref<2048x32xf32, #tpu.memory_space<vmem>>, vector<2048x32xf32>
    %cst_183 = arith.constant dense<0.000000e+00> : vector<2x32xf32>
    %687 = tpu.matmul %685, %686, %cst_183 {dimension_numbers = #tpu.dot_dimension_numbers<[1], [0], [0], [1], [0, 0, 1, 1], [], []>} : vector<2x2048xf32>, vector<2048x32xf32>, vector<2x32xf32> -> vector<2x32xf32>
    %c0_184 = arith.constant 0 : index
    %c0_185 = arith.constant 0 : index
    %688 = vector.load %arg28[%c0_184, %c0_185] : memref<1x32xf32, #tpu.memory_space<vmem>>, vector<1x32xf32>
    %689 = vector.broadcast %688 : vector<1x32xf32> to vector<2x32xf32>
    %690 = arith.addf %687, %689 : vector<2x32xf32>
    %691 = tpu.concatenate %637, %683, %690 in 1 : vector<2x32xf32>, vector<2x32xf32>, vector<2x32xf32> -> vector<2x96xf32>
    %c0_186 = arith.constant 0 : index
    %c0_187 = arith.constant 0 : index
    %692 = vector.load %arg29[%c0_186, %c0_187] : memref<96x3xf32, #tpu.memory_space<vmem>>, vector<96x3xf32>
    %cst_188 = arith.constant dense<0.000000e+00> : vector<2x3xf32>
    %693 = tpu.matmul %691, %692, %cst_188 {dimension_numbers = #tpu.dot_dimension_numbers<[1], [0], [0], [1], [0, 0, 1, 1], [], []>} : vector<2x96xf32>, vector<96x3xf32>, vector<2x3xf32> -> vector<2x3xf32>
    %c0_189 = arith.constant 0 : index
    %c0_190 = arith.constant 0 : index
    %694 = vector.load %arg30[%c0_189, %c0_190] : memref<1x3xf32, #tpu.memory_space<vmem>>, vector<1x3xf32>
    %695 = vector.broadcast %694 : vector<1x3xf32> to vector<2x3xf32>
    %696 = arith.addf %693, %695 : vector<2x3xf32>
    %c0_191 = arith.constant 0 : index
    %c0_192 = arith.constant 0 : index
    %697 = vector.load %arg31[%c0_191, %c0_192] : memref<2x3xf32, #tpu.memory_space<vmem>>, vector<2x3xf32>
    tpu.vector_store %arg31[%c0_191, %c0_192], %696 {strides = array<i32>} : memref<2x3xf32, #tpu.memory_space<vmem>>, vector<2x3xf32>,
    return
  }
}

</mosaic_0001>

<llo_original>
// kernel: mmian_forward.1
$region0: #{mmian_forward.1}
  #allocation0 [shape = 'u32[]', space=smem, size = 0x4, offset = 0x4, fixed_abs, tag = 'smem constant byte address 0x4 - core index']
  #allocation1 [shape = 'u32[72,128]{1,0:T(1,128)}', space=vmem, size = 0x9000, scoped, tag = 'internal scratch']
  #allocation2 [shape = 'f32[12,2,32]{2,1,0:T(2,128)}', space=vmem, size = 0x3000, scoped, tag = 'scratch operand']
  #allocation3 [shape = 'f32[4,2,32]{2,1,0:T(2,128)}', space=vmem, size = 0x1000, scoped, tag = 'scratch operand']
  %s0 = inlined_call_operand.smem [shape: u32[32], index: -1, kind: input, shape index: {}]
  %s1 = sld [smem:[%s0]]
  %s2 = scalar_lea.smem %s0, 1
  %s3 = sld [smem:[%s2]]
  %s4 = scalar_lea.smem %s0, 2
  %s5 = sld [smem:[%s4]]
  %s6 = scalar_lea.smem %s0, 3
  %s7 = sld [smem:[%s6]]
  %s8 = scalar_lea.smem %s0, 4
  %s9 = sld [smem:[%s8]]
  %s10 = scalar_lea.smem %s0, 5
  %s11 = sld [smem:[%s10]]
  %s12 = scalar_lea.smem %s0, 6
  %s13 = sld [smem:[%s12]]
  %s14 = scalar_lea.smem %s0, 7
  %s15 = sld [smem:[%s14]]
  %s16 = scalar_lea.smem %s0, 8
  %s17 = sld [smem:[%s16]]
  %s18 = scalar_lea.smem %s0, 9
  %s19 = sld [smem:[%s18]]
  %s20 = scalar_lea.smem %s0, 10
  %s21 = sld [smem:[%s20]]
  %s22 = scalar_lea.smem %s0, 11
  %s23 = sld [smem:[%s22]]
  %s24 = scalar_lea.smem %s0, 12
  %s25 = sld [smem:[%s24]]
  %s26 = scalar_lea.smem %s0, 13
  %s27 = sld [smem:[%s26]]
  %s28 = scalar_lea.smem %s0, 14
  %s29 = sld [smem:[%s28]]
  %s30 = scalar_lea.smem %s0, 15
  %s31 = sld [smem:[%s30]]
  %s32 = scalar_lea.smem %s0, 16
  %s33 = sld [smem:[%s32]]
  %s34 = scalar_lea.smem %s0, 17
  %s35 = sld [smem:[%s34]]
  %s36 = scalar_lea.smem %s0, 18
  %s37 = sld [smem:[%s36]]
  %s38 = scalar_lea.smem %s0, 19
  %s39 = sld [smem:[%s38]]
  %s40 = scalar_lea.smem %s0, 20
  %s41 = sld [smem:[%s40]]
  %s42 = scalar_lea.smem %s0, 21
  %s43 = sld [smem:[%s42]]
  %s44 = scalar_lea.smem %s0, 22
  %s45 = sld [smem:[%s44]]
  %s46 = scalar_lea.smem %s0, 23
  %s47 = sld [smem:[%s46]]
  %s48 = scalar_lea.smem %s0, 24
  %s49 = sld [smem:[%s48]]
  %s50 = scalar_lea.smem %s0, 25
  %s51 = sld [smem:[%s50]]
  %s52 = scalar_lea.smem %s0, 26
  %s53 = sld [smem:[%s52]]
  %s54 = scalar_lea.smem %s0, 27
  %s55 = sld [smem:[%s54]]
  %s56 = scalar_lea.smem %s0, 28
  %s57 = sld [smem:[%s56]]
  %s58 = scalar_lea.smem %s0, 29
  %s59 = sld [smem:[%s58]]
  %s60 = scalar_lea.smem %s0, 30
  %s61 = sld [smem:[%s60]]
  %s62 = scalar_lea.smem %s0, 31
  %s63 = sld [smem:[%s62]]
  %s64 = sld [smem:[#allocation0]]
  $region134: #{mmian_forward.1} parent=0
    _
  %s66 = ssub.s32 1, %s64
  %s67 = scalar_select 0, %s66, %s64
  $region1: #{mmian_forward.1} parent=0
    #allocation4 [shape = 'u8[1024]{0}', space=vmem, size = 0x400, scoped, tag = 'output window, operand 0, single buffered']
    #allocation5 [shape = 's32[1]{0}', space=sflag, size = 0x4, scoped, tag = 'scoped memory for mmian_forward.1']
    %68 = vsyncpa [#allocation5], 0
    // Predicated region
    $region2: #{mmian_forward.1} parent=1 // pred_check
      _
    $region3: #{mmian_forward.1} parent=1 // pred_check_branch
      %70 = sbr.rel (0) target = $region5
    $region4: #{mmian_forward.1} parent=1 // pred_region
      _
    $region5: #{mmian_forward.1} parent=1 // pred_fallthru
      _
    // Predicated region
    $region6: #{mmian_forward.1} parent=1 // pred_check
      _
    $region7: #{mmian_forward.1} parent=1 // pred_check_branch
      %72 = sbr.rel (0) target = $region9
    $region8: #{mmian_forward.1} parent=1 // pred_region
      _
    $region9: #{mmian_forward.1} parent=1 // pred_fallthru
      _
    // Predicated region
    $region10: #{mmian_forward.1} parent=1 // pred_check
      _
    $region11: #{mmian_forward.1} parent=1 // pred_check_branch
      %74 = sbr.rel (0) target = $region13
    $region12: #{mmian_forward.1} parent=1 // pred_region
      _
    $region13: #{mmian_forward.1} parent=1 // pred_fallthru
      _
    // Predicated region
    $region14: #{mmian_forward.1} parent=1 // pred_check
      _
    $region15: #{mmian_forward.1} parent=1 // pred_check_branch
      %76 = sbr.rel (0) target = $region17
    $region16: #{mmian_forward.1} parent=1 // pred_region
      _
    $region17: #{mmian_forward.1} parent=1 // pred_fallthru
      _
    // Predicated region
    $region18: #{mmian_forward.1} parent=1 // pred_check
      _
    $region19: #{mmian_forward.1} parent=1 // pred_check_branch
      %78 = sbr.rel (0) target = $region21
    $region20: #{mmian_forward.1} parent=1 // pred_region
      _
    $region21: #{mmian_forward.1} parent=1 // pred_fallthru
      _
    // Predicated region
    $region22: #{mmian_forward.1} parent=1 // pred_check
      _
    $region23: #{mmian_forward.1} parent=1 // pred_check_branch
      %80 = sbr.rel (0) target = $region25
    $region24: #{mmian_forward.1} parent=1 // pred_region
      _
    $region25: #{mmian_forward.1} parent=1 // pred_fallthru
      _
    // Predicated region
    $region26: #{mmian_forward.1} parent=1 // pred_check
      _
    $region27: #{mmian_forward.1} parent=1 // pred_check_branch
      %82 = sbr.rel (0) target = $region29
    $region28: #{mmian_forward.1} parent=1 // pred_region
      _
    $region29: #{mmian_forward.1} parent=1 // pred_fallthru
      _
    // Predicated region
    $region30: #{mmian_forward.1} parent=1 // pred_check
      _
    $region31: #{mmian_forward.1} parent=1 // pred_check_branch
      %84 = sbr.rel (0) target = $region33
    $region32: #{mmian_forward.1} parent=1 // pred_region
      _
    $region33: #{mmian_forward.1} parent=1 // pred_fallthru
      _
    // Predicated region
    $region34: #{mmian_forward.1} parent=1 // pred_check
      _
    $region35: #{mmian_forward.1} parent=1 // pred_check_branch
      %86 = sbr.rel (0) target = $region37
    $region36: #{mmian_forward.1} parent=1 // pred_region
      _
    $region37: #{mmian_forward.1} parent=1 // pred_fallthru
      _
    // Predicated region
    $region38: #{mmian_forward.1} parent=1 // pred_check
      _
    $region39: #{mmian_forward.1} parent=1 // pred_check_branch
      %88 = sbr.rel (0) target = $region41
    $region40: #{mmian_forward.1} parent=1 // pred_region
      _
    $region41: #{mmian_forward.1} parent=1 // pred_fallthru
      _
    // Predicated region
    $region42: #{mmian_forward.1} parent=1 // pred_check
      _
    $region43: #{mmian_forward.1} parent=1 // pred_check_branch
      %90 = sbr.rel (0) target = $region45
    $region44: #{mmian_forward.1} parent=1 // pred_region
      _
    $region45: #{mmian_forward.1} parent=1 // pred_fallthru
      _
    // Predicated region
    $region46: #{mmian_forward.1} parent=1 // pred_check
      _
    $region47: #{mmian_forward.1} parent=1 // pred_check_branch
      %92 = sbr.rel (0) target = $region49
    $region48: #{mmian_forward.1} parent=1 // pred_region
      _
    $region49: #{mmian_forward.1} parent=1 // pred_fallthru
      _
    // Predicated region
    $region50: #{mmian_forward.1} parent=1 // pred_check
      _
    $region51: #{mmian_forward.1} parent=1 // pred_check_branch
      %94 = sbr.rel (0) target = $region53
    $region52: #{mmian_forward.1} parent=1 // pred_region
      _
    $region53: #{mmian_forward.1} parent=1 // pred_fallthru
      _
    // Predicated region
    $region54: #{mmian_forward.1} parent=1 // pred_check
      _
    $region55: #{mmian_forward.1} parent=1 // pred_check_branch
      %96 = sbr.rel (0) target = $region57
    $region56: #{mmian_forward.1} parent=1 // pred_region
      _
    $region57: #{mmian_forward.1} parent=1 // pred_fallthru
      _
    // Predicated region
    $region58: #{mmian_forward.1} parent=1 // pred_check
      _
    $region59: #{mmian_forward.1} parent=1 // pred_check_branch
      %98 = sbr.rel (0) target = $region61
    $region60: #{mmian_forward.1} parent=1 // pred_region
      _
    $region61: #{mmian_forward.1} parent=1 // pred_fallthru
      _
    // Predicated region
    $region62: #{mmian_forward.1} parent=1 // pred_check
      _
    $region63: #{mmian_forward.1} parent=1 // pred_check_branch
      %100 = sbr.rel (0) target = $region65
    $region64: #{mmian_forward.1} parent=1 // pred_region
      _
    $region65: #{mmian_forward.1} parent=1 // pred_fallthru
      _
    // Predicated region
    $region66: #{mmian_forward.1} parent=1 // pred_check
      _
    $region67: #{mmian_forward.1} parent=1 // pred_check_branch
      %102 = sbr.rel (0) target = $region69
    $region68: #{mmian_forward.1} parent=1 // pred_region
      _
    $region69: #{mmian_forward.1} parent=1 // pred_fallthru
      _
    // Predicated region
    $region70: #{mmian_forward.1} parent=1 // pred_check
      _
    $region71: #{mmian_forward.1} parent=1 // pred_check_branch
      %104 = sbr.rel (0) target = $region73
    $region72: #{mmian_forward.1} parent=1 // pred_region
      _
    $region73: #{mmian_forward.1} parent=1 // pred_fallthru
      _
    // Predicated region
    $region74: #{mmian_forward.1} parent=1 // pred_check
      _
    $region75: #{mmian_forward.1} parent=1 // pred_check_branch
      %106 = sbr.rel (0) target = $region77
    $region76: #{mmian_forward.1} parent=1 // pred_region
      _
    $region77: #{mmian_forward.1} parent=1 // pred_fallthru
      _
    // Predicated region
    $region78: #{mmian_forward.1} parent=1 // pred_check
      _
    $region79: #{mmian_forward.1} parent=1 // pred_check_branch
      %108 = sbr.rel (0) target = $region81
    $region80: #{mmian_forward.1} parent=1 // pred_region
      _
    $region81: #{mmian_forward.1} parent=1 // pred_fallthru
      _
    // Predicated region
    $region82: #{mmian_forward.1} parent=1 // pred_check
      _
    $region83: #{mmian_forward.1} parent=1 // pred_check_branch
      %110 = sbr.rel (0) target = $region85
    $region84: #{mmian_forward.1} parent=1 // pred_region
      _
    $region85: #{mmian_forward.1} parent=1 // pred_fallthru
      _
    // Predicated region
    $region86: #{mmian_forward.1} parent=1 // pred_check
      _
    $region87: #{mmian_forward.1} parent=1 // pred_check_branch
      %112 = sbr.rel (0) target = $region89
    $region88: #{mmian_forward.1} parent=1 // pred_region
      _
    $region89: #{mmian_forward.1} parent=1 // pred_fallthru
      _
    // Predicated region
    $region90: #{mmian_forward.1} parent=1 // pred_check
      _
    $region91: #{mmian_forward.1} parent=1 // pred_check_branch
      %114 = sbr.rel (0) target = $region93
    $region92: #{mmian_forward.1} parent=1 // pred_region
      _
    $region93: #{mmian_forward.1} parent=1 // pred_fallthru
      _
    // Predicated region
    $region94: #{mmian_forward.1} parent=1 // pred_check
      _
    $region95: #{mmian_forward.1} parent=1 // pred_check_branch
      %116 = sbr.rel (0) target = $region97
    $region96: #{mmian_forward.1} parent=1 // pred_region
      _
    $region97: #{mmian_forward.1} parent=1 // pred_fallthru
      _
    // Predicated region
    $region98: #{mmian_forward.1} parent=1 // pred_check
      _
    $region99: #{mmian_forward.1} parent=1 // pred_check_branch
      %118 = sbr.rel (0) target = $region101
    $region100: #{mmian_forward.1} parent=1 // pred_region
      _
    $region101: #{mmian_forward.1} parent=1 // pred_fallthru
      _
    // Predicated region
    $region102: #{mmian_forward.1} parent=1 // pred_check
      _
    $region103: #{mmian_forward.1} parent=1 // pred_check_branch
      %120 = sbr.rel (0) target = $region105
    $region104: #{mmian_forward.1} parent=1 // pred_region
      _
    $region105: #{mmian_forward.1} parent=1 // pred_fallthru
      _
    // Predicated region
    $region106: #{mmian_forward.1} parent=1 // pred_check
      _
    $region107: #{mmian_forward.1} parent=1 // pred_check_branch
      %122 = sbr.rel (0) target = $region109
    $region108: #{mmian_forward.1} parent=1 // pred_region
      _
    $region109: #{mmian_forward.1} parent=1 // pred_fallthru
      _
    // Predicated region
    $region110: #{mmian_forward.1} parent=1 // pred_check
      _
    $region111: #{mmian_forward.1} parent=1 // pred_check_branch
      %124 = sbr.rel (0) target = $region113
    $region112: #{mmian_forward.1} parent=1 // pred_region
      _
    $region113: #{mmian_forward.1} parent=1 // pred_fallthru
      _
    // Predicated region
    $region114: #{mmian_forward.1} parent=1 // pred_check
      _
    $region115: #{mmian_forward.1} parent=1 // pred_check_branch
      %126 = sbr.rel (0) target = $region117
    $region116: #{mmian_forward.1} parent=1 // pred_region
      _
    $region117: #{mmian_forward.1} parent=1 // pred_fallthru
      _
    // Predicated region
    $region118: #{mmian_forward.1} parent=1 // pred_check
      _
    $region119: #{mmian_forward.1} parent=1 // pred_check_branch
      %128 = sbr.rel (0) target = $region121
    $region120: #{mmian_forward.1} parent=1 // pred_region
      _
    $region121: #{mmian_forward.1} parent=1 // pred_fallthru
      _
    // Predicated region
    $region122: #{mmian_forward.1} parent=1 // pred_check
      _
    $region123: #{mmian_forward.1} parent=1 // pred_check_branch
      %130 = sbr.rel (0) target = $region125
    $region124: #{mmian_forward.1} parent=1 // pred_region
      _
    $region125: #{mmian_forward.1} parent=1 // pred_fallthru
      _
    %v131 = vld [vmem:[%s1] sm:$0x3]
    %v132 = vld [vmem:[%s1 + $0x2] sm:$0x3]
    %v133 = vld [vmem:[%s1 + $0x4] sm:$0x3]
    %v134 = vld [vmem:[%s1 + $0x6] sm:$0x3]
    %v135 = vld [vmem:[%s1 + $0x8] sm:$0x3]
    %v136 = vld [vmem:[%s1 + $0xa] sm:$0x3]
    %v137 = vld [vmem:[%s1 + $0xc] sm:$0x3]
    %v138 = vld [vmem:[%s1 + $0xe] sm:$0x3]
    %v139 = vld [vmem:[%s1 + $0x10] sm:$0x3]
    %v140 = vld [vmem:[%s1 + $0x12] sm:$0x3]
    %v141 = vld [vmem:[%s1 + $0x14] sm:$0x3]
    %v142 = vld [vmem:[%s1 + $0x16] sm:$0x3]
    %v143 = vld [vmem:[%s13] sm:$0xff]
    %v144 = vld [vmem:[%s13 + $0x8] sm:$0xff]
    %v145 = vld [vmem:[%s13 + $0x10] sm:$0xff]
    %v146 = vld [vmem:[%s13 + $0x18] sm:$0xff]
    %v147 = vld [vmem:[%s17] sm:$0x1]
    %v149 = vperm.slane %v147, 0
    %163 = vst [vmem:[#allocation1] ss:$4 sm:$0xff] %v131
    %s164 = scalar_lea.vmem [#allocation1], 1
    %165 = vst [vmem:[%s164] ss:$4 sm:$0xff] %v132
    %s166 = scalar_lea.vmem [#allocation1], 2
    %167 = vst [vmem:[%s166] ss:$4 sm:$0xff] %v133
    %s168 = scalar_lea.vmem [#allocation1], 3
    %169 = vst [vmem:[%s168] ss:$4 sm:$0xff] %v134
    %s170 = scalar_lea.vmem [#allocation1], 32
    %171 = vst [vmem:[%s170] ss:$4 sm:$0xff] %v135
    %s172 = scalar_lea.vmem [#allocation1], 33
    %173 = vst [vmem:[%s172] ss:$4 sm:$0xff] %v136
    %s174 = scalar_lea.vmem [#allocation1], 34
    %175 = vst [vmem:[%s174] ss:$4 sm:$0xff] %v137
    %s176 = scalar_lea.vmem [#allocation1], 35
    %177 = vst [vmem:[%s176] ss:$4 sm:$0xff] %v138
    %v178 = vld.sshfl [vmem:[#allocation1] sm:$0xff pattern:$0x73625140]
    %v179 = vld.sshfl [vmem:[#allocation1 + $0x20] sm:$0xff pattern:$0x73625140]
    %180 = vst [vmem:[#allocation1] ss:$4 sm:$0xff] %v139
    %181 = vst [vmem:[%s164] ss:$4 sm:$0xff] %v140
    %182 = vst [vmem:[%s166] ss:$4 sm:$0xff] %v141
    %183 = vst [vmem:[%s168] ss:$4 sm:$0xff] %v142
    %v184 = vld.sshfl [vmem:[#allocation1] sm:$0xff pattern:$0x73625140]
    %vm185 = vcmask 261120
    %v186 = vsel %vm185, %v178, 0
    %v188 = vsel %vm185, %v179, 0
    %v190 = vsel %vm185, %v184, 0
    %192 = vmatpush.msra.mxu0 0.0
    %193 = vmatpush.msra.mxu0 0.0
    %194 = vmatpush.msra.mxu0 0.0
    %195 = vmatpush.msra.mxu0 0.0
    %196 = vmatpush.msra.mxu0 0.0
    %197 = vmatpush.msra.mxu0 0.0
    %198 = vmatpush.msra.mxu0 0.0
    %199 = vmatpush.msra.mxu0 0.0
    %200 = vmatpush.msra.mxu0 0.0
    %201 = vmatpush.msra.mxu0 0.0
    %202 = vmatpush.msra.mxu0 0.0
    %203 = vmatpush.msra.mxu0 0.0
    %204 = vmatpush.msra.mxu0 %v146
    %205 = vmatpush.msra.mxu0 %v145
    %206 = vmatpush.msra.mxu0 %v144
    %207 = vmatpush.msra.mxu0 %v143
    %208 = vmatmul.f32.gmra.mxu0 %v186
    %v209 = vpop.f32.mrf.mxu0
    %v210 = vadd.f32 %v149, %v209
    %211 = vmatmul.f32.gmra.mxu0 %v188
    %v212 = vpop.f32.mrf.mxu0
    %v213 = vadd.f32 %v149, %v212
    %214 = vmatmul.f32.gmra.mxu0 %v190
    %v215 = vpop.f32.mrf.mxu0
    %v216 = vadd.f32 %v149, %v215
    %217 = vdwg.mxu0
    %v221 = vrot.slane %v210, 2
    %v222 = vrot.slane %v210, 4
    %v223 = vrot.slane %v210, 6
    %v224 = vrot.slane %v213, 2
    %v225 = vrot.slane %v213, 4
    %v226 = vrot.slane %v213, 6
    %v227 = vrot.slane %v216, 2
    %v228 = vrot.slane %v216, 4
    %v229 = vrot.slane %v216, 6
    %v239 = vld [vmem:[%s3] sm:$0x3]
    %v240 = vld [vmem:[%s3 + $0x2] sm:$0x3]
    %v241 = vld [vmem:[%s3 + $0x4] sm:$0x3]
    %v242 = vld [vmem:[%s3 + $0x6] sm:$0x3]
    %v243 = vld [vmem:[%s19] sm:$0xff]
    %v244 = vld [vmem:[%s19 + $0x8] sm:$0xff]
    %v245 = vld [vmem:[%s19 + $0x10] sm:$0xff]
    %v246 = vld [vmem:[%s19 + $0x18] sm:$0xff]
    %v247 = vld [vmem:[%s23] sm:$0x1]
    %v249 = vperm.slane %v247, 0
    %255 = vst [vmem:[#allocation1] ss:$4 sm:$0xff] %v239
    %s256 = scalar_lea.vmem [#allocation1], 1
    %257 = vst [vmem:[%s256] ss:$4 sm:$0xff] %v240
    %s258 = scalar_lea.vmem [#allocation1], 2
    %259 = vst [vmem:[%s258] ss:$4 sm:$0xff] %v241
    %s260 = scalar_lea.vmem [#allocation1], 3
    %261 = vst [vmem:[%s260] ss:$4 sm:$0xff] %v242
    %v262 = vld.sshfl [vmem:[#allocation1] sm:$0xff pattern:$0x73625140]
    %v263 = vsel %vm185, %v262, 0
    %265 = vmatpush.msra.mxu0 0.0
    %266 = vmatpush.msra.mxu0 0.0
    %267 = vmatpush.msra.mxu0 0.0
    %268 = vmatpush.msra.mxu0 0.0
    %269 = vmatpush.msra.mxu0 0.0
    %270 = vmatpush.msra.mxu0 0.0
    %271 = vmatpush.msra.mxu0 0.0
    %272 = vmatpush.msra.mxu0 0.0
    %273 = vmatpush.msra.mxu0 0.0
    %274 = vmatpush.msra.mxu0 0.0
    %275 = vmatpush.msra.mxu0 0.0
    %276 = vmatpush.msra.mxu0 0.0
    %277 = vmatpush.msra.mxu0 %v246
    %278 = vmatpush.msra.mxu0 %v245
    %279 = vmatpush.msra.mxu0 %v244
    %280 = vmatpush.msra.mxu0 %v243
    %281 = vmatmul.f32.gmra.mxu0 %v263
    %v282 = vpop.f32.mrf.mxu0
    %v283 = vadd.f32 %v249, %v282
    %284 = vdwg.mxu0
    %v286 = vrot.slane %v283, 2
    %v287 = vrot.slane %v283, 4
    %v288 = vrot.slane %v283, 6
    %v292 = vld [vmem:[%s15] sm:$0xff]
    %v293 = vld [vmem:[%s15 + $0x8] sm:$0xff]
    %v294 = vld [vmem:[%s15 + $0x10] sm:$0xff]
    %v295 = vld [vmem:[%s15 + $0x18] sm:$0xff]
    %v296 = vld [vmem:[%s21] sm:$0xff]
    %v297 = vld [vmem:[%s21 + $0x8] sm:$0xff]
    %v298 = vld [vmem:[%s21 + $0x10] sm:$0xff]
    %v299 = vld [vmem:[%s21 + $0x18] sm:$0xff]
    %v300 = vld [vmem:[%s5] sm:$0x3]
    %v301 = vld [vmem:[%s7] sm:$0x3]
    %v302 = vlaneseq
    %v303 = vand.u32 %v302, 127
    %vm304 = vcmp.ge.s32.totalorder %v303, 64
    %vm305 = vcmp.lt.s32.totalorder %v303, 96
    %vm306 = vmand %vm304, %vm305
    %v308 = vsel %vm185, 0.0, 0
    %310 = vmatpush.msra.mxu0 0.0
    %311 = vmatpush.msra.mxu0 0.0
    %312 = vmatpush.msra.mxu0 0.0
    %313 = vmatpush.msra.mxu0 0.0
    %314 = vmatpush.msra.mxu0 0.0
    %315 = vmatpush.msra.mxu0 0.0
    %316 = vmatpush.msra.mxu0 0.0
    %317 = vmatpush.msra.mxu0 0.0
    %318 = vmatpush.msra.mxu0 0.0
    %319 = vmatpush.msra.mxu0 0.0
    %320 = vmatpush.msra.mxu0 0.0
    %321 = vmatpush.msra.mxu0 0.0
    %322 = vmatpush.msra.mxu0 %v295
    %323 = vmatpush.msra.mxu0 %v294
    %324 = vmatpush.msra.mxu0 %v293
    %325 = vmatpush.msra.mxu0 %v292
    %326 = vmatmul.f32.gmra.mxu0 %v308
    %v327 = vpop.f32.mrf.mxu0
    %v328 = vadd.f32 0.0, %v327
    %329 = vdwg.mxu0
    %v330 = vadd.f32 %v210, %v328
    %v331 = vtanh.pop %v330
    %v332 = vxor.u32 %v330, 2147483648
    %v333 = vmul.f32 %v332, 1.442695
    %v334 = vpow.pop %v333
    %v335 = vadd.f32 %v334, 1.0
    %v336 = vrcp.pop %v335
    %v337 = vmul.f32 %v335, %v336
    %v338 = vsub.f32 1.0, %v337
    %v339 = vmul.f32 %v336, %v338
    %v340 = vadd.f32 %v336, %v339
    %vm341 = vweird.f32 %v335
    %vm342 = vweird.f32 %v336
    %vm343 = vmor %vm341, %vm342
    %v344 = vsel %vm343, %v336, %v340
    %v345 = vand.u32 2147483647, %v335
    %vm346 = vcmp.eq.f32.partialorder %v345, 8.507059e+37
    %v347 = vand.u32 %v335, 2147483648
    %v348 = vor.u32 1.1754944e-38, %v347
    %v349 = vsel %vm346, %v348, %v344
    %v350 = vmul.f32 1.0, %v349
    %v351 = vsel %vm306, %v331, %v350
    %v352 = vmul.f32 %v351, 0.0
    %354 = vrot.lane.b32.xlu0 %v351, 64
    %v355 = vpop.permute.xlu0 %354
    %v357 = vmul.f32 %v351, %v355
    %359 = vrot.lane.b32.xlu0 %v357, 32
    %v360 = vpop.permute.xlu0 %359
    %v362 = vadd.f32 %v352, %v360
    %v363 = vtanh.pop %v362
    %365 = vrot.lane.b32.xlu0 %v363, 64
    %v366 = vpop.permute.xlu0 %365
    %v368 = vmul.f32 %v351, %v366
    %vm369 = vcmp.gt.s32.totalorder %v300, 0
    %v370 = vsel %vm369, 1, 0
    %371 = vset.pattern.permute.xlu0 0
    %372 = vperm.xlu0 %371, %v370
    %v373 = vpop.permute.xlu0 %372
    %vm374 = vcmp.eq.s32.totalorder %v373, 1
    %v375 = vsel %vm374, %v368, 0.0
    %v376 = vsel %vm374, %v362, 0.0
    %378 = vrot.lane.b32.xlu0 %v375, 32
    %v379 = vpop.permute.xlu0 %378
    %vm381 = vcmask 254976
    %382 = vst.msk [vmem:[#allocation2] sm:$0x3] %vm381, %v379
    %383 = vmatpush.msra.mxu0 0.0
    %384 = vmatpush.msra.mxu0 0.0
    %385 = vmatpush.msra.mxu0 0.0
    %386 = vmatpush.msra.mxu0 0.0
    %387 = vmatpush.msra.mxu0 0.0
    %388 = vmatpush.msra.mxu0 0.0
    %389 = vmatpush.msra.mxu0 0.0
    %390 = vmatpush.msra.mxu0 0.0
    %391 = vmatpush.msra.mxu0 0.0
    %392 = vmatpush.msra.mxu0 0.0
    %393 = vmatpush.msra.mxu0 0.0
    %394 = vmatpush.msra.mxu0 0.0
    %395 = vmatpush.msra.mxu0 %v299
    %396 = vmatpush.msra.mxu0 %v298
    %397 = vmatpush.msra.mxu0 %v297
    %398 = vmatpush.msra.mxu0 %v296
    %399 = vmatmul.f32.gmra.mxu0 %v308
    %v400 = vpop.f32.mrf.mxu0
    %v401 = vadd.f32 0.0, %v400
    %402 = vdwg.mxu0
    %v403 = vadd.f32 %v283, %v401
    %v404 = vtanh.pop %v403
    %v405 = vxor.u32 %v403, 2147483648
    %v406 = vmul.f32 %v405, 1.442695
    %v407 = vpow.pop %v406
    %v408 = vadd.f32 %v407, 1.0
    %v409 = vrcp.pop %v408
    %v410 = vmul.f32 %v408, %v409
    %v411 = vsub.f32 1.0, %v410
    %v412 = vmul.f32 %v409, %v411
    %v413 = vadd.f32 %v409, %v412
    %vm414 = vweird.f32 %v408
    %vm415 = vweird.f32 %v409
    %vm416 = vmor %vm414, %vm415
    %v417 = vsel %vm416, %v409, %v413
    %v418 = vand.u32 2147483647, %v408
    %vm419 = vcmp.eq.f32.partialorder %v418, 8.507059e+37
    %v420 = vand.u32 %v408, 2147483648
    %v421 = vor.u32 1.1754944e-38, %v420
    %v422 = vsel %vm419, %v421, %v417
    %v423 = vmul.f32 1.0, %v422
    %v424 = vsel %vm306, %v404, %v423
    %v425 = vmul.f32 %v424, 0.0
    %427 = vrot.lane.b32.xlu0 %v424, 64
    %v428 = vpop.permute.xlu0 %427
    %v430 = vmul.f32 %v424, %v428
    %432 = vrot.lane.b32.xlu0 %v430, 32
    %v433 = vpop.permute.xlu0 %432
    %v435 = vadd.f32 %v425, %v433
    %v436 = vtanh.pop %v435
    %438 = vrot.lane.b32.xlu0 %v436, 64
    %v439 = vpop.permute.xlu0 %438
    %v441 = vmul.f32 %v424, %v439
    %vm442 = vcmp.gt.s32.totalorder %v301, 0
    %v443 = vsel %vm442, 1, 0
    %444 = vset.pattern.permute.xlu0 0
    %445 = vperm.xlu0 %444, %v443
    %v446 = vpop.permute.xlu0 %445
    %vm447 = vcmp.eq.s32.totalorder %v446, 1
    %v448 = vsel %vm447, %v441, 0.0
    %v449 = vsel %vm447, %v435, 0.0
    %451 = vrot.lane.b32.xlu0 %v448, 32
    %v452 = vpop.permute.xlu0 %451
    %454 = vst.msk [vmem:[#allocation3] sm:$0x3] %vm381, %v452
    %v455 = vsel %vm185, %v379, 0
    %457 = vmatpush.msra.mxu0 0.0
    %458 = vmatpush.msra.mxu0 0.0
    %459 = vmatpush.msra.mxu0 0.0
    %460 = vmatpush.msra.mxu0 0.0
    %461 = vmatpush.msra.mxu0 0.0
    %462 = vmatpush.msra.mxu0 0.0
    %463 = vmatpush.msra.mxu0 0.0
    %464 = vmatpush.msra.mxu0 0.0
    %465 = vmatpush.msra.mxu0 0.0
    %466 = vmatpush.msra.mxu0 0.0
    %467 = vmatpush.msra.mxu0 0.0
    %468 = vmatpush.msra.mxu0 0.0
    %469 = vmatpush.msra.mxu0 %v295
    %470 = vmatpush.msra.mxu0 %v294
    %471 = vmatpush.msra.mxu0 %v293
    %472 = vmatpush.msra.mxu0 %v292
    %473 = vmatmul.f32.gmra.mxu0 %v455
    %v474 = vpop.f32.mrf.mxu0
    %v475 = vadd.f32 0.0, %v474
    %476 = vdwg.mxu0
    %v477 = vadd.f32 %v221, %v475
    %v478 = vtanh.pop %v477
    %v479 = vxor.u32 %v477, 2147483648
    %v480 = vmul.f32 %v479, 1.442695
    %v481 = vpow.pop %v480
    %v482 = vadd.f32 %v481, 1.0
    %v483 = vrcp.pop %v482
    %v484 = vmul.f32 %v482, %v483
    %v485 = vsub.f32 1.0, %v484
    %v486 = vmul.f32 %v483, %v485
    %v487 = vadd.f32 %v483, %v486
    %vm488 = vweird.f32 %v482
    %vm489 = vweird.f32 %v483
    %vm490 = vmor %vm488, %vm489
    %v491 = vsel %vm490, %v483, %v487
    %v492 = vand.u32 2147483647, %v482
    %vm493 = vcmp.eq.f32.partialorder %v492, 8.507059e+37
    %v494 = vand.u32 %v482, 2147483648
    %v495 = vor.u32 1.1754944e-38, %v494
    %v496 = vsel %vm493, %v495, %v491
    %v497 = vmul.f32 1.0, %v496
    %v498 = vsel %vm306, %v478, %v497
    %v499 = vmul.f32 %v498, %v376
    %501 = vrot.lane.b32.xlu0 %v498, 64
    %v502 = vpop.permute.xlu0 %501
    %v504 = vmul.f32 %v498, %v502
    %506 = vrot.lane.b32.xlu0 %v504, 32
    %v507 = vpop.permute.xlu0 %506
    %v509 = vadd.f32 %v499, %v507
    %v510 = vtanh.pop %v509
    %512 = vrot.lane.b32.xlu0 %v510, 64
    %v513 = vpop.permute.xlu0 %512
    %v515 = vmul.f32 %v498, %v513
    %vm516 = vcmp.gt.s32.totalorder %v300, 1
    %v517 = vsel %vm516, 1, 0
    %518 = vset.pattern.permute.xlu0 0
    %519 = vperm.xlu0 %518, %v517
    %v520 = vpop.permute.xlu0 %519
    %vm521 = vcmp.eq.s32.totalorder %v520, 1
    %v522 = vsel %vm521, %v515, %v375
    %v523 = vsel %vm521, %v509, %v376
    %v524 = vsel %vm521, %v515, 0.0
    %526 = vrot.lane.b32.xlu0 %v524, 32
    %v527 = vpop.permute.xlu0 %526
    %s529 = scalar_lea.vmem [#allocation2], 2
    %530 = vst.msk [vmem:[%s529] sm:$0x3] %vm381, %v527
    %v531 = vsel %vm185, %v452, 0
    %533 = vmatpush.msra.mxu0 0.0
    %534 = vmatpush.msra.mxu0 0.0
    %535 = vmatpush.msra.mxu0 0.0
    %536 = vmatpush.msra.mxu0 0.0
    %537 = vmatpush.msra.mxu0 0.0
    %538 = vmatpush.msra.mxu0 0.0
    %539 = vmatpush.msra.mxu0 0.0
    %540 = vmatpush.msra.mxu0 0.0
    %541 = vmatpush.msra.mxu0 0.0
    %542 = vmatpush.msra.mxu0 0.0
    %543 = vmatpush.msra.mxu0 0.0
    %544 = vmatpush.msra.mxu0 0.0
    %545 = vmatpush.msra.mxu0 %v299
    %546 = vmatpush.msra.mxu0 %v298
    %547 = vmatpush.msra.mxu0 %v297
    %548 = vmatpush.msra.mxu0 %v296
    %549 = vmatmul.f32.gmra.mxu0 %v531
    %v550 = vpop.f32.mrf.mxu0
    %v551 = vadd.f32 0.0, %v550
    %552 = vdwg.mxu0
    %v553 = vadd.f32 %v286, %v551
    %v554 = vtanh.pop %v553
    %v555 = vxor.u32 %v553, 2147483648
    %v556 = vmul.f32 %v555, 1.442695
    %v557 = vpow.pop %v556
    %v558 = vadd.f32 %v557, 1.0
    %v559 = vrcp.pop %v558
    %v560 = vmul.f32 %v558, %v559
    %v561 = vsub.f32 1.0, %v560
    %v562 = vmul.f32 %v559, %v561
    %v563 = vadd.f32 %v559, %v562
    %vm564 = vweird.f32 %v558
    %vm565 = vweird.f32 %v559
    %vm566 = vmor %vm564, %vm565
    %v567 = vsel %vm566, %v559, %v563
    %v568 = vand.u32 2147483647, %v558
    %vm569 = vcmp.eq.f32.partialorder %v568, 8.507059e+37
    %v570 = vand.u32 %v558, 2147483648
    %v571 = vor.u32 1.1754944e-38, %v570
    %v572 = vsel %vm569, %v571, %v567
    %v573 = vmul.f32 1.0, %v572
    %v574 = vsel %vm306, %v554, %v573
    %v575 = vmul.f32 %v574, %v449
    %577 = vrot.lane.b32.xlu0 %v574, 64
    %v578 = vpop.permute.xlu0 %577
    %v580 = vmul.f32 %v574, %v578
    %582 = vrot.lane.b32.xlu0 %v580, 32
    %v583 = vpop.permute.xlu0 %582
    %v585 = vadd.f32 %v575, %v583
    %v586 = vtanh.pop %v585
    %588 = vrot.lane.b32.xlu0 %v586, 64
    %v589 = vpop.permute.xlu0 %588
    %v591 = vmul.f32 %v574, %v589
    %vm592 = vcmp.gt.s32.totalorder %v301, 1
    %v593 = vsel %vm592, 1, 0
    %594 = vset.pattern.permute.xlu0 0
    %595 = vperm.xlu0 %594, %v593
    %v596 = vpop.permute.xlu0 %595
    %vm597 = vcmp.eq.s32.totalorder %v596, 1
    %v598 = vsel %vm597, %v591, %v448
    %v599 = vsel %vm597, %v585, %v449
    %v600 = vsel %vm597, %v591, 0.0
    %602 = vrot.lane.b32.xlu0 %v600, 32
    %v603 = vpop.permute.xlu0 %602
    %s605 = scalar_lea.vmem [#allocation3], 2
    %606 = vst.msk [vmem:[%s605] sm:$0x3] %vm381, %v603
    %608 = vrot.lane.b32.xlu0 %v522, 32
    %v609 = vpop.permute.xlu0 %608
    %v610 = vsel %vm185, %v609, 0
    %612 = vmatpush.msra.mxu0 0.0
    %613 = vmatpush.msra.mxu0 0.0
    %614 = vmatpush.msra.mxu0 0.0
    %615 = vmatpush.msra.mxu0 0.0
    %616 = vmatpush.msra.mxu0 0.0
    %617 = vmatpush.msra.mxu0 0.0
    %618 = vmatpush.msra.mxu0 0.0
    %619 = vmatpush.msra.mxu0 0.0
    %620 = vmatpush.msra.mxu0 0.0
    %621 = vmatpush.msra.mxu0 0.0
    %622 = vmatpush.msra.mxu0 0.0
    %623 = vmatpush.msra.mxu0 0.0
    %624 = vmatpush.msra.mxu0 %v295
    %625 = vmatpush.msra.mxu0 %v294
    %626 = vmatpush.msra.mxu0 %v293
    %627 = vmatpush.msra.mxu0 %v292
    %628 = vmatmul.f32.gmra.mxu0 %v610
    %v629 = vpop.f32.mrf.mxu0
    %v630 = vadd.f32 0.0, %v629
    %631 = vdwg.mxu0
    %v632 = vadd.f32 %v222, %v630
    %v633 = vtanh.pop %v632
    %v634 = vxor.u32 %v632, 2147483648
    %v635 = vmul.f32 %v634, 1.442695
    %v636 = vpow.pop %v635
    %v637 = vadd.f32 %v636, 1.0
    %v638 = vrcp.pop %v637
    %v639 = vmul.f32 %v637, %v638
    %v640 = vsub.f32 1.0, %v639
    %v641 = vmul.f32 %v638, %v640
    %v642 = vadd.f32 %v638, %v641
    %vm643 = vweird.f32 %v637
    %vm644 = vweird.f32 %v638
    %vm645 = vmor %vm643, %vm644
    %v646 = vsel %vm645, %v638, %v642
    %v647 = vand.u32 2147483647, %v637
    %vm648 = vcmp.eq.f32.partialorder %v647, 8.507059e+37
    %v649 = vand.u32 %v637, 2147483648
    %v650 = vor.u32 1.1754944e-38, %v649
    %v651 = vsel %vm648, %v650, %v646
    %v652 = vmul.f32 1.0, %v651
    %v653 = vsel %vm306, %v633, %v652
    %v654 = vmul.f32 %v653, %v523
    %656 = vrot.lane.b32.xlu0 %v653, 64
    %v657 = vpop.permute.xlu0 %656
    %v659 = vmul.f32 %v653, %v657
    %661 = vrot.lane.b32.xlu0 %v659, 32
    %v662 = vpop.permute.xlu0 %661
    %v664 = vadd.f32 %v654, %v662
    %v665 = vtanh.pop %v664
    %667 = vrot.lane.b32.xlu0 %v665, 64
    %v668 = vpop.permute.xlu0 %667
    %v670 = vmul.f32 %v653, %v668
    %vm671 = vcmp.gt.s32.totalorder %v300, 2
    %v672 = vsel %vm671, 1, 0
    %673 = vset.pattern.permute.xlu0 0
    %674 = vperm.xlu0 %673, %v672
    %v675 = vpop.permute.xlu0 %674
    %vm676 = vcmp.eq.s32.totalorder %v675, 1
    %v677 = vsel %vm676, %v670, %v522
    %v678 = vsel %vm676, %v664, %v523
    %v679 = vsel %vm676, %v670, 0.0
    %681 = vrot.lane.b32.xlu0 %v679, 32
    %v682 = vpop.permute.xlu0 %681
    %s684 = scalar_lea.vmem [#allocation2], 4
    %685 = vst.msk [vmem:[%s684] sm:$0x3] %vm381, %v682
    %687 = vrot.lane.b32.xlu0 %v598, 32
    %v688 = vpop.permute.xlu0 %687
    %v689 = vsel %vm185, %v688, 0
    %691 = vmatpush.msra.mxu0 0.0
    %692 = vmatpush.msra.mxu0 0.0
    %693 = vmatpush.msra.mxu0 0.0
    %694 = vmatpush.msra.mxu0 0.0
    %695 = vmatpush.msra.mxu0 0.0
    %696 = vmatpush.msra.mxu0 0.0
    %697 = vmatpush.msra.mxu0 0.0
    %698 = vmatpush.msra.mxu0 0.0
    %699 = vmatpush.msra.mxu0 0.0
    %700 = vmatpush.msra.mxu0 0.0
    %701 = vmatpush.msra.mxu0 0.0
    %702 = vmatpush.msra.mxu0 0.0
    %703 = vmatpush.msra.mxu0 %v299
    %704 = vmatpush.msra.mxu0 %v298
    %705 = vmatpush.msra.mxu0 %v297
    %706 = vmatpush.msra.mxu0 %v296
    %707 = vmatmul.f32.gmra.mxu0 %v689
    %v708 = vpop.f32.mrf.mxu0
    %v709 = vadd.f32 0.0, %v708
    %710 = vdwg.mxu0
    %v711 = vadd.f32 %v287, %v709
    %v712 = vtanh.pop %v711
    %v713 = vxor.u32 %v711, 2147483648
    %v714 = vmul.f32 %v713, 1.442695
    %v715 = vpow.pop %v714
    %v716 = vadd.f32 %v715, 1.0
    %v717 = vrcp.pop %v716
    %v718 = vmul.f32 %v716, %v717
    %v719 = vsub.f32 1.0, %v718
    %v720 = vmul.f32 %v717, %v719
    %v721 = vadd.f32 %v717, %v720
    %vm722 = vweird.f32 %v716
    %vm723 = vweird.f32 %v717
    %vm724 = vmor %vm722, %vm723
    %v725 = vsel %vm724, %v717, %v721
    %v726 = vand.u32 2147483647, %v716
    %vm727 = vcmp.eq.f32.partialorder %v726, 8.507059e+37
    %v728 = vand.u32 %v716, 2147483648
    %v729 = vor.u32 1.1754944e-38, %v728
    %v730 = vsel %vm727, %v729, %v725
    %v731 = vmul.f32 1.0, %v730
    %v732 = vsel %vm306, %v712, %v731
    %v733 = vmul.f32 %v732, %v599
    %735 = vrot.lane.b32.xlu0 %v732, 64
    %v736 = vpop.permute.xlu0 %735
    %v738 = vmul.f32 %v732, %v736
    %740 = vrot.lane.b32.xlu0 %v738, 32
    %v741 = vpop.permute.xlu0 %740
    %v743 = vadd.f32 %v733, %v741
    %v744 = vtanh.pop %v743
    %746 = vrot.lane.b32.xlu0 %v744, 64
    %v747 = vpop.permute.xlu0 %746
    %v749 = vmul.f32 %v732, %v747
    %vm750 = vcmp.gt.s32.totalorder %v301, 2
    %v751 = vsel %vm750, 1, 0
    %752 = vset.pattern.permute.xlu0 0
    %753 = vperm.xlu0 %752, %v751
    %v754 = vpop.permute.xlu0 %753
    %vm755 = vcmp.eq.s32.totalorder %v754, 1
    %v756 = vsel %vm755, %v749, %v598
    %v757 = vsel %vm755, %v743, %v599
    %v758 = vsel %vm755, %v749, 0.0
    %760 = vrot.lane.b32.xlu0 %v758, 32
    %v761 = vpop.permute.xlu0 %760
    %s763 = scalar_lea.vmem [#allocation3], 4
    %764 = vst.msk [vmem:[%s763] sm:$0x3] %vm381, %v761
    %766 = vrot.lane.b32.xlu0 %v677, 32
    %v767 = vpop.permute.xlu0 %766
    %v768 = vsel %vm185, %v767, 0
    %770 = vmatpush.msra.mxu0 0.0
    %771 = vmatpush.msra.mxu0 0.0
    %772 = vmatpush.msra.mxu0 0.0
    %773 = vmatpush.msra.mxu0 0.0
    %774 = vmatpush.msra.mxu0 0.0
    %775 = vmatpush.msra.mxu0 0.0
    %776 = vmatpush.msra.mxu0 0.0
    %777 = vmatpush.msra.mxu0 0.0
    %778 = vmatpush.msra.mxu0 0.0
    %779 = vmatpush.msra.mxu0 0.0
    %780 = vmatpush.msra.mxu0 0.0
    %781 = vmatpush.msra.mxu0 0.0
    %782 = vmatpush.msra.mxu0 %v295
    %783 = vmatpush.msra.mxu0 %v294
    %784 = vmatpush.msra.mxu0 %v293
    %785 = vmatpush.msra.mxu0 %v292
    %786 = vmatmul.f32.gmra.mxu0 %v768
    %v787 = vpop.f32.mrf.mxu0
    %v788 = vadd.f32 0.0, %v787
    %789 = vdwg.mxu0
    %v790 = vadd.f32 %v223, %v788
    %v791 = vtanh.pop %v790
    %v792 = vxor.u32 %v790, 2147483648
    %v793 = vmul.f32 %v792, 1.442695
    %v794 = vpow.pop %v793
    %v795 = vadd.f32 %v794, 1.0
    %v796 = vrcp.pop %v795
    %v797 = vmul.f32 %v795, %v796
    %v798 = vsub.f32 1.0, %v797
    %v799 = vmul.f32 %v796, %v798
    %v800 = vadd.f32 %v796, %v799
    %vm801 = vweird.f32 %v795
    %vm802 = vweird.f32 %v796
    %vm803 = vmor %vm801, %vm802
    %v804 = vsel %vm803, %v796, %v800
    %v805 = vand.u32 2147483647, %v795
    %vm806 = vcmp.eq.f32.partialorder %v805, 8.507059e+37
    %v807 = vand.u32 %v795, 2147483648
    %v808 = vor.u32 1.1754944e-38, %v807
    %v809 = vsel %vm806, %v808, %v804
    %v810 = vmul.f32 1.0, %v809
    %v811 = vsel %vm306, %v791, %v810
    %v812 = vmul.f32 %v811, %v678
    %814 = vrot.lane.b32.xlu0 %v811, 64
    %v815 = vpop.permute.xlu0 %814
    %v817 = vmul.f32 %v811, %v815
    %819 = vrot.lane.b32.xlu0 %v817, 32
    %v820 = vpop.permute.xlu0 %819
    %v822 = vadd.f32 %v812, %v820
    %v823 = vtanh.pop %v822
    %825 = vrot.lane.b32.xlu0 %v823, 64
    %v826 = vpop.permute.xlu0 %825
    %v828 = vmul.f32 %v811, %v826
    %vm829 = vcmp.gt.s32.totalorder %v300, 3
    %v830 = vsel %vm829, 1, 0
    %831 = vset.pattern.permute.xlu0 0
    %832 = vperm.xlu0 %831, %v830
    %v833 = vpop.permute.xlu0 %832
    %vm834 = vcmp.eq.s32.totalorder %v833, 1
    %v835 = vsel %vm834, %v828, %v677
    %v836 = vsel %vm834, %v822, %v678
    %v837 = vsel %vm834, %v828, 0.0
    %839 = vrot.lane.b32.xlu0 %v837, 32
    %v840 = vpop.permute.xlu0 %839
    %s842 = scalar_lea.vmem [#allocation2], 6
    %843 = vst.msk [vmem:[%s842] sm:$0x3] %vm381, %v840
    %845 = vrot.lane.b32.xlu0 %v756, 32
    %v846 = vpop.permute.xlu0 %845
    %v847 = vsel %vm185, %v846, 0
    %849 = vmatpush.msra.mxu0 0.0
    %850 = vmatpush.msra.mxu0 0.0
    %851 = vmatpush.msra.mxu0 0.0
    %852 = vmatpush.msra.mxu0 0.0
    %853 = vmatpush.msra.mxu0 0.0
    %854 = vmatpush.msra.mxu0 0.0
    %855 = vmatpush.msra.mxu0 0.0
    %856 = vmatpush.msra.mxu0 0.0
    %857 = vmatpush.msra.mxu0 0.0
    %858 = vmatpush.msra.mxu0 0.0
    %859 = vmatpush.msra.mxu0 0.0
    %860 = vmatpush.msra.mxu0 0.0
    %861 = vmatpush.msra.mxu0 %v299
    %862 = vmatpush.msra.mxu0 %v298
    %863 = vmatpush.msra.mxu0 %v297
    %864 = vmatpush.msra.mxu0 %v296
    %865 = vmatmul.f32.gmra.mxu0 %v847
    %v866 = vpop.f32.mrf.mxu0
    %v867 = vadd.f32 0.0, %v866
    %868 = vdwg.mxu0
    %v869 = vadd.f32 %v288, %v867
    %v870 = vtanh.pop %v869
    %v871 = vxor.u32 %v869, 2147483648
    %v872 = vmul.f32 %v871, 1.442695
    %v873 = vpow.pop %v872
    %v874 = vadd.f32 %v873, 1.0
    %v875 = vrcp.pop %v874
    %v876 = vmul.f32 %v874, %v875
    %v877 = vsub.f32 1.0, %v876
    %v878 = vmul.f32 %v875, %v877
    %v879 = vadd.f32 %v875, %v878
    %vm880 = vweird.f32 %v874
    %vm881 = vweird.f32 %v875
    %vm882 = vmor %vm880, %vm881
    %v883 = vsel %vm882, %v875, %v879
    %v884 = vand.u32 2147483647, %v874
    %vm885 = vcmp.eq.f32.partialorder %v884, 8.507059e+37
    %v886 = vand.u32 %v874, 2147483648
    %v887 = vor.u32 1.1754944e-38, %v886
    %v888 = vsel %vm885, %v887, %v883
    %v889 = vmul.f32 1.0, %v888
    %v890 = vsel %vm306, %v870, %v889
    %v891 = vmul.f32 %v890, %v757
    %893 = vrot.lane.b32.xlu0 %v890, 64
    %v894 = vpop.permute.xlu0 %893
    %v896 = vmul.f32 %v890, %v894
    %898 = vrot.lane.b32.xlu0 %v896, 32
    %v899 = vpop.permute.xlu0 %898
    %v901 = vadd.f32 %v891, %v899
    %v902 = vtanh.pop %v901
    %904 = vrot.lane.b32.xlu0 %v902, 64
    %v905 = vpop.permute.xlu0 %904
    %v907 = vmul.f32 %v890, %v905
    %vm908 = vcmp.gt.s32.totalorder %v301, 3
    %v909 = vsel %vm908, 1, 0
    %910 = vset.pattern.permute.xlu0 0
    %911 = vperm.xlu0 %910, %v909
    %v912 = vpop.permute.xlu0 %911
    %vm913 = vcmp.eq.s32.totalorder %v912, 1
    %v914 = vsel %vm913, %v907, 0.0
    %916 = vrot.lane.b32.xlu0 %v914, 32
    %v917 = vpop.permute.xlu0 %916
    %s919 = scalar_lea.vmem [#allocation3], 6
    %920 = vst.msk [vmem:[%s919] sm:$0x3] %vm381, %v917
    %922 = vrot.lane.b32.xlu0 %v835, 32
    %v923 = vpop.permute.xlu0 %922
    %v924 = vsel %vm185, %v923, 0
    %926 = vmatpush.msra.mxu0 0.0
    %927 = vmatpush.msra.mxu0 0.0
    %928 = vmatpush.msra.mxu0 0.0
    %929 = vmatpush.msra.mxu0 0.0
    %930 = vmatpush.msra.mxu0 0.0
    %931 = vmatpush.msra.mxu0 0.0
    %932 = vmatpush.msra.mxu0 0.0
    %933 = vmatpush.msra.mxu0 0.0
    %934 = vmatpush.msra.mxu0 0.0
    %935 = vmatpush.msra.mxu0 0.0
    %936 = vmatpush.msra.mxu0 0.0
    %937 = vmatpush.msra.mxu0 0.0
    %938 = vmatpush.msra.mxu0 %v295
    %939 = vmatpush.msra.mxu0 %v294
    %940 = vmatpush.msra.mxu0 %v293
    %941 = vmatpush.msra.mxu0 %v292
    %942 = vmatmul.f32.gmra.mxu0 %v924
    %v943 = vpop.f32.mrf.mxu0
    %v944 = vadd.f32 0.0, %v943
    %945 = vdwg.mxu0
    %v946 = vadd.f32 %v213, %v944
    %v947 = vtanh.pop %v946
    %v948 = vxor.u32 %v946, 2147483648
    %v949 = vmul.f32 %v948, 1.442695
    %v950 = vpow.pop %v949
    %v951 = vadd.f32 %v950, 1.0
    %v952 = vrcp.pop %v951
    %v953 = vmul.f32 %v951, %v952
    %v954 = vsub.f32 1.0, %v953
    %v955 = vmul.f32 %v952, %v954
    %v956 = vadd.f32 %v952, %v955
    %vm957 = vweird.f32 %v951
    %vm958 = vweird.f32 %v952
    %vm959 = vmor %vm957, %vm958
    %v960 = vsel %vm959, %v952, %v956
    %v961 = vand.u32 2147483647, %v951
    %vm962 = vcmp.eq.f32.partialorder %v961, 8.507059e+37
    %v963 = vand.u32 %v951, 2147483648
    %v964 = vor.u32 1.1754944e-38, %v963
    %v965 = vsel %vm962, %v964, %v960
    %v966 = vmul.f32 1.0, %v965
    %v967 = vsel %vm306, %v947, %v966
    %v968 = vmul.f32 %v967, %v836
    %970 = vrot.lane.b32.xlu0 %v967, 64
    %v971 = vpop.permute.xlu0 %970
    %v973 = vmul.f32 %v967, %v971
    %975 = vrot.lane.b32.xlu0 %v973, 32
    %v976 = vpop.permute.xlu0 %975
    %v978 = vadd.f32 %v968, %v976
    %v979 = vtanh.pop %v978
    %981 = vrot.lane.b32.xlu0 %v979, 64
    %v982 = vpop.permute.xlu0 %981
    %v984 = vmul.f32 %v967, %v982
    %vm985 = vcmp.gt.s32.totalorder %v300, 4
    %v986 = vsel %vm985, 1, 0
    %987 = vset.pattern.permute.xlu0 0
    %988 = vperm.xlu0 %987, %v986
    %v989 = vpop.permute.xlu0 %988
    %vm990 = vcmp.eq.s32.totalorder %v989, 1
    %v991 = vsel %vm990, %v984, %v835
    %v992 = vsel %vm990, %v978, %v836
    %v993 = vsel %vm990, %v984, 0.0
    %995 = vrot.lane.b32.xlu0 %v993, 32
    %v996 = vpop.permute.xlu0 %995
    %s998 = scalar_lea.vmem [#allocation2], 8
    %999 = vst.msk [vmem:[%s998] sm:$0x3] %vm381, %v996
    %1001 = vrot.lane.b32.xlu0 %v991, 32
    %v1002 = vpop.permute.xlu0 %1001
    %v1003 = vsel %vm185, %v1002, 0
    %1005 = vmatpush.msra.mxu0 0.0
    %1006 = vmatpush.msra.mxu0 0.0
    %1007 = vmatpush.msra.mxu0 0.0
    %1008 = vmatpush.msra.mxu0 0.0
    %1009 = vmatpush.msra.mxu0 0.0
    %1010 = vmatpush.msra.mxu0 0.0
    %1011 = vmatpush.msra.mxu0 0.0
    %1012 = vmatpush.msra.mxu0 0.0
    %1013 = vmatpush.msra.mxu0 0.0
    %1014 = vmatpush.msra.mxu0 0.0
    %1015 = vmatpush.msra.mxu0 0.0
    %1016 = vmatpush.msra.mxu0 0.0
    %1017 = vmatpush.msra.mxu0 %v295
    %1018 = vmatpush.msra.mxu0 %v294
    %1019 = vmatpush.msra.mxu0 %v293
    %1020 = vmatpush.msra.mxu0 %v292
    %1021 = vmatmul.f32.gmra.mxu0 %v1003
    %v1022 = vpop.f32.mrf.mxu0
    %v1023 = vadd.f32 0.0, %v1022
    %1024 = vdwg.mxu0
    %v1025 = vadd.f32 %v224, %v1023
    %v1026 = vtanh.pop %v1025
    %v1027 = vxor.u32 %v1025, 2147483648
    %v1028 = vmul.f32 %v1027, 1.442695
    %v1029 = vpow.pop %v1028
    %v1030 = vadd.f32 %v1029, 1.0
    %v1031 = vrcp.pop %v1030
    %v1032 = vmul.f32 %v1030, %v1031
    %v1033 = vsub.f32 1.0, %v1032
    %v1034 = vmul.f32 %v1031, %v1033
    %v1035 = vadd.f32 %v1031, %v1034
    %vm1036 = vweird.f32 %v1030
    %vm1037 = vweird.f32 %v1031
    %vm1038 = vmor %vm1036, %vm1037
    %v1039 = vsel %vm1038, %v1031, %v1035
    %v1040 = vand.u32 2147483647, %v1030
    %vm1041 = vcmp.eq.f32.partialorder %v1040, 8.507059e+37
    %v1042 = vand.u32 %v1030, 2147483648
    %v1043 = vor.u32 1.1754944e-38, %v1042
    %v1044 = vsel %vm1041, %v1043, %v1039
    %v1045 = vmul.f32 1.0, %v1044
    %v1046 = vsel %vm306, %v1026, %v1045
    %v1047 = vmul.f32 %v1046, %v992
    %1049 = vrot.lane.b32.xlu0 %v1046, 64
    %v1050 = vpop.permute.xlu0 %1049
    %v1052 = vmul.f32 %v1046, %v1050
    %1054 = vrot.lane.b32.xlu0 %v1052, 32
    %v1055 = vpop.permute.xlu0 %1054
    %v1057 = vadd.f32 %v1047, %v1055
    %v1058 = vtanh.pop %v1057
    %1060 = vrot.lane.b32.xlu0 %v1058, 64
    %v1061 = vpop.permute.xlu0 %1060
    %v1063 = vmul.f32 %v1046, %v1061
    %vm1064 = vcmp.gt.s32.totalorder %v300, 5
    %v1065 = vsel %vm1064, 1, 0
    %1066 = vset.pattern.permute.xlu0 0
    %1067 = vperm.xlu0 %1066, %v1065
    %v1068 = vpop.permute.xlu0 %1067
    %vm1069 = vcmp.eq.s32.totalorder %v1068, 1
    %v1070 = vsel %vm1069, %v1063, %v991
    %v1071 = vsel %vm1069, %v1057, %v992
    %v1072 = vsel %vm1069, %v1063, 0.0
    %1074 = vrot.lane.b32.xlu0 %v1072, 32
    %v1075 = vpop.permute.xlu0 %1074
    %s1077 = scalar_lea.vmem [#allocation2], 10
    %1078 = vst.msk [vmem:[%s1077] sm:$0x3] %vm381, %v1075
    %1080 = vrot.lane.b32.xlu0 %v1070, 32
    %v1081 = vpop.permute.xlu0 %1080
    %v1082 = vsel %vm185, %v1081, 0
    %1084 = vmatpush.msra.mxu0 0.0
    %1085 = vmatpush.msra.mxu0 0.0
    %1086 = vmatpush.msra.mxu0 0.0
    %1087 = vmatpush.msra.mxu0 0.0
    %1088 = vmatpush.msra.mxu0 0.0
    %1089 = vmatpush.msra.mxu0 0.0
    %1090 = vmatpush.msra.mxu0 0.0
    %1091 = vmatpush.msra.mxu0 0.0
    %1092 = vmatpush.msra.mxu0 0.0
    %1093 = vmatpush.msra.mxu0 0.0
    %1094 = vmatpush.msra.mxu0 0.0
    %1095 = vmatpush.msra.mxu0 0.0
    %1096 = vmatpush.msra.mxu0 %v295
    %1097 = vmatpush.msra.mxu0 %v294
    %1098 = vmatpush.msra.mxu0 %v293
    %1099 = vmatpush.msra.mxu0 %v292
    %1100 = vmatmul.f32.gmra.mxu0 %v1082
    %v1101 = vpop.f32.mrf.mxu0
    %v1102 = vadd.f32 0.0, %v1101
    %1103 = vdwg.mxu0
    %v1104 = vadd.f32 %v225, %v1102
    %v1105 = vtanh.pop %v1104
    %v1106 = vxor.u32 %v1104, 2147483648
    %v1107 = vmul.f32 %v1106, 1.442695
    %v1108 = vpow.pop %v1107
    %v1109 = vadd.f32 %v1108, 1.0
    %v1110 = vrcp.pop %v1109
    %v1111 = vmul.f32 %v1109, %v1110
    %v1112 = vsub.f32 1.0, %v1111
    %v1113 = vmul.f32 %v1110, %v1112
    %v1114 = vadd.f32 %v1110, %v1113
    %vm1115 = vweird.f32 %v1109
    %vm1116 = vweird.f32 %v1110
    %vm1117 = vmor %vm1115, %vm1116
    %v1118 = vsel %vm1117, %v1110, %v1114
    %v1119 = vand.u32 2147483647, %v1109
    %vm1120 = vcmp.eq.f32.partialorder %v1119, 8.507059e+37
    %v1121 = vand.u32 %v1109, 2147483648
    %v1122 = vor.u32 1.1754944e-38, %v1121
    %v1123 = vsel %vm1120, %v1122, %v1118
    %v1124 = vmul.f32 1.0, %v1123
    %v1125 = vsel %vm306, %v1105, %v1124
    %v1126 = vmul.f32 %v1125, %v1071
    %1128 = vrot.lane.b32.xlu0 %v1125, 64
    %v1129 = vpop.permute.xlu0 %1128
    %v1131 = vmul.f32 %v1125, %v1129
    %1133 = vrot.lane.b32.xlu0 %v1131, 32
    %v1134 = vpop.permute.xlu0 %1133
    %v1136 = vadd.f32 %v1126, %v1134
    %v1137 = vtanh.pop %v1136
    %1139 = vrot.lane.b32.xlu0 %v1137, 64
    %v1140 = vpop.permute.xlu0 %1139
    %v1142 = vmul.f32 %v1125, %v1140
    %vm1143 = vcmp.gt.s32.totalorder %v300, 6
    %v1144 = vsel %vm1143, 1, 0
    %1145 = vset.pattern.permute.xlu0 0
    %1146 = vperm.xlu0 %1145, %v1144
    %v1147 = vpop.permute.xlu0 %1146
    %vm1148 = vcmp.eq.s32.totalorder %v1147, 1
    %v1149 = vsel %vm1148, %v1142, %v1070
    %v1150 = vsel %vm1148, %v1136, %v1071
    %v1151 = vsel %vm1148, %v1142, 0.0
    %1153 = vrot.lane.b32.xlu0 %v1151, 32
    %v1154 = vpop.permute.xlu0 %1153
    %s1156 = scalar_lea.vmem [#allocation2], 12
    %1157 = vst.msk [vmem:[%s1156] sm:$0x3] %vm381, %v1154
    %1159 = vrot.lane.b32.xlu0 %v1149, 32
    %v1160 = vpop.permute.xlu0 %1159
    %v1161 = vsel %vm185, %v1160, 0
    %1163 = vmatpush.msra.mxu0 0.0
    %1164 = vmatpush.msra.mxu0 0.0
    %1165 = vmatpush.msra.mxu0 0.0
    %1166 = vmatpush.msra.mxu0 0.0
    %1167 = vmatpush.msra.mxu0 0.0
    %1168 = vmatpush.msra.mxu0 0.0
    %1169 = vmatpush.msra.mxu0 0.0
    %1170 = vmatpush.msra.mxu0 0.0
    %1171 = vmatpush.msra.mxu0 0.0
    %1172 = vmatpush.msra.mxu0 0.0
    %1173 = vmatpush.msra.mxu0 0.0
    %1174 = vmatpush.msra.mxu0 0.0
    %1175 = vmatpush.msra.mxu0 %v295
    %1176 = vmatpush.msra.mxu0 %v294
    %1177 = vmatpush.msra.mxu0 %v293
    %1178 = vmatpush.msra.mxu0 %v292
    %1179 = vmatmul.f32.gmra.mxu0 %v1161
    %v1180 = vpop.f32.mrf.mxu0
    %v1181 = vadd.f32 0.0, %v1180
    %1182 = vdwg.mxu0
    %v1183 = vadd.f32 %v226, %v1181
    %v1184 = vtanh.pop %v1183
    %v1185 = vxor.u32 %v1183, 2147483648
    %v1186 = vmul.f32 %v1185, 1.442695
    %v1187 = vpow.pop %v1186
    %v1188 = vadd.f32 %v1187, 1.0
    %v1189 = vrcp.pop %v1188
    %v1190 = vmul.f32 %v1188, %v1189
    %v1191 = vsub.f32 1.0, %v1190
    %v1192 = vmul.f32 %v1189, %v1191
    %v1193 = vadd.f32 %v1189, %v1192
    %vm1194 = vweird.f32 %v1188
    %vm1195 = vweird.f32 %v1189
    %vm1196 = vmor %vm1194, %vm1195
    %v1197 = vsel %vm1196, %v1189, %v1193
    %v1198 = vand.u32 2147483647, %v1188
    %vm1199 = vcmp.eq.f32.partialorder %v1198, 8.507059e+37
    %v1200 = vand.u32 %v1188, 2147483648
    %v1201 = vor.u32 1.1754944e-38, %v1200
    %v1202 = vsel %vm1199, %v1201, %v1197
    %v1203 = vmul.f32 1.0, %v1202
    %v1204 = vsel %vm306, %v1184, %v1203
    %v1205 = vmul.f32 %v1204, %v1150
    %1207 = vrot.lane.b32.xlu0 %v1204, 64
    %v1208 = vpop.permute.xlu0 %1207
    %v1210 = vmul.f32 %v1204, %v1208
    %1212 = vrot.lane.b32.xlu0 %v1210, 32
    %v1213 = vpop.permute.xlu0 %1212
    %v1215 = vadd.f32 %v1205, %v1213
    %v1216 = vtanh.pop %v1215
    %1218 = vrot.lane.b32.xlu0 %v1216, 64
    %v1219 = vpop.permute.xlu0 %1218
    %v1221 = vmul.f32 %v1204, %v1219
    %vm1222 = vcmp.gt.s32.totalorder %v300, 7
    %v1223 = vsel %vm1222, 1, 0
    %1224 = vset.pattern.permute.xlu0 0
    %1225 = vperm.xlu0 %1224, %v1223
    %v1226 = vpop.permute.xlu0 %1225
    %vm1227 = vcmp.eq.s32.totalorder %v1226, 1
    %v1228 = vsel %vm1227, %v1221, %v1149
    %v1229 = vsel %vm1227, %v1215, %v1150
    %v1230 = vsel %vm1227, %v1221, 0.0
    %1232 = vrot.lane.b32.xlu0 %v1230, 32
    %v1233 = vpop.permute.xlu0 %1232
    %s1235 = scalar_lea.vmem [#allocation2], 14
    %1236 = vst.msk [vmem:[%s1235] sm:$0x3] %vm381, %v1233
    %1238 = vrot.lane.b32.xlu0 %v1228, 32
    %v1239 = vpop.permute.xlu0 %1238
    %v1240 = vsel %vm185, %v1239, 0
    %1242 = vmatpush.msra.mxu0 0.0
    %1243 = vmatpush.msra.mxu0 0.0
    %1244 = vmatpush.msra.mxu0 0.0
    %1245 = vmatpush.msra.mxu0 0.0
    %1246 = vmatpush.msra.mxu0 0.0
    %1247 = vmatpush.msra.mxu0 0.0
    %1248 = vmatpush.msra.mxu0 0.0
    %1249 = vmatpush.msra.mxu0 0.0
    %1250 = vmatpush.msra.mxu0 0.0
    %1251 = vmatpush.msra.mxu0 0.0
    %1252 = vmatpush.msra.mxu0 0.0
    %1253 = vmatpush.msra.mxu0 0.0
    %1254 = vmatpush.msra.mxu0 %v295
    %1255 = vmatpush.msra.mxu0 %v294
    %1256 = vmatpush.msra.mxu0 %v293
    %1257 = vmatpush.msra.mxu0 %v292
    %1258 = vmatmul.f32.gmra.mxu0 %v1240
    %v1259 = vpop.f32.mrf.mxu0
    %v1260 = vadd.f32 0.0, %v1259
    %1261 = vdwg.mxu0
    %v1262 = vadd.f32 %v216, %v1260
    %v1263 = vtanh.pop %v1262
    %v1264 = vxor.u32 %v1262, 2147483648
    %v1265 = vmul.f32 %v1264, 1.442695
    %v1266 = vpow.pop %v1265
    %v1267 = vadd.f32 %v1266, 1.0
    %v1268 = vrcp.pop %v1267
    %v1269 = vmul.f32 %v1267, %v1268
    %v1270 = vsub.f32 1.0, %v1269
    %v1271 = vmul.f32 %v1268, %v1270
    %v1272 = vadd.f32 %v1268, %v1271
    %vm1273 = vweird.f32 %v1267
    %vm1274 = vweird.f32 %v1268
    %vm1275 = vmor %vm1273, %vm1274
    %v1276 = vsel %vm1275, %v1268, %v1272
    %v1277 = vand.u32 2147483647, %v1267
    %vm1278 = vcmp.eq.f32.partialorder %v1277, 8.507059e+37
    %v1279 = vand.u32 %v1267, 2147483648
    %v1280 = vor.u32 1.1754944e-38, %v1279
    %v1281 = vsel %vm1278, %v1280, %v1276
    %v1282 = vmul.f32 1.0, %v1281
    %v1283 = vsel %vm306, %v1263, %v1282
    %v1284 = vmul.f32 %v1283, %v1229
    %1286 = vrot.lane.b32.xlu0 %v1283, 64
    %v1287 = vpop.permute.xlu0 %1286
    %v1289 = vmul.f32 %v1283, %v1287
    %1291 = vrot.lane.b32.xlu0 %v1289, 32
    %v1292 = vpop.permute.xlu0 %1291
    %v1294 = vadd.f32 %v1284, %v1292
    %v1295 = vtanh.pop %v1294
    %1297 = vrot.lane.b32.xlu0 %v1295, 64
    %v1298 = vpop.permute.xlu0 %1297
    %v1300 = vmul.f32 %v1283, %v1298
    %vm1301 = vcmp.gt.s32.totalorder %v300, 8
    %v1302 = vsel %vm1301, 1, 0
    %1303 = vset.pattern.permute.xlu0 0
    %1304 = vperm.xlu0 %1303, %v1302
    %v1305 = vpop.permute.xlu0 %1304
    %vm1306 = vcmp.eq.s32.totalorder %v1305, 1
    %v1307 = vsel %vm1306, %v1300, %v1228
    %v1308 = vsel %vm1306, %v1294, %v1229
    %v1309 = vsel %vm1306, %v1300, 0.0
    %1311 = vrot.lane.b32.xlu0 %v1309, 32
    %v1312 = vpop.permute.xlu0 %1311
    %s1314 = scalar_lea.vmem [#allocation2], 16
    %1315 = vst.msk [vmem:[%s1314] sm:$0x3] %vm381, %v1312
    %1317 = vrot.lane.b32.xlu0 %v1307, 32
    %v1318 = vpop.permute.xlu0 %1317
    %v1319 = vsel %vm185, %v1318, 0
    %1321 = vmatpush.msra.mxu0 0.0
    %1322 = vmatpush.msra.mxu0 0.0
    %1323 = vmatpush.msra.mxu0 0.0
    %1324 = vmatpush.msra.mxu0 0.0
    %1325 = vmatpush.msra.mxu0 0.0
    %1326 = vmatpush.msra.mxu0 0.0
    %1327 = vmatpush.msra.mxu0 0.0
    %1328 = vmatpush.msra.mxu0 0.0
    %1329 = vmatpush.msra.mxu0 0.0
    %1330 = vmatpush.msra.mxu0 0.0
    %1331 = vmatpush.msra.mxu0 0.0
    %1332 = vmatpush.msra.mxu0 0.0
    %1333 = vmatpush.msra.mxu0 %v295
    %1334 = vmatpush.msra.mxu0 %v294
    %1335 = vmatpush.msra.mxu0 %v293
    %1336 = vmatpush.msra.mxu0 %v292
    %1337 = vmatmul.f32.gmra.mxu0 %v1319
    %v1338 = vpop.f32.mrf.mxu0
    %v1339 = vadd.f32 0.0, %v1338
    %1340 = vdwg.mxu0
    %v1341 = vadd.f32 %v227, %v1339
    %v1342 = vtanh.pop %v1341
    %v1343 = vxor.u32 %v1341, 2147483648
    %v1344 = vmul.f32 %v1343, 1.442695
    %v1345 = vpow.pop %v1344
    %v1346 = vadd.f32 %v1345, 1.0
    %v1347 = vrcp.pop %v1346
    %v1348 = vmul.f32 %v1346, %v1347
    %v1349 = vsub.f32 1.0, %v1348
    %v1350 = vmul.f32 %v1347, %v1349
    %v1351 = vadd.f32 %v1347, %v1350
    %vm1352 = vweird.f32 %v1346
    %vm1353 = vweird.f32 %v1347
    %vm1354 = vmor %vm1352, %vm1353
    %v1355 = vsel %vm1354, %v1347, %v1351
    %v1356 = vand.u32 2147483647, %v1346
    %vm1357 = vcmp.eq.f32.partialorder %v1356, 8.507059e+37
    %v1358 = vand.u32 %v1346, 2147483648
    %v1359 = vor.u32 1.1754944e-38, %v1358
    %v1360 = vsel %vm1357, %v1359, %v1355
    %v1361 = vmul.f32 1.0, %v1360
    %v1362 = vsel %vm306, %v1342, %v1361
    %v1363 = vmul.f32 %v1362, %v1308
    %1365 = vrot.lane.b32.xlu0 %v1362, 64
    %v1366 = vpop.permute.xlu0 %1365
    %v1368 = vmul.f32 %v1362, %v1366
    %1370 = vrot.lane.b32.xlu0 %v1368, 32
    %v1371 = vpop.permute.xlu0 %1370
    %v1373 = vadd.f32 %v1363, %v1371
    %v1374 = vtanh.pop %v1373
    %1376 = vrot.lane.b32.xlu0 %v1374, 64
    %v1377 = vpop.permute.xlu0 %1376
    %v1379 = vmul.f32 %v1362, %v1377
    %vm1380 = vcmp.gt.s32.totalorder %v300, 9
    %v1381 = vsel %vm1380, 1, 0
    %1382 = vset.pattern.permute.xlu0 0
    %1383 = vperm.xlu0 %1382, %v1381
    %v1384 = vpop.permute.xlu0 %1383
    %vm1385 = vcmp.eq.s32.totalorder %v1384, 1
    %v1386 = vsel %vm1385, %v1379, %v1307
    %v1387 = vsel %vm1385, %v1373, %v1308
    %v1388 = vsel %vm1385, %v1379, 0.0
    %1390 = vrot.lane.b32.xlu0 %v1388, 32
    %v1391 = vpop.permute.xlu0 %1390
    %s1393 = scalar_lea.vmem [#allocation2], 18
    %1394 = vst.msk [vmem:[%s1393] sm:$0x3] %vm381, %v1391
    %1396 = vrot.lane.b32.xlu0 %v1386, 32
    %v1397 = vpop.permute.xlu0 %1396
    %v1398 = vsel %vm185, %v1397, 0
    %1400 = vmatpush.msra.mxu0 0.0
    %1401 = vmatpush.msra.mxu0 0.0
    %1402 = vmatpush.msra.mxu0 0.0
    %1403 = vmatpush.msra.mxu0 0.0
    %1404 = vmatpush.msra.mxu0 0.0
    %1405 = vmatpush.msra.mxu0 0.0
    %1406 = vmatpush.msra.mxu0 0.0
    %1407 = vmatpush.msra.mxu0 0.0
    %1408 = vmatpush.msra.mxu0 0.0
    %1409 = vmatpush.msra.mxu0 0.0
    %1410 = vmatpush.msra.mxu0 0.0
    %1411 = vmatpush.msra.mxu0 0.0
    %1412 = vmatpush.msra.mxu0 %v295
    %1413 = vmatpush.msra.mxu0 %v294
    %1414 = vmatpush.msra.mxu0 %v293
    %1415 = vmatpush.msra.mxu0 %v292
    %1416 = vmatmul.f32.gmra.mxu0 %v1398
    %v1417 = vpop.f32.mrf.mxu0
    %v1418 = vadd.f32 0.0, %v1417
    %1419 = vdwg.mxu0
    %v1420 = vadd.f32 %v228, %v1418
    %v1421 = vtanh.pop %v1420
    %v1422 = vxor.u32 %v1420, 2147483648
    %v1423 = vmul.f32 %v1422, 1.442695
    %v1424 = vpow.pop %v1423
    %v1425 = vadd.f32 %v1424, 1.0
    %v1426 = vrcp.pop %v1425
    %v1427 = vmul.f32 %v1425, %v1426
    %v1428 = vsub.f32 1.0, %v1427
    %v1429 = vmul.f32 %v1426, %v1428
    %v1430 = vadd.f32 %v1426, %v1429
    %vm1431 = vweird.f32 %v1425
    %vm1432 = vweird.f32 %v1426
    %vm1433 = vmor %vm1431, %vm1432
    %v1434 = vsel %vm1433, %v1426, %v1430
    %v1435 = vand.u32 2147483647, %v1425
    %vm1436 = vcmp.eq.f32.partialorder %v1435, 8.507059e+37
    %v1437 = vand.u32 %v1425, 2147483648
    %v1438 = vor.u32 1.1754944e-38, %v1437
    %v1439 = vsel %vm1436, %v1438, %v1434
    %v1440 = vmul.f32 1.0, %v1439
    %v1441 = vsel %vm306, %v1421, %v1440
    %v1442 = vmul.f32 %v1441, %v1387
    %1444 = vrot.lane.b32.xlu0 %v1441, 64
    %v1445 = vpop.permute.xlu0 %1444
    %v1447 = vmul.f32 %v1441, %v1445
    %1449 = vrot.lane.b32.xlu0 %v1447, 32
    %v1450 = vpop.permute.xlu0 %1449
    %v1452 = vadd.f32 %v1442, %v1450
    %v1453 = vtanh.pop %v1452
    %1455 = vrot.lane.b32.xlu0 %v1453, 64
    %v1456 = vpop.permute.xlu0 %1455
    %v1458 = vmul.f32 %v1441, %v1456
    %vm1459 = vcmp.gt.s32.totalorder %v300, 10
    %v1460 = vsel %vm1459, 1, 0
    %1461 = vset.pattern.permute.xlu0 0
    %1462 = vperm.xlu0 %1461, %v1460
    %v1463 = vpop.permute.xlu0 %1462
    %vm1464 = vcmp.eq.s32.totalorder %v1463, 1
    %v1465 = vsel %vm1464, %v1458, %v1386
    %v1466 = vsel %vm1464, %v1452, %v1387
    %v1467 = vsel %vm1464, %v1458, 0.0
    %1469 = vrot.lane.b32.xlu0 %v1467, 32
    %v1470 = vpop.permute.xlu0 %1469
    %s1472 = scalar_lea.vmem [#allocation2], 20
    %1473 = vst.msk [vmem:[%s1472] sm:$0x3] %vm381, %v1470
    %1475 = vrot.lane.b32.xlu0 %v1465, 32
    %v1476 = vpop.permute.xlu0 %1475
    %v1477 = vsel %vm185, %v1476, 0
    %1479 = vmatpush.msra.mxu0 0.0
    %1480 = vmatpush.msra.mxu0 0.0
    %1481 = vmatpush.msra.mxu0 0.0
    %1482 = vmatpush.msra.mxu0 0.0
    %1483 = vmatpush.msra.mxu0 0.0
    %1484 = vmatpush.msra.mxu0 0.0
    %1485 = vmatpush.msra.mxu0 0.0
    %1486 = vmatpush.msra.mxu0 0.0
    %1487 = vmatpush.msra.mxu0 0.0
    %1488 = vmatpush.msra.mxu0 0.0
    %1489 = vmatpush.msra.mxu0 0.0
    %1490 = vmatpush.msra.mxu0 0.0
    %1491 = vmatpush.msra.mxu0 %v295
    %1492 = vmatpush.msra.mxu0 %v294
    %1493 = vmatpush.msra.mxu0 %v293
    %1494 = vmatpush.msra.mxu0 %v292
    %1495 = vmatmul.f32.gmra.mxu0 %v1477
    %v1496 = vpop.f32.mrf.mxu0
    %v1497 = vadd.f32 0.0, %v1496
    %1498 = vdwg.mxu0
    %v1499 = vadd.f32 %v229, %v1497
    %v1500 = vtanh.pop %v1499
    %v1501 = vxor.u32 %v1499, 2147483648
    %v1502 = vmul.f32 %v1501, 1.442695
    %v1503 = vpow.pop %v1502
    %v1504 = vadd.f32 %v1503, 1.0
    %v1505 = vrcp.pop %v1504
    %v1506 = vmul.f32 %v1504, %v1505
    %v1507 = vsub.f32 1.0, %v1506
    %v1508 = vmul.f32 %v1505, %v1507
    %v1509 = vadd.f32 %v1505, %v1508
    %vm1510 = vweird.f32 %v1504
    %vm1511 = vweird.f32 %v1505
    %vm1512 = vmor %vm1510, %vm1511
    %v1513 = vsel %vm1512, %v1505, %v1509
    %v1514 = vand.u32 2147483647, %v1504
    %vm1515 = vcmp.eq.f32.partialorder %v1514, 8.507059e+37
    %v1516 = vand.u32 %v1504, 2147483648
    %v1517 = vor.u32 1.1754944e-38, %v1516
    %v1518 = vsel %vm1515, %v1517, %v1513
    %v1519 = vmul.f32 1.0, %v1518
    %v1520 = vsel %vm306, %v1500, %v1519
    %v1521 = vmul.f32 %v1520, %v1466
    %1523 = vrot.lane.b32.xlu0 %v1520, 64
    %v1524 = vpop.permute.xlu0 %1523
    %v1526 = vmul.f32 %v1520, %v1524
    %1528 = vrot.lane.b32.xlu0 %v1526, 32
    %v1529 = vpop.permute.xlu0 %1528
    %v1531 = vadd.f32 %v1521, %v1529
    %v1532 = vtanh.pop %v1531
    %1534 = vrot.lane.b32.xlu0 %v1532, 64
    %v1535 = vpop.permute.xlu0 %1534
    %v1537 = vmul.f32 %v1520, %v1535
    %vm1538 = vcmp.gt.s32.totalorder %v300, 11
    %v1539 = vsel %vm1538, 1, 0
    %1540 = vset.pattern.permute.xlu0 0
    %1541 = vperm.xlu0 %1540, %v1539
    %v1542 = vpop.permute.xlu0 %1541
    %vm1543 = vcmp.eq.s32.totalorder %v1542, 1
    %v1544 = vsel %vm1543, %v1537, 0.0
    %1546 = vrot.lane.b32.xlu0 %v1544, 32
    %v1547 = vpop.permute.xlu0 %1546
    %s1549 = scalar_lea.vmem [#allocation2], 22
    %1550 = vst.msk [vmem:[%s1549] sm:$0x3] %vm381, %v1547
    %v1551 = vld [vmem:[#allocation2] sm:$0x3]
    %v1552 = vld [vmem:[#allocation2 + $0x2] sm:$0x3]
    %v1553 = vld [vmem:[#allocation2 + $0x4] sm:$0x3]
    %v1554 = vld [vmem:[#allocation2 + $0x6] sm:$0x3]
    %v1555 = vld [vmem:[#allocation2 + $0x8] sm:$0x3]
    %v1556 = vld [vmem:[#allocation2 + $0xa] sm:$0x3]
    %v1557 = vld [vmem:[#allocation2 + $0xc] sm:$0x3]
    %v1558 = vld [vmem:[#allocation2 + $0xe] sm:$0x3]
    %v1559 = vld [vmem:[#allocation2 + $0x10] sm:$0x3]
    %v1560 = vld [vmem:[#allocation2 + $0x12] sm:$0x3]
    %v1561 = vld [vmem:[#allocation2 + $0x14] sm:$0x3]
    %v1562 = vld [vmem:[#allocation2 + $0x16] sm:$0x3]
    %v1563 = vld [vmem:[#allocation3] sm:$0x3]
    %v1564 = vld [vmem:[#allocation3 + $0x2] sm:$0x3]
    %v1565 = vld [vmem:[#allocation3 + $0x4] sm:$0x3]
    %v1566 = vld [vmem:[#allocation3 + $0x6] sm:$0x3]
    %v1567 = vcvt.s32.f32 %v300
    %v1568 = vmax.f32 %v1567, 1.0
    %v1569 = vcvt.s32.f32 %v301
    %v1570 = vmax.f32 %v1569, 1.0
    %v1571 = vsel %vm381, %v1551, 0.0
    %v1572 = vsel %vm381, %v1552, 0.0
    %v1573 = vadd.f32 %v1571, %v1572
    %v1574 = vsel %vm381, %v1553, 0.0
    %v1575 = vadd.f32 %v1573, %v1574
    %v1576 = vsel %vm381, %v1554, 0.0
    %v1577 = vadd.f32 %v1575, %v1576
    %v1578 = vsel %vm381, %v1555, 0.0
    %v1579 = vadd.f32 %v1577, %v1578
    %v1580 = vsel %vm381, %v1556, 0.0
    %v1581 = vadd.f32 %v1579, %v1580
    %v1582 = vsel %vm381, %v1557, 0.0
    %v1583 = vadd.f32 %v1581, %v1582
    %v1584 = vsel %vm381, %v1558, 0.0
    %v1585 = vadd.f32 %v1583, %v1584
    %v1586 = vsel %vm381, %v1559, 0.0
    %v1587 = vadd.f32 %v1585, %v1586
    %v1588 = vsel %vm381, %v1560, 0.0
    %v1589 = vadd.f32 %v1587, %v1588
    %v1590 = vsel %vm381, %v1561, 0.0
    %v1591 = vadd.f32 %v1589, %v1590
    %v1592 = vsel %vm381, %v1562, 0.0
    %v1593 = vadd.f32 %v1591, %v1592
    %1595 = vset.pattern.permute.xlu0 0
    %1596 = vperm.xlu0 %1595, %v1568
    %v1597 = vpop.permute.xlu0 %1596
    %v1599 = vrcp.pop %v1597
    %v1600 = vmul.f32 %v1597, %v1599
    %v1601 = vsub.f32 1.0, %v1600
    %v1602 = vmul.f32 %v1599, %v1601
    %v1603 = vadd.f32 %v1599, %v1602
    %vm1604 = vweird.f32 %v1597
    %vm1605 = vweird.f32 %v1599
    %vm1606 = vmor %vm1604, %vm1605
    %v1607 = vsel %vm1606, %v1599, %v1603
    %v1608 = vand.u32 2147483647, %v1597
    %vm1609 = vcmp.eq.f32.partialorder %v1608, 8.507059e+37
    %v1610 = vand.u32 %v1597, 2147483648
    %v1611 = vor.u32 1.1754944e-38, %v1610
    %v1612 = vsel %vm1609, %v1611, %v1607
    %v1613 = vmul.f32 %v1593, %v1612
    %v1614 = vsel %vm381, %v1563, 0.0
    %v1615 = vsel %vm381, %v1564, 0.0
    %v1616 = vadd.f32 %v1614, %v1615
    %v1617 = vsel %vm381, %v1565, 0.0
    %v1618 = vadd.f32 %v1616, %v1617
    %v1619 = vsel %vm381, %v1566, 0.0
    %v1620 = vadd.f32 %v1618, %v1619
    %1622 = vset.pattern.permute.xlu0 0
    %1623 = vperm.xlu0 %1622, %v1570
    %v1624 = vpop.permute.xlu0 %1623
    %v1626 = vrcp.pop %v1624
    %v1627 = vmul.f32 %v1624, %v1626
    %v1628 = vsub.f32 1.0, %v1627
    %v1629 = vmul.f32 %v1626, %v1628
    %v1630 = vadd.f32 %v1626, %v1629
    %vm1631 = vweird.f32 %v1624
    %vm1632 = vweird.f32 %v1626
    %vm1633 = vmor %vm1631, %vm1632
    %v1634 = vsel %vm1633, %v1626, %v1630
    %v1635 = vand.u32 2147483647, %v1624
    %vm1636 = vcmp.eq.f32.partialorder %v1635, 8.507059e+37
    %v1637 = vand.u32 %v1624, 2147483648
    %v1638 = vor.u32 1.1754944e-38, %v1637
    %v1639 = vsel %vm1636, %v1638, %v1634
    %v1640 = vmul.f32 %v1620, %v1639
    %v1641 = vld [vmem:[%s25] sm:$0xff]
    %v1642 = vld [vmem:[%s25 + $0x8] sm:$0xff]
    %v1643 = vld [vmem:[%s25 + $0x10] sm:$0xff]
    %v1644 = vld [vmem:[%s25 + $0x18] sm:$0xff]
    %v1645 = vld [vmem:[%s27] sm:$0x1]
    %v1647 = vperm.slane %v1645, 0
    %1653 = vst [vmem:[#allocation1] ss:$4 sm:$0xff] %v1563
    %s1654 = scalar_lea.vmem [#allocation1], 1
    %1655 = vst [vmem:[%s1654] ss:$4 sm:$0xff] %v1564
    %s1656 = scalar_lea.vmem [#allocation1], 2
    %1657 = vst [vmem:[%s1656] ss:$4 sm:$0xff] %v1565
    %s1658 = scalar_lea.vmem [#allocation1], 3
    %1659 = vst [vmem:[%s1658] ss:$4 sm:$0xff] %v1566
    %v1660 = vld.sshfl [vmem:[#allocation1] sm:$0xff pattern:$0x73625140]
    %v1661 = vsel %vm185, %v1660, 0
    %1663 = vmatpush.msra.mxu0 0.0
    %1664 = vmatpush.msra.mxu0 0.0
    %1665 = vmatpush.msra.mxu0 0.0
    %1666 = vmatpush.msra.mxu0 0.0
    %1667 = vmatpush.msra.mxu0 0.0
    %1668 = vmatpush.msra.mxu0 0.0
    %1669 = vmatpush.msra.mxu0 0.0
    %1670 = vmatpush.msra.mxu0 0.0
    %1671 = vmatpush.msra.mxu0 0.0
    %1672 = vmatpush.msra.mxu0 0.0
    %1673 = vmatpush.msra.mxu0 0.0
    %1674 = vmatpush.msra.mxu0 0.0
    %1675 = vmatpush.msra.mxu0 %v1644
    %1676 = vmatpush.msra.mxu0 %v1643
    %1677 = vmatpush.msra.mxu0 %v1642
    %1678 = vmatpush.msra.mxu0 %v1641
    %1679 = vmatmul.f32.gmra.mxu0 %v1661
    %v1680 = vpop.f32.mrf.mxu0
    %v1681 = vadd.f32 %v1647, %v1680
    %1682 = vdwg.mxu0
    %v1684 = vrot.slane %v1681, 2
    %v1685 = vrot.slane %v1681, 4
    %v1686 = vrot.slane %v1681, 6
    %v1690 = vld [vmem:[%s29] sm:$0xff]
    %v1691 = vld [vmem:[%s29 + $0x8] sm:$0xff]
    %v1692 = vld [vmem:[%s29 + $0x10] sm:$0xff]
    %v1693 = vld [vmem:[%s29 + $0x18] sm:$0xff]
    %v1694 = vld [vmem:[%s31] sm:$0x1]
    %v1696 = vperm.slane %v1694, 0
    %v1699 = vsel %vm185, %v1613, 0
    %1701 = vmatpush.msra.mxu0 0.0
    %1702 = vmatpush.msra.mxu0 0.0
    %1703 = vmatpush.msra.mxu0 0.0
    %1704 = vmatpush.msra.mxu0 0.0
    %1705 = vmatpush.msra.mxu0 0.0
    %1706 = vmatpush.msra.mxu0 0.0
    %1707 = vmatpush.msra.mxu0 0.0
    %1708 = vmatpush.msra.mxu0 0.0
    %1709 = vmatpush.msra.mxu0 0.0
    %1710 = vmatpush.msra.mxu0 0.0
    %1711 = vmatpush.msra.mxu0 0.0
    %1712 = vmatpush.msra.mxu0 0.0
    %1713 = vmatpush.msra.mxu0 %v1693
    %1714 = vmatpush.msra.mxu0 %v1692
    %1715 = vmatpush.msra.mxu0 %v1691
    %1716 = vmatpush.msra.mxu0 %v1690
    %1717 = vmatmul.f32.gmra.mxu0 %v1699
    %v1718 = vpop.f32.mrf.mxu0
    %v1719 = vadd.f32 %v1696, %v1718
    %1720 = vdwg.mxu0
    %v1721 = vld [vmem:[%s33] sm:$0xff]
    %v1722 = vld [vmem:[%s33 + $0x8] sm:$0xff]
    %v1723 = vld [vmem:[%s33 + $0x10] sm:$0xff]
    %v1724 = vld [vmem:[%s33 + $0x18] sm:$0xff]
    %v1726 = vsel %vm185, %v1719, 0
    %1728 = vmatpush.msra.mxu0 0.0
    %1729 = vmatpush.msra.mxu0 0.0
    %1730 = vmatpush.msra.mxu0 0.0
    %1731 = vmatpush.msra.mxu0 0.0
    %1732 = vmatpush.msra.mxu0 0.0
    %1733 = vmatpush.msra.mxu0 0.0
    %1734 = vmatpush.msra.mxu0 0.0
    %1735 = vmatpush.msra.mxu0 0.0
    %1736 = vmatpush.msra.mxu0 0.0
    %1737 = vmatpush.msra.mxu0 0.0
    %1738 = vmatpush.msra.mxu0 0.0
    %1739 = vmatpush.msra.mxu0 0.0
    %1740 = vmatpush.msra.mxu0 %v1724
    %1741 = vmatpush.msra.mxu0 %v1723
    %1742 = vmatpush.msra.mxu0 %v1722
    %1743 = vmatpush.msra.mxu0 %v1721
    %1744 = vmatmul.f32.gmra.mxu0 %v1726
    %v1745 = vpop.f32.mrf.mxu0
    %v1746 = vadd.f32 0.0, %v1745
    %1747 = vdwg.mxu0
    %v1748 = vmul.f32 %v1681, %v1746
    %v1749 = vmul.f32 %v1684, %v1746
    %v1750 = vmul.f32 %v1685, %v1746
    %v1751 = vmul.f32 %v1686, %v1746
    %v1752 = vsel %vm381, %v1748, 0.0
    %1753 = vadd.xlane.f32.xlu0 %v1752
    %v1754 = vpop.xlane.xlu0 %1753
    %v1755 = vsel %vm381, %v1749, 0.0
    %1756 = vadd.xlane.f32.xlu0 %v1755
    %v1757 = vpop.xlane.xlu0 %1756
    %v1758 = vsel %vm381, %v1750, 0.0
    %1759 = vadd.xlane.f32.xlu0 %v1758
    %v1760 = vpop.xlane.xlu0 %1759
    %v1761 = vsel %vm381, %v1751, 0.0
    %1762 = vadd.xlane.f32.xlu0 %v1761
    %v1763 = vpop.xlane.xlu0 %1762
    %v1764 = vlaneseq
    %v1765 = vshrl.u32 %v1764, 7
    %v1766 = vld [vmem:[%s11] sm:$0x1]
    %v1767 = vperm.slane %v1766, 0
    %vm1768 = vcmp.lt.s32.totalorder %v1765, %v1767
    %v1773 = vperm.slane %v1754, %v303
    %v1774 = vperm.slane %v1757, %v303
    %v1775 = vperm.slane %v1760, %v303
    %v1776 = vperm.slane %v1763, %v303
    %vm1777 = vcmask 1041409
    %v1778 = vsel %vm1777, %v1774, %v1773
    %vm1779 = vcmask 1042434
    %v1780 = vsel %vm1779, %v1775, %v1778
    %vm1781 = vcmask 1043459
    %v1782 = vsel %vm1781, %v1776, %v1780
    %v1784 = vsel %vm1768, %v1782, -1e+30
    %vm1785 = vcmask 11264
    %v1786 = vsel %vm1785, %v1784, -inf
    %v1787 = vrot.slane %v1786, 4
    %v1788 = vmax.f32 %v1786, %v1787
    %v1789 = vrot.slane %v1788, 2
    %v1790 = vmax.f32 %v1788, %v1789
    %v1791 = vrot.slane %v1790, 1
    %v1792 = vmax.f32 %v1790, %v1791
    %v1793 = vsub.f32 %v1784, %v1792
    %v1794 = vmul.f32 %v1793, 1.442695
    %v1795 = vpow.pop %v1794
    %v1796 = vsel %vm1768, %v1795, 0.0
    %v1797 = vsel %vm1785, %v1796, 0.0
    %v1798 = vrot.slane %v1797, 4
    %v1799 = vadd.f32 %v1797, %v1798
    %v1800 = vrot.slane %v1799, 2
    %v1801 = vadd.f32 %v1799, %v1800
    %v1802 = vrot.slane %v1801, 1
    %v1803 = vadd.f32 %v1801, %v1802
    %v1804 = vmax.f32 %v1803, 1e-30
    %v1805 = vrcp.pop %v1804
    %v1806 = vmul.f32 %v1804, %v1805
    %v1807 = vsub.f32 1.0, %v1806
    %v1808 = vmul.f32 %v1805, %v1807
    %v1809 = vadd.f32 %v1805, %v1808
    %vm1810 = vweird.f32 %v1804
    %vm1811 = vweird.f32 %v1805
    %vm1812 = vmor %vm1810, %vm1811
    %v1813 = vsel %vm1812, %v1805, %v1809
    %v1814 = vand.u32 2147483647, %v1804
    %vm1815 = vcmp.eq.f32.partialorder %v1814, 8.507059e+37
    %v1816 = vand.u32 %v1804, 2147483648
    %v1817 = vor.u32 1.1754944e-38, %v1816
    %v1818 = vsel %vm1815, %v1817, %v1813
    %v1819 = vmul.f32 %v1796, %v1818
    %v1820 = vperm.slane %v1819, 0
    %v1821 = vlaneseq
    %v1822 = vshrl.u32 %v1821, 7
    %1824 = vset.pattern.permute.xlu0 %v1822
    %1825 = vperm.xlu0 %1824, %v1820
    %v1826 = vpop.permute.xlu0 %1825
    %v1827 = vperm.slane %v1819, 1
    %v1828 = vlaneseq
    %v1829 = vshrl.u32 %v1828, 7
    %1831 = vset.pattern.permute.xlu0 %v1829
    %1832 = vperm.xlu0 %1831, %v1827
    %v1833 = vpop.permute.xlu0 %1832
    %v1834 = vperm.slane %v1819, 2
    %v1835 = vlaneseq
    %v1836 = vshrl.u32 %v1835, 7
    %1838 = vset.pattern.permute.xlu0 %v1836
    %1839 = vperm.xlu0 %1838, %v1834
    %v1840 = vpop.permute.xlu0 %1839
    %v1841 = vperm.slane %v1819, 3
    %v1842 = vlaneseq
    %v1843 = vshrl.u32 %v1842, 7
    %1845 = vset.pattern.permute.xlu0 %v1843
    %1846 = vperm.xlu0 %1845, %v1841
    %v1847 = vpop.permute.xlu0 %1846
    %v1848 = vmul.f32 %v1826, %v1681
    %v1849 = vmul.f32 %v1833, %v1684
    %v1850 = vmul.f32 %v1840, %v1685
    %v1851 = vmul.f32 %v1847, %v1686
    %v1852 = vsel %vm381, %v1848, 0.0
    %v1853 = vsel %vm381, %v1849, 0.0
    %v1854 = vadd.f32 %v1852, %v1853
    %v1855 = vsel %vm381, %v1850, 0.0
    %v1856 = vadd.f32 %v1854, %v1855
    %v1857 = vsel %vm381, %v1851, 0.0
    %v1858 = vadd.f32 %v1856, %v1857
    %v1859 = vld [vmem:[%s35] sm:$0xff]
    %v1860 = vld [vmem:[%s35 + $0x8] sm:$0xff]
    %v1861 = vld [vmem:[%s35 + $0x10] sm:$0xff]
    %v1862 = vld [vmem:[%s35 + $0x18] sm:$0xff]
    %v1863 = vld [vmem:[%s37] sm:$0x1]
    %v1865 = vperm.slane %v1863, 0
    %v1868 = vsel %vm185, %v1858, 0
    %1870 = vmatpush.msra.mxu0 0.0
    %1871 = vmatpush.msra.mxu0 0.0
    %1872 = vmatpush.msra.mxu0 0.0
    %1873 = vmatpush.msra.mxu0 0.0
    %1874 = vmatpush.msra.mxu0 0.0
    %1875 = vmatpush.msra.mxu0 0.0
    %1876 = vmatpush.msra.mxu0 0.0
    %1877 = vmatpush.msra.mxu0 0.0
    %1878 = vmatpush.msra.mxu0 0.0
    %1879 = vmatpush.msra.mxu0 0.0
    %1880 = vmatpush.msra.mxu0 0.0
    %1881 = vmatpush.msra.mxu0 0.0
    %1882 = vmatpush.msra.mxu0 %v1862
    %1883 = vmatpush.msra.mxu0 %v1861
    %1884 = vmatpush.msra.mxu0 %v1860
    %1885 = vmatpush.msra.mxu0 %v1859
    %1886 = vmatmul.f32.gmra.mxu0 %v1868
    %v1887 = vpop.f32.mrf.mxu0
    %v1888 = vadd.f32 %v1865, %v1887
    %1889 = vdwg.mxu0
    %v1890 = vld [vmem:[%s39] sm:$0xff]
    %v1891 = vld [vmem:[%s39 + $0x8] sm:$0xff]
    %v1892 = vld [vmem:[%s39 + $0x10] sm:$0xff]
    %v1893 = vld [vmem:[%s39 + $0x18] sm:$0xff]
    %v1894 = vld [vmem:[%s41] sm:$0x1]
    %v1896 = vperm.slane %v1894, 0
    %1910 = vst [vmem:[#allocation1] ss:$4 sm:$0xff] %v1551
    %s1911 = scalar_lea.vmem [#allocation1], 1
    %1912 = vst [vmem:[%s1911] ss:$4 sm:$0xff] %v1552
    %s1913 = scalar_lea.vmem [#allocation1], 2
    %1914 = vst [vmem:[%s1913] ss:$4 sm:$0xff] %v1553
    %s1915 = scalar_lea.vmem [#allocation1], 3
    %1916 = vst [vmem:[%s1915] ss:$4 sm:$0xff] %v1554
    %s1917 = scalar_lea.vmem [#allocation1], 32
    %1918 = vst [vmem:[%s1917] ss:$4 sm:$0xff] %v1555
    %s1919 = scalar_lea.vmem [#allocation1], 33
    %1920 = vst [vmem:[%s1919] ss:$4 sm:$0xff] %v1556
    %s1921 = scalar_lea.vmem [#allocation1], 34
    %1922 = vst [vmem:[%s1921] ss:$4 sm:$0xff] %v1557
    %s1923 = scalar_lea.vmem [#allocation1], 35
    %1924 = vst [vmem:[%s1923] ss:$4 sm:$0xff] %v1558
    %v1925 = vld.sshfl [vmem:[#allocation1] sm:$0xff pattern:$0x73625140]
    %v1926 = vld.sshfl [vmem:[#allocation1 + $0x20] sm:$0xff pattern:$0x73625140]
    %1927 = vst [vmem:[#allocation1] ss:$4 sm:$0xff] %v1559
    %1928 = vst [vmem:[%s1911] ss:$4 sm:$0xff] %v1560
    %1929 = vst [vmem:[%s1913] ss:$4 sm:$0xff] %v1561
    %1930 = vst [vmem:[%s1915] ss:$4 sm:$0xff] %v1562
    %v1931 = vld.sshfl [vmem:[#allocation1] sm:$0xff pattern:$0x73625140]
    %v1932 = vsel %vm185, %v1925, 0
    %v1934 = vsel %vm185, %v1926, 0
    %v1936 = vsel %vm185, %v1931, 0
    %1938 = vmatpush.msra.mxu0 0.0
    %1939 = vmatpush.msra.mxu0 0.0
    %1940 = vmatpush.msra.mxu0 0.0
    %1941 = vmatpush.msra.mxu0 0.0
    %1942 = vmatpush.msra.mxu0 0.0
    %1943 = vmatpush.msra.mxu0 0.0
    %1944 = vmatpush.msra.mxu0 0.0
    %1945 = vmatpush.msra.mxu0 0.0
    %1946 = vmatpush.msra.mxu0 0.0
    %1947 = vmatpush.msra.mxu0 0.0
    %1948 = vmatpush.msra.mxu0 0.0
    %1949 = vmatpush.msra.mxu0 0.0
    %1950 = vmatpush.msra.mxu0 %v1893
    %1951 = vmatpush.msra.mxu0 %v1892
    %1952 = vmatpush.msra.mxu0 %v1891
    %1953 = vmatpush.msra.mxu0 %v1890
    %1954 = vmatmul.f32.gmra.mxu0 %v1932
    %v1955 = vpop.f32.mrf.mxu0
    %v1956 = vadd.f32 %v1896, %v1955
    %1957 = vmatmul.f32.gmra.mxu0 %v1934
    %v1958 = vpop.f32.mrf.mxu0
    %v1959 = vadd.f32 %v1896, %v1958
    %1960 = vmatmul.f32.gmra.mxu0 %v1936
    %v1961 = vpop.f32.mrf.mxu0
    %v1962 = vadd.f32 %v1896, %v1961
    %1963 = vdwg.mxu0
    %v1967 = vrot.slane %v1956, 2
    %v1968 = vrot.slane %v1956, 4
    %v1969 = vrot.slane %v1956, 6
    %v1970 = vrot.slane %v1959, 2
    %v1971 = vrot.slane %v1959, 4
    %v1972 = vrot.slane %v1959, 6
    %v1973 = vrot.slane %v1962, 2
    %v1974 = vrot.slane %v1962, 4
    %v1975 = vrot.slane %v1962, 6
    %v1985 = vld [vmem:[%s43] sm:$0xff]
    %v1986 = vld [vmem:[%s43 + $0x8] sm:$0xff]
    %v1987 = vld [vmem:[%s43 + $0x10] sm:$0xff]
    %v1988 = vld [vmem:[%s43 + $0x18] sm:$0xff]
    %v1989 = vld [vmem:[%s45] sm:$0x1]
    %v1991 = vperm.slane %v1989, 0
    %v1994 = vsel %vm185, %v1640, 0
    %1996 = vmatpush.msra.mxu0 0.0
    %1997 = vmatpush.msra.mxu0 0.0
    %1998 = vmatpush.msra.mxu0 0.0
    %1999 = vmatpush.msra.mxu0 0.0
    %2000 = vmatpush.msra.mxu0 0.0
    %2001 = vmatpush.msra.mxu0 0.0
    %2002 = vmatpush.msra.mxu0 0.0
    %2003 = vmatpush.msra.mxu0 0.0
    %2004 = vmatpush.msra.mxu0 0.0
    %2005 = vmatpush.msra.mxu0 0.0
    %2006 = vmatpush.msra.mxu0 0.0
    %2007 = vmatpush.msra.mxu0 0.0
    %2008 = vmatpush.msra.mxu0 %v1988
    %2009 = vmatpush.msra.mxu0 %v1987
    %2010 = vmatpush.msra.mxu0 %v1986
    %2011 = vmatpush.msra.mxu0 %v1985
    %2012 = vmatmul.f32.gmra.mxu0 %v1994
    %v2013 = vpop.f32.mrf.mxu0
    %v2014 = vadd.f32 %v1991, %v2013
    %2015 = vdwg.mxu0
    %v2016 = vld [vmem:[%s47] sm:$0xff]
    %v2017 = vld [vmem:[%s47 + $0x8] sm:$0xff]
    %v2018 = vld [vmem:[%s47 + $0x10] sm:$0xff]
    %v2019 = vld [vmem:[%s47 + $0x18] sm:$0xff]
    %v2021 = vsel %vm185, %v2014, 0
    %2023 = vmatpush.msra.mxu0 0.0
    %2024 = vmatpush.msra.mxu0 0.0
    %2025 = vmatpush.msra.mxu0 0.0
    %2026 = vmatpush.msra.mxu0 0.0
    %2027 = vmatpush.msra.mxu0 0.0
    %2028 = vmatpush.msra.mxu0 0.0
    %2029 = vmatpush.msra.mxu0 0.0
    %2030 = vmatpush.msra.mxu0 0.0
    %2031 = vmatpush.msra.mxu0 0.0
    %2032 = vmatpush.msra.mxu0 0.0
    %2033 = vmatpush.msra.mxu0 0.0
    %2034 = vmatpush.msra.mxu0 0.0
    %2035 = vmatpush.msra.mxu0 %v2019
    %2036 = vmatpush.msra.mxu0 %v2018
    %2037 = vmatpush.msra.mxu0 %v2017
    %2038 = vmatpush.msra.mxu0 %v2016
    %2039 = vmatmul.f32.gmra.mxu0 %v2021
    %v2040 = vpop.f32.mrf.mxu0
    %v2041 = vadd.f32 0.0, %v2040
    %2042 = vdwg.mxu0
    %v2043 = vmul.f32 %v1956, %v2041
    %v2044 = vmul.f32 %v1967, %v2041
    %v2045 = vmul.f32 %v1968, %v2041
    %v2046 = vmul.f32 %v1969, %v2041
    %v2047 = vmul.f32 %v1959, %v2041
    %v2048 = vmul.f32 %v1970, %v2041
    %v2049 = vmul.f32 %v1971, %v2041
    %v2050 = vmul.f32 %v1972, %v2041
    %v2051 = vmul.f32 %v1962, %v2041
    %v2052 = vmul.f32 %v1973, %v2041
    %v2053 = vmul.f32 %v1974, %v2041
    %v2054 = vmul.f32 %v1975, %v2041
    %v2055 = vsel %vm381, %v2043, 0.0
    %2056 = vadd.xlane.f32.xlu0 %v2055
    %v2057 = vpop.xlane.xlu0 %2056
    %v2058 = vsel %vm381, %v2044, 0.0
    %2059 = vadd.xlane.f32.xlu0 %v2058
    %v2060 = vpop.xlane.xlu0 %2059
    %v2061 = vsel %vm381, %v2045, 0.0
    %2062 = vadd.xlane.f32.xlu0 %v2061
    %v2063 = vpop.xlane.xlu0 %2062
    %v2064 = vsel %vm381, %v2046, 0.0
    %2065 = vadd.xlane.f32.xlu0 %v2064
    %v2066 = vpop.xlane.xlu0 %2065
    %v2067 = vsel %vm381, %v2047, 0.0
    %2068 = vadd.xlane.f32.xlu0 %v2067
    %v2069 = vpop.xlane.xlu0 %2068
    %v2070 = vsel %vm381, %v2048, 0.0
    %2071 = vadd.xlane.f32.xlu0 %v2070
    %v2072 = vpop.xlane.xlu0 %2071
    %v2073 = vsel %vm381, %v2049, 0.0
    %2074 = vadd.xlane.f32.xlu0 %v2073
    %v2075 = vpop.xlane.xlu0 %2074
    %v2076 = vsel %vm381, %v2050, 0.0
    %2077 = vadd.xlane.f32.xlu0 %v2076
    %v2078 = vpop.xlane.xlu0 %2077
    %v2079 = vsel %vm381, %v2051, 0.0
    %2080 = vadd.xlane.f32.xlu0 %v2079
    %v2081 = vpop.xlane.xlu0 %2080
    %v2082 = vsel %vm381, %v2052, 0.0
    %2083 = vadd.xlane.f32.xlu0 %v2082
    %v2084 = vpop.xlane.xlu0 %2083
    %v2085 = vsel %vm381, %v2053, 0.0
    %2086 = vadd.xlane.f32.xlu0 %v2085
    %v2087 = vpop.xlane.xlu0 %2086
    %v2088 = vsel %vm381, %v2054, 0.0
    %2089 = vadd.xlane.f32.xlu0 %v2088
    %v2090 = vpop.xlane.xlu0 %2089
    %v2091 = vadd.s32 %v1765, 8
    %v2092 = vld [vmem:[%s9] sm:$0x1]
    %v2093 = vperm.slane %v2092, 0
    %vm2094 = vcmp.lt.s32.totalorder %v1765, %v2093
    %vm2095 = vcmp.lt.s32.totalorder %v2091, %v2093
    %v2108 = vperm.slane %v2057, %v303
    %v2109 = vperm.slane %v2060, %v303
    %v2110 = vperm.slane %v2063, %v303
    %v2111 = vperm.slane %v2066, %v303
    %v2112 = vperm.slane %v2069, %v303
    %v2113 = vperm.slane %v2072, %v303
    %v2114 = vperm.slane %v2075, %v303
    %v2115 = vperm.slane %v2078, %v303
    %v2116 = vperm.slane %v2081, %v303
    %v2117 = vperm.slane %v2084, %v303
    %v2118 = vperm.slane %v2087, %v303
    %v2119 = vperm.slane %v2090, %v303
    %v2120 = vsel %vm1777, %v2109, %v2108
    %v2121 = vsel %vm1779, %v2110, %v2120
    %v2122 = vsel %vm1781, %v2111, %v2121
    %vm2123 = vcmask 1044484
    %v2124 = vsel %vm2123, %v2112, %v2122
    %vm2125 = vcmask 1045509
    %v2126 = vsel %vm2125, %v2113, %v2124
    %vm2127 = vcmask 1046534
    %v2128 = vsel %vm2127, %v2114, %v2126
    %vm2129 = vcmask 1047559
    %v2130 = vsel %vm2129, %v2115, %v2128
    %v2131 = vsel %vm1777, %v2117, %v2116
    %v2132 = vsel %vm1779, %v2118, %v2131
    %v2133 = vsel %vm1781, %v2119, %v2132
    %v2136 = vsel %vm2094, %v2130, -1e+30
    %v2137 = vsel %vm2095, %v2133, -1e+30
    %vm2138 = vcmask 15360
    %v2139 = vsel %vm2138, %v2136, -inf
    %v2140 = vsel %vm1785, %v2137, -inf
    %v2141 = vmax.f32 %v2139, %v2140
    %v2142 = vrot.slane %v2141, 4
    %v2143 = vmax.f32 %v2141, %v2142
    %v2144 = vrot.slane %v2143, 2
    %v2145 = vmax.f32 %v2143, %v2144
    %v2146 = vrot.slane %v2145, 1
    %v2147 = vmax.f32 %v2145, %v2146
    %v2148 = vsub.f32 %v2136, %v2147
    %v2149 = vsub.f32 %v2137, %v2147
    %v2150 = vmul.f32 %v2148, 1.442695
    %v2151 = vpow.pop %v2150
    %v2152 = vmul.f32 %v2149, 1.442695
    %v2153 = vpow.pop %v2152
    %v2154 = vsel %vm2094, %v2151, 0.0
    %v2155 = vsel %vm2095, %v2153, 0.0
    %v2156 = vsel %vm2138, %v2154, 0.0
    %v2157 = vsel %vm1785, %v2155, 0.0
    %v2158 = vadd.f32 %v2156, %v2157
    %v2159 = vrot.slane %v2158, 4
    %v2160 = vadd.f32 %v2158, %v2159
    %v2161 = vrot.slane %v2160, 2
    %v2162 = vadd.f32 %v2160, %v2161
    %v2163 = vrot.slane %v2162, 1
    %v2164 = vadd.f32 %v2162, %v2163
    %v2165 = vmax.f32 %v2164, 1e-30
    %v2166 = vrcp.pop %v2165
    %v2167 = vmul.f32 %v2165, %v2166
    %v2168 = vsub.f32 1.0, %v2167
    %v2169 = vmul.f32 %v2166, %v2168
    %v2170 = vadd.f32 %v2166, %v2169
    %vm2171 = vweird.f32 %v2165
    %vm2172 = vweird.f32 %v2166
    %vm2173 = vmor %vm2171, %vm2172
    %v2174 = vsel %vm2173, %v2166, %v2170
    %v2175 = vand.u32 2147483647, %v2165
    %vm2176 = vcmp.eq.f32.partialorder %v2175, 8.507059e+37
    %v2177 = vand.u32 %v2165, 2147483648
    %v2178 = vor.u32 1.1754944e-38, %v2177
    %v2179 = vsel %vm2176, %v2178, %v2174
    %v2180 = vmul.f32 %v2154, %v2179
    %v2181 = vmul.f32 %v2155, %v2179
    %v2182 = vperm.slane %v2180, 0
    %v2183 = vlaneseq
    %v2184 = vshrl.u32 %v2183, 7
    %2186 = vset.pattern.permute.xlu0 %v2184
    %2187 = vperm.xlu0 %2186, %v2182
    %v2188 = vpop.permute.xlu0 %2187
    %v2189 = vperm.slane %v2180, 1
    %v2190 = vlaneseq
    %v2191 = vshrl.u32 %v2190, 7
    %2193 = vset.pattern.permute.xlu0 %v2191
    %2194 = vperm.xlu0 %2193, %v2189
    %v2195 = vpop.permute.xlu0 %2194
    %v2196 = vperm.slane %v2180, 2
    %v2197 = vlaneseq
    %v2198 = vshrl.u32 %v2197, 7
    %2200 = vset.pattern.permute.xlu0 %v2198
    %2201 = vperm.xlu0 %2200, %v2196
    %v2202 = vpop.permute.xlu0 %2201
    %v2203 = vperm.slane %v2180, 3
    %v2204 = vlaneseq
    %v2205 = vshrl.u32 %v2204, 7
    %2207 = vset.pattern.permute.xlu0 %v2205
    %2208 = vperm.xlu0 %2207, %v2203
    %v2209 = vpop.permute.xlu0 %2208
    %v2210 = vperm.slane %v2180, 4
    %v2211 = vlaneseq
    %v2212 = vshrl.u32 %v2211, 7
    %2214 = vset.pattern.permute.xlu0 %v2212
    %2215 = vperm.xlu0 %2214, %v2210
    %v2216 = vpop.permute.xlu0 %2215
    %v2217 = vperm.slane %v2180, 5
    %v2218 = vlaneseq
    %v2219 = vshrl.u32 %v2218, 7
    %2221 = vset.pattern.permute.xlu0 %v2219
    %2222 = vperm.xlu0 %2221, %v2217
    %v2223 = vpop.permute.xlu0 %2222
    %v2224 = vperm.slane %v2180, 6
    %v2225 = vlaneseq
    %v2226 = vshrl.u32 %v2225, 7
    %2228 = vset.pattern.permute.xlu0 %v2226
    %2229 = vperm.xlu0 %2228, %v2224
    %v2230 = vpop.permute.xlu0 %2229
    %v2231 = vperm.slane %v2180, 7
    %v2232 = vlaneseq
    %v2233 = vshrl.u32 %v2232, 7
    %2235 = vset.pattern.permute.xlu0 %v2233
    %2236 = vperm.xlu0 %2235, %v2231
    %v2237 = vpop.permute.xlu0 %2236
    %v2238 = vperm.slane %v2181, 0
    %v2239 = vlaneseq
    %v2240 = vshrl.u32 %v2239, 7
    %2242 = vset.pattern.permute.xlu0 %v2240
    %2243 = vperm.xlu0 %2242, %v2238
    %v2244 = vpop.permute.xlu0 %2243
    %v2245 = vperm.slane %v2181, 1
    %v2246 = vlaneseq
    %v2247 = vshrl.u32 %v2246, 7
    %2249 = vset.pattern.permute.xlu0 %v2247
    %2250 = vperm.xlu0 %2249, %v2245
    %v2251 = vpop.permute.xlu0 %2250
    %v2252 = vperm.slane %v2181, 2
    %v2253 = vlaneseq
    %v2254 = vshrl.u32 %v2253, 7
    %2256 = vset.pattern.permute.xlu0 %v2254
    %2257 = vperm.xlu0 %2256, %v2252
    %v2258 = vpop.permute.xlu0 %2257
    %v2259 = vperm.slane %v2181, 3
    %v2260 = vlaneseq
    %v2261 = vshrl.u32 %v2260, 7
    %2263 = vset.pattern.permute.xlu0 %v2261
    %2264 = vperm.xlu0 %2263, %v2259
    %v2265 = vpop.permute.xlu0 %2264
    %v2266 = vmul.f32 %v2188, %v1956
    %v2267 = vmul.f32 %v2195, %v1967
    %v2268 = vmul.f32 %v2202, %v1968
    %v2269 = vmul.f32 %v2209, %v1969
    %v2270 = vmul.f32 %v2216, %v1959
    %v2271 = vmul.f32 %v2223, %v1970
    %v2272 = vmul.f32 %v2230, %v1971
    %v2273 = vmul.f32 %v2237, %v1972
    %v2274 = vmul.f32 %v2244, %v1962
    %v2275 = vmul.f32 %v2251, %v1973
    %v2276 = vmul.f32 %v2258, %v1974
    %v2277 = vmul.f32 %v2265, %v1975
    %v2278 = vsel %vm381, %v2266, 0.0
    %v2279 = vsel %vm381, %v2267, 0.0
    %v2280 = vadd.f32 %v2278, %v2279
    %v2281 = vsel %vm381, %v2268, 0.0
    %v2282 = vadd.f32 %v2280, %v2281
    %v2283 = vsel %vm381, %v2269, 0.0
    %v2284 = vadd.f32 %v2282, %v2283
    %v2285 = vsel %vm381, %v2270, 0.0
    %v2286 = vadd.f32 %v2284, %v2285
    %v2287 = vsel %vm381, %v2271, 0.0
    %v2288 = vadd.f32 %v2286, %v2287
    %v2289 = vsel %vm381, %v2272, 0.0
    %v2290 = vadd.f32 %v2288, %v2289
    %v2291 = vsel %vm381, %v2273, 0.0
    %v2292 = vadd.f32 %v2290, %v2291
    %v2293 = vsel %vm381, %v2274, 0.0
    %v2294 = vadd.f32 %v2292, %v2293
    %v2295 = vsel %vm381, %v2275, 0.0
    %v2296 = vadd.f32 %v2294, %v2295
    %v2297 = vsel %vm381, %v2276, 0.0
    %v2298 = vadd.f32 %v2296, %v2297
    %v2299 = vsel %vm381, %v2277, 0.0
    %v2300 = vadd.f32 %v2298, %v2299
    %v2301 = vld [vmem:[%s49] sm:$0xff]
    %v2302 = vld [vmem:[%s49 + $0x8] sm:$0xff]
    %v2303 = vld [vmem:[%s49 + $0x10] sm:$0xff]
    %v2304 = vld [vmem:[%s49 + $0x18] sm:$0xff]
    %v2305 = vld [vmem:[%s51] sm:$0x1]
    %v2307 = vperm.slane %v2305, 0
    %v2310 = vsel %vm185, %v2300, 0
    %2312 = vmatpush.msra.mxu0 0.0
    %2313 = vmatpush.msra.mxu0 0.0
    %2314 = vmatpush.msra.mxu0 0.0
    %2315 = vmatpush.msra.mxu0 0.0
    %2316 = vmatpush.msra.mxu0 0.0
    %2317 = vmatpush.msra.mxu0 0.0
    %2318 = vmatpush.msra.mxu0 0.0
    %2319 = vmatpush.msra.mxu0 0.0
    %2320 = vmatpush.msra.mxu0 0.0
    %2321 = vmatpush.msra.mxu0 0.0
    %2322 = vmatpush.msra.mxu0 0.0
    %2323 = vmatpush.msra.mxu0 0.0
    %2324 = vmatpush.msra.mxu0 %v2304
    %2325 = vmatpush.msra.mxu0 %v2303
    %2326 = vmatpush.msra.mxu0 %v2302
    %2327 = vmatpush.msra.mxu0 %v2301
    %2328 = vmatmul.f32.gmra.mxu0 %v2310
    %v2329 = vpop.f32.mrf.mxu0
    %v2330 = vadd.f32 %v2307, %v2329
    %2331 = vdwg.mxu0
    %v2332 = vld [vmem:[%s53] sm:$0xff]
    %v2333 = vld [vmem:[%s53 + $0x8] sm:$0xff]
    %v2334 = vld [vmem:[%s53 + $0x10] sm:$0xff]
    %v2335 = vld [vmem:[%s53 + $0x18] sm:$0xff]
    %v2336 = vtanh.pop %v2332
    %v2337 = vtanh.pop %v2333
    %v2338 = vtanh.pop %v2334
    %v2339 = vtanh.pop %v2335
    %v2340 = vld [vmem:[%s55] sm:$0xff]
    %v2341 = vld [vmem:[%s55 + $0x8] sm:$0xff]
    %v2342 = vld [vmem:[%s55 + $0x10] sm:$0xff]
    %v2343 = vld [vmem:[%s55 + $0x18] sm:$0xff]
    %v2344 = vld [vmem:[%s55 + $0x20] sm:$0xff]
    %v2345 = vld [vmem:[%s55 + $0x28] sm:$0xff]
    %v2346 = vld [vmem:[%s55 + $0x30] sm:$0xff]
    %v2347 = vld [vmem:[%s55 + $0x38] sm:$0xff]
    %v2348 = vld [vmem:[%s55 + $0x40] sm:$0xff]
    %v2349 = vld [vmem:[%s55 + $0x48] sm:$0xff]
    %v2350 = vld [vmem:[%s55 + $0x50] sm:$0xff]
    %v2351 = vld [vmem:[%s55 + $0x58] sm:$0xff]
    %v2352 = vld [vmem:[%s55 + $0x60] sm:$0xff]
    %v2353 = vld [vmem:[%s55 + $0x68] sm:$0xff]
    %v2354 = vld [vmem:[%s55 + $0x70] sm:$0xff]
    %v2355 = vld [vmem:[%s55 + $0x78] sm:$0xff]
    %v2356 = vld [vmem:[%s55 + $0x80] sm:$0xff]
    %v2357 = vld [vmem:[%s55 + $0x88] sm:$0xff]
    %v2358 = vld [vmem:[%s55 + $0x90] sm:$0xff]
    %v2359 = vld [vmem:[%s55 + $0x98] sm:$0xff]
    %v2360 = vld [vmem:[%s55 + $0xa0] sm:$0xff]
    %v2361 = vld [vmem:[%s55 + $0xa8] sm:$0xff]
    %v2362 = vld [vmem:[%s55 + $0xb0] sm:$0xff]
    %v2363 = vld [vmem:[%s55 + $0xb8] sm:$0xff]
    %v2364 = vld [vmem:[%s55 + $0xc0] sm:$0xff]
    %v2365 = vld [vmem:[%s55 + $0xc8] sm:$0xff]
    %v2366 = vld [vmem:[%s55 + $0xd0] sm:$0xff]
    %v2367 = vld [vmem:[%s55 + $0xd8] sm:$0xff]
    %v2368 = vld [vmem:[%s55 + $0xe0] sm:$0xff]
    %v2369 = vld [vmem:[%s55 + $0xe8] sm:$0xff]
    %v2370 = vld [vmem:[%s55 + $0xf0] sm:$0xff]
    %v2371 = vld [vmem:[%s55 + $0xf8] sm:$0xff]
    %v2372 = vld [vmem:[%s55 + $0x100] sm:$0xff]
    %v2373 = vld [vmem:[%s55 + $0x108] sm:$0xff]
    %v2374 = vld [vmem:[%s55 + $0x110] sm:$0xff]
    %v2375 = vld [vmem:[%s55 + $0x118] sm:$0xff]
    %v2376 = vld [vmem:[%s55 + $0x120] sm:$0xff]
    %v2377 = vld [vmem:[%s55 + $0x128] sm:$0xff]
    %v2378 = vld [vmem:[%s55 + $0x130] sm:$0xff]
    %v2379 = vld [vmem:[%s55 + $0x138] sm:$0xff]
    %v2380 = vld [vmem:[%s55 + $0x140] sm:$0xff]
    %v2381 = vld [vmem:[%s55 + $0x148] sm:$0xff]
    %v2382 = vld [vmem:[%s55 + $0x150] sm:$0xff]
    %v2383 = vld [vmem:[%s55 + $0x158] sm:$0xff]
    %v2384 = vld [vmem:[%s55 + $0x160] sm:$0xff]
    %v2385 = vld [vmem:[%s55 + $0x168] sm:$0xff]
    %v2386 = vld [vmem:[%s55 + $0x170] sm:$0xff]
    %v2387 = vld [vmem:[%s55 + $0x178] sm:$0xff]
    %v2388 = vld [vmem:[%s55 + $0x180] sm:$0xff]
    %v2389 = vld [vmem:[%s55 + $0x188] sm:$0xff]
    %v2390 = vld [vmem:[%s55 + $0x190] sm:$0xff]
    %v2391 = vld [vmem:[%s55 + $0x198] sm:$0xff]
    %v2392 = vld [vmem:[%s55 + $0x1a0] sm:$0xff]
    %v2393 = vld [vmem:[%s55 + $0x1a8] sm:$0xff]
    %v2394 = vld [vmem:[%s55 + $0x1b0] sm:$0xff]
    %v2395 = vld [vmem:[%s55 + $0x1b8] sm:$0xff]
    %v2396 = vld [vmem:[%s55 + $0x1c0] sm:$0xff]
    %v2397 = vld [vmem:[%s55 + $0x1c8] sm:$0xff]
    %v2398 = vld [vmem:[%s55 + $0x1d0] sm:$0xff]
    %v2399 = vld [vmem:[%s55 + $0x1d8] sm:$0xff]
    %v2400 = vld [vmem:[%s55 + $0x1e0] sm:$0xff]
    %v2401 = vld [vmem:[%s55 + $0x1e8] sm:$0xff]
    %v2402 = vld [vmem:[%s55 + $0x1f0] sm:$0xff]
    %v2403 = vld [vmem:[%s55 + $0x1f8] sm:$0xff]
    %v2404 = vld [vmem:[%s55 + $0x200] sm:$0xff]
    %v2405 = vld [vmem:[%s55 + $0x208] sm:$0xff]
    %v2406 = vld [vmem:[%s55 + $0x210] sm:$0xff]
    %v2407 = vld [vmem:[%s55 + $0x218] sm:$0xff]
    %v2408 = vld [vmem:[%s55 + $0x220] sm:$0xff]
    %v2409 = vld [vmem:[%s55 + $0x228] sm:$0xff]
    %v2410 = vld [vmem:[%s55 + $0x230] sm:$0xff]
    %v2411 = vld [vmem:[%s55 + $0x238] sm:$0xff]
    %v2412 = vld [vmem:[%s55 + $0x240] sm:$0xff]
    %v2413 = vld [vmem:[%s55 + $0x248] sm:$0xff]
    %v2414 = vld [vmem:[%s55 + $0x250] sm:$0xff]
    %v2415 = vld [vmem:[%s55 + $0x258] sm:$0xff]
    %v2416 = vld [vmem:[%s55 + $0x260] sm:$0xff]
    %v2417 = vld [vmem:[%s55 + $0x268] sm:$0xff]
    %v2418 = vld [vmem:[%s55 + $0x270] sm:$0xff]
    %v2419 = vld [vmem:[%s55 + $0x278] sm:$0xff]
    %v2420 = vld [vmem:[%s55 + $0x280] sm:$0xff]
    %v2421 = vld [vmem:[%s55 + $0x288] sm:$0xff]
    %v2422 = vld [vmem:[%s55 + $0x290] sm:$0xff]
    %v2423 = vld [vmem:[%s55 + $0x298] sm:$0xff]
    %v2424 = vld [vmem:[%s55 + $0x2a0] sm:$0xff]
    %v2425 = vld [vmem:[%s55 + $0x2a8] sm:$0xff]
    %v2426 = vld [vmem:[%s55 + $0x2b0] sm:$0xff]
    %v2427 = vld [vmem:[%s55 + $0x2b8] sm:$0xff]
    %v2428 = vld [vmem:[%s55 + $0x2c0] sm:$0xff]
    %v2429 = vld [vmem:[%s55 + $0x2c8] sm:$0xff]
    %v2430 = vld [vmem:[%s55 + $0x2d0] sm:$0xff]
    %v2431 = vld [vmem:[%s55 + $0x2d8] sm:$0xff]
    %v2432 = vld [vmem:[%s55 + $0x2e0] sm:$0xff]
    %v2433 = vld [vmem:[%s55 + $0x2e8] sm:$0xff]
    %v2434 = vld [vmem:[%s55 + $0x2f0] sm:$0xff]
    %v2435 = vld [vmem:[%s55 + $0x2f8] sm:$0xff]
    %v2436 = vld [vmem:[%s55 + $0x300] sm:$0xff]
    %v2437 = vld [vmem:[%s55 + $0x308] sm:$0xff]
    %v2438 = vld [vmem:[%s55 + $0x310] sm:$0xff]
    %v2439 = vld [vmem:[%s55 + $0x318] sm:$0xff]
    %v2440 = vld [vmem:[%s55 + $0x320] sm:$0xff]
    %v2441 = vld [vmem:[%s55 + $0x328] sm:$0xff]
    %v2442 = vld [vmem:[%s55 + $0x330] sm:$0xff]
    %v2443 = vld [vmem:[%s55 + $0x338] sm:$0xff]
    %v2444 = vld [vmem:[%s55 + $0x340] sm:$0xff]
    %v2445 = vld [vmem:[%s55 + $0x348] sm:$0xff]
    %v2446 = vld [vmem:[%s55 + $0x350] sm:$0xff]
    %v2447 = vld [vmem:[%s55 + $0x358] sm:$0xff]
    %v2448 = vld [vmem:[%s55 + $0x360] sm:$0xff]
    %v2449 = vld [vmem:[%s55 + $0x368] sm:$0xff]
    %v2450 = vld [vmem:[%s55 + $0x370] sm:$0xff]
    %v2451 = vld [vmem:[%s55 + $0x378] sm:$0xff]
    %v2452 = vld [vmem:[%s55 + $0x380] sm:$0xff]
    %v2453 = vld [vmem:[%s55 + $0x388] sm:$0xff]
    %v2454 = vld [vmem:[%s55 + $0x390] sm:$0xff]
    %v2455 = vld [vmem:[%s55 + $0x398] sm:$0xff]
    %v2456 = vld [vmem:[%s55 + $0x3a0] sm:$0xff]
    %v2457 = vld [vmem:[%s55 + $0x3a8] sm:$0xff]
    %v2458 = vld [vmem:[%s55 + $0x3b0] sm:$0xff]
    %v2459 = vld [vmem:[%s55 + $0x3b8] sm:$0xff]
    %v2460 = vld [vmem:[%s55 + $0x3c0] sm:$0xff]
    %v2461 = vld [vmem:[%s55 + $0x3c8] sm:$0xff]
    %v2462 = vld [vmem:[%s55 + $0x3d0] sm:$0xff]
    %v2463 = vld [vmem:[%s55 + $0x3d8] sm:$0xff]
    %v2464 = vld [vmem:[%s55 + $0x3e0] sm:$0xff]
    %v2465 = vld [vmem:[%s55 + $0x3e8] sm:$0xff]
    %v2466 = vld [vmem:[%s55 + $0x3f0] sm:$0xff]
    %v2467 = vld [vmem:[%s55 + $0x3f8] sm:$0xff]
    %v2468 = vld [vmem:[%s55 + $0x400] sm:$0xff]
    %v2469 = vld [vmem:[%s55 + $0x408] sm:$0xff]
    %v2470 = vld [vmem:[%s55 + $0x410] sm:$0xff]
    %v2471 = vld [vmem:[%s55 + $0x418] sm:$0xff]
    %v2472 = vld [vmem:[%s55 + $0x420] sm:$0xff]
    %v2473 = vld [vmem:[%s55 + $0x428] sm:$0xff]
    %v2474 = vld [vmem:[%s55 + $0x430] sm:$0xff]
    %v2475 = vld [vmem:[%s55 + $0x438] sm:$0xff]
    %v2476 = vld [vmem:[%s55 + $0x440] sm:$0xff]
    %v2477 = vld [vmem:[%s55 + $0x448] sm:$0xff]
    %v2478 = vld [vmem:[%s55 + $0x450] sm:$0xff]
    %v2479 = vld [vmem:[%s55 + $0x458] sm:$0xff]
    %v2480 = vld [vmem:[%s55 + $0x460] sm:$0xff]
    %v2481 = vld [vmem:[%s55 + $0x468] sm:$0xff]
    %v2482 = vld [vmem:[%s55 + $0x470] sm:$0xff]
    %v2483 = vld [vmem:[%s55 + $0x478] sm:$0xff]
    %v2484 = vld [vmem:[%s55 + $0x480] sm:$0xff]
    %v2485 = vld [vmem:[%s55 + $0x488] sm:$0xff]
    %v2486 = vld [vmem:[%s55 + $0x490] sm:$0xff]
    %v2487 = vld [vmem:[%s55 + $0x498] sm:$0xff]
    %v2488 = vld [vmem:[%s55 + $0x4a0] sm:$0xff]
    %v2489 = vld [vmem:[%s55 + $0x4a8] sm:$0xff]
    %v2490 = vld [vmem:[%s55 + $0x4b0] sm:$0xff]
    %v2491 = vld [vmem:[%s55 + $0x4b8] sm:$0xff]
    %v2492 = vld [vmem:[%s55 + $0x4c0] sm:$0xff]
    %v2493 = vld [vmem:[%s55 + $0x4c8] sm:$0xff]
    %v2494 = vld [vmem:[%s55 + $0x4d0] sm:$0xff]
    %v2495 = vld [vmem:[%s55 + $0x4d8] sm:$0xff]
    %v2496 = vld [vmem:[%s55 + $0x4e0] sm:$0xff]
    %v2497 = vld [vmem:[%s55 + $0x4e8] sm:$0xff]
    %v2498 = vld [vmem:[%s55 + $0x4f0] sm:$0xff]
    %v2499 = vld [vmem:[%s55 + $0x4f8] sm:$0xff]
    %v2500 = vld [vmem:[%s55 + $0x500] sm:$0xff]
    %v2501 = vld [vmem:[%s55 + $0x508] sm:$0xff]
    %v2502 = vld [vmem:[%s55 + $0x510] sm:$0xff]
    %v2503 = vld [vmem:[%s55 + $0x518] sm:$0xff]
    %v2504 = vld [vmem:[%s55 + $0x520] sm:$0xff]
    %v2505 = vld [vmem:[%s55 + $0x528] sm:$0xff]
    %v2506 = vld [vmem:[%s55 + $0x530] sm:$0xff]
    %v2507 = vld [vmem:[%s55 + $0x538] sm:$0xff]
    %v2508 = vld [vmem:[%s55 + $0x540] sm:$0xff]
    %v2509 = vld [vmem:[%s55 + $0x548] sm:$0xff]
    %v2510 = vld [vmem:[%s55 + $0x550] sm:$0xff]
    %v2511 = vld [vmem:[%s55 + $0x558] sm:$0xff]
    %v2512 = vld [vmem:[%s55 + $0x560] sm:$0xff]
    %v2513 = vld [vmem:[%s55 + $0x568] sm:$0xff]
    %v2514 = vld [vmem:[%s55 + $0x570] sm:$0xff]
    %v2515 = vld [vmem:[%s55 + $0x578] sm:$0xff]
    %v2516 = vld [vmem:[%s55 + $0x580] sm:$0xff]
    %v2517 = vld [vmem:[%s55 + $0x588] sm:$0xff]
    %v2518 = vld [vmem:[%s55 + $0x590] sm:$0xff]
    %v2519 = vld [vmem:[%s55 + $0x598] sm:$0xff]
    %v2520 = vld [vmem:[%s55 + $0x5a0] sm:$0xff]
    %v2521 = vld [vmem:[%s55 + $0x5a8] sm:$0xff]
    %v2522 = vld [vmem:[%s55 + $0x5b0] sm:$0xff]
    %v2523 = vld [vmem:[%s55 + $0x5b8] sm:$0xff]
    %v2524 = vld [vmem:[%s55 + $0x5c0] sm:$0xff]
    %v2525 = vld [vmem:[%s55 + $0x5c8] sm:$0xff]
    %v2526 = vld [vmem:[%s55 + $0x5d0] sm:$0xff]
    %v2527 = vld [vmem:[%s55 + $0x5d8] sm:$0xff]
    %v2528 = vld [vmem:[%s55 + $0x5e0] sm:$0xff]
    %v2529 = vld [vmem:[%s55 + $0x5e8] sm:$0xff]
    %v2530 = vld [vmem:[%s55 + $0x5f0] sm:$0xff]
    %v2531 = vld [vmem:[%s55 + $0x5f8] sm:$0xff]
    %v2532 = vld [vmem:[%s55 + $0x600] sm:$0xff]
    %v2533 = vld [vmem:[%s55 + $0x608] sm:$0xff]
    %v2534 = vld [vmem:[%s55 + $0x610] sm:$0xff]
    %v2535 = vld [vmem:[%s55 + $0x618] sm:$0xff]
    %v2536 = vld [vmem:[%s55 + $0x620] sm:$0xff]
    %v2537 = vld [vmem:[%s55 + $0x628] sm:$0xff]
    %v2538 = vld [vmem:[%s55 + $0x630] sm:$0xff]
    %v2539 = vld [vmem:[%s55 + $0x638] sm:$0xff]
    %v2540 = vld [vmem:[%s55 + $0x640] sm:$0xff]
    %v2541 = vld [vmem:[%s55 + $0x648] sm:$0xff]
    %v2542 = vld [vmem:[%s55 + $0x650] sm:$0xff]
    %v2543 = vld [vmem:[%s55 + $0x658] sm:$0xff]
    %v2544 = vld [vmem:[%s55 + $0x660] sm:$0xff]
    %v2545 = vld [vmem:[%s55 + $0x668] sm:$0xff]
    %v2546 = vld [vmem:[%s55 + $0x670] sm:$0xff]
    %v2547 = vld [vmem:[%s55 + $0x678] sm:$0xff]
    %v2548 = vld [vmem:[%s55 + $0x680] sm:$0xff]
    %v2549 = vld [vmem:[%s55 + $0x688] sm:$0xff]
    %v2550 = vld [vmem:[%s55 + $0x690] sm:$0xff]
    %v2551 = vld [vmem:[%s55 + $0x698] sm:$0xff]
    %v2552 = vld [vmem:[%s55 + $0x6a0] sm:$0xff]
    %v2553 = vld [vmem:[%s55 + $0x6a8] sm:$0xff]
    %v2554 = vld [vmem:[%s55 + $0x6b0] sm:$0xff]
    %v2555 = vld [vmem:[%s55 + $0x6b8] sm:$0xff]
    %v2556 = vld [vmem:[%s55 + $0x6c0] sm:$0xff]
    %v2557 = vld [vmem:[%s55 + $0x6c8] sm:$0xff]
    %v2558 = vld [vmem:[%s55 + $0x6d0] sm:$0xff]
    %v2559 = vld [vmem:[%s55 + $0x6d8] sm:$0xff]
    %v2560 = vld [vmem:[%s55 + $0x6e0] sm:$0xff]
    %v2561 = vld [vmem:[%s55 + $0x6e8] sm:$0xff]
    %v2562 = vld [vmem:[%s55 + $0x6f0] sm:$0xff]
    %v2563 = vld [vmem:[%s55 + $0x6f8] sm:$0xff]
    %v2564 = vld [vmem:[%s55 + $0x700] sm:$0xff]
    %v2565 = vld [vmem:[%s55 + $0x708] sm:$0xff]
    %v2566 = vld [vmem:[%s55 + $0x710] sm:$0xff]
    %v2567 = vld [vmem:[%s55 + $0x718] sm:$0xff]
    %v2568 = vld [vmem:[%s55 + $0x720] sm:$0xff]
    %v2569 = vld [vmem:[%s55 + $0x728] sm:$0xff]
    %v2570 = vld [vmem:[%s55 + $0x730] sm:$0xff]
    %v2571 = vld [vmem:[%s55 + $0x738] sm:$0xff]
    %v2572 = vld [vmem:[%s55 + $0x740] sm:$0xff]
    %v2573 = vld [vmem:[%s55 + $0x748] sm:$0xff]
    %v2574 = vld [vmem:[%s55 + $0x750] sm:$0xff]
    %v2575 = vld [vmem:[%s55 + $0x758] sm:$0xff]
    %v2576 = vld [vmem:[%s55 + $0x760] sm:$0xff]
    %v2577 = vld [vmem:[%s55 + $0x768] sm:$0xff]
    %v2578 = vld [vmem:[%s55 + $0x770] sm:$0xff]
    %v2579 = vld [vmem:[%s55 + $0x778] sm:$0xff]
    %v2580 = vld [vmem:[%s55 + $0x780] sm:$0xff]
    %v2581 = vld [vmem:[%s55 + $0x788] sm:$0xff]
    %v2582 = vld [vmem:[%s55 + $0x790] sm:$0xff]
    %v2583 = vld [vmem:[%s55 + $0x798] sm:$0xff]
    %v2584 = vld [vmem:[%s55 + $0x7a0] sm:$0xff]
    %v2585 = vld [vmem:[%s55 + $0x7a8] sm:$0xff]
    %v2586 = vld [vmem:[%s55 + $0x7b0] sm:$0xff]
    %v2587 = vld [vmem:[%s55 + $0x7b8] sm:$0xff]
    %v2588 = vld [vmem:[%s55 + $0x7c0] sm:$0xff]
    %v2589 = vld [vmem:[%s55 + $0x7c8] sm:$0xff]
    %v2590 = vld [vmem:[%s55 + $0x7d0] sm:$0xff]
    %v2591 = vld [vmem:[%s55 + $0x7d8] sm:$0xff]
    %v2592 = vld [vmem:[%s55 + $0x7e0] sm:$0xff]
    %v2593 = vld [vmem:[%s55 + $0x7e8] sm:$0xff]
    %v2594 = vld [vmem:[%s55 + $0x7f0] sm:$0xff]
    %v2595 = vld [vmem:[%s55 + $0x7f8] sm:$0xff]
    %v2596 = vld [vmem:[%s57] sm:$0x1]
    %v2598 = vperm.slane %v2596, 0
    %2604 = vst [vmem:[#allocation1] ss:$4 sm:$0xff] %v2336
    %s2605 = scalar_lea.vmem [#allocation1], 32
    %2606 = vst [vmem:[%s2605] ss:$4 sm:$0xff] %v2337
    %v2607 = vld.sshfl [vmem:[#allocation1] sm:$0xff pattern:$0x73625140]
    %v2608 = vld.sshfl [vmem:[#allocation1 + $0x8] sm:$0xff pattern:$0x73625140]
    %v2609 = vld.sshfl [vmem:[#allocation1 + $0x10] sm:$0xff pattern:$0x73625140]
    %v2610 = vld.sshfl [vmem:[#allocation1 + $0x18] sm:$0xff pattern:$0x73625140]
    %v2611 = vld.sshfl [vmem:[#allocation1 + $0x20] sm:$0xff pattern:$0x73625140]
    %v2612 = vld.sshfl [vmem:[#allocation1 + $0x28] sm:$0xff pattern:$0x73625140]
    %v2613 = vld.sshfl [vmem:[#allocation1 + $0x30] sm:$0xff pattern:$0x73625140]
    %v2614 = vld.sshfl [vmem:[#allocation1 + $0x38] sm:$0xff pattern:$0x73625140]
    %2615 = vst [vmem:[#allocation1] ss:$4 sm:$0xff] %v2338
    %2616 = vst [vmem:[%s2605] ss:$4 sm:$0xff] %v2339
    %v2617 = vld.sshfl [vmem:[#allocation1] sm:$0xff pattern:$0x73625140]
    %v2618 = vld.sshfl [vmem:[#allocation1 + $0x8] sm:$0xff pattern:$0x73625140]
    %v2619 = vld.sshfl [vmem:[#allocation1 + $0x10] sm:$0xff pattern:$0x73625140]
    %v2620 = vld.sshfl [vmem:[#allocation1 + $0x18] sm:$0xff pattern:$0x73625140]
    %v2621 = vld.sshfl [vmem:[#allocation1 + $0x20] sm:$0xff pattern:$0x73625140]
    %v2622 = vld.sshfl [vmem:[#allocation1 + $0x28] sm:$0xff pattern:$0x73625140]
    %v2623 = vld.sshfl [vmem:[#allocation1 + $0x30] sm:$0xff pattern:$0x73625140]
    %v2624 = vld.sshfl [vmem:[#allocation1 + $0x38] sm:$0xff pattern:$0x73625140]
    %2641 = vmatpush.msra.mxu0 %v2355
    %2642 = vmatpush.msra.mxu0 %v2354
    %2643 = vmatpush.msra.mxu0 %v2353
    %2644 = vmatpush.msra.mxu0 %v2352
    %2645 = vmatpush.msra.mxu0 %v2351
    %2646 = vmatpush.msra.mxu0 %v2350
    %2647 = vmatpush.msra.mxu0 %v2349
    %2648 = vmatpush.msra.mxu0 %v2348
    %2649 = vmatpush.msra.mxu0 %v2347
    %2650 = vmatpush.msra.mxu0 %v2346
    %2651 = vmatpush.msra.mxu0 %v2345
    %2652 = vmatpush.msra.mxu0 %v2344
    %2653 = vmatpush.msra.mxu0 %v2343
    %2654 = vmatpush.msra.mxu0 %v2342
    %2655 = vmatpush.msra.mxu0 %v2341
    %2656 = vmatpush.msra.mxu0 %v2340
    %2657 = vmatmul.f32.gmra.mxu0 %v2607
    %v2658 = vpop.f32.mrf.mxu0
    %v2659 = vadd.f32 %v2598, %v2658
    %2660 = vdwg.mxu0
    %2661 = vmatpush.msra.mxu0 %v2371
    %2662 = vmatpush.msra.mxu0 %v2370
    %2663 = vmatpush.msra.mxu0 %v2369
    %2664 = vmatpush.msra.mxu0 %v2368
    %2665 = vmatpush.msra.mxu0 %v2367
    %2666 = vmatpush.msra.mxu0 %v2366
    %2667 = vmatpush.msra.mxu0 %v2365
    %2668 = vmatpush.msra.mxu0 %v2364
    %2669 = vmatpush.msra.mxu0 %v2363
    %2670 = vmatpush.msra.mxu0 %v2362
    %2671 = vmatpush.msra.mxu0 %v2361
    %2672 = vmatpush.msra.mxu0 %v2360
    %2673 = vmatpush.msra.mxu0 %v2359
    %2674 = vmatpush.msra.mxu0 %v2358
    %2675 = vmatpush.msra.mxu0 %v2357
    %2676 = vmatpush.msra.mxu0 %v2356
    %2677 = vmatmul.f32.gmra.mxu0 %v2608
    %v2678 = vpop.f32.mrf.mxu0
    %v2679 = vadd.f32 %v2659, %v2678
    %2680 = vdwg.mxu0
    %2681 = vmatpush.msra.mxu0 %v2387
    %2682 = vmatpush.msra.mxu0 %v2386
    %2683 = vmatpush.msra.mxu0 %v2385
    %2684 = vmatpush.msra.mxu0 %v2384
    %2685 = vmatpush.msra.mxu0 %v2383
    %2686 = vmatpush.msra.mxu0 %v2382
    %2687 = vmatpush.msra.mxu0 %v2381
    %2688 = vmatpush.msra.mxu0 %v2380
    %2689 = vmatpush.msra.mxu0 %v2379
    %2690 = vmatpush.msra.mxu0 %v2378
    %2691 = vmatpush.msra.mxu0 %v2377
    %2692 = vmatpush.msra.mxu0 %v2376
    %2693 = vmatpush.msra.mxu0 %v2375
    %2694 = vmatpush.msra.mxu0 %v2374
    %2695 = vmatpush.msra.mxu0 %v2373
    %2696 = vmatpush.msra.mxu0 %v2372
    %2697 = vmatmul.f32.gmra.mxu0 %v2609
    %v2698 = vpop.f32.mrf.mxu0
    %v2699 = vadd.f32 %v2679, %v2698
    %2700 = vdwg.mxu0
    %2701 = vmatpush.msra.mxu0 %v2403
    %2702 = vmatpush.msra.mxu0 %v2402
    %2703 = vmatpush.msra.mxu0 %v2401
    %2704 = vmatpush.msra.mxu0 %v2400
    %2705 = vmatpush.msra.mxu0 %v2399
    %2706 = vmatpush.msra.mxu0 %v2398
    %2707 = vmatpush.msra.mxu0 %v2397
    %2708 = vmatpush.msra.mxu0 %v2396
    %2709 = vmatpush.msra.mxu0 %v2395
    %2710 = vmatpush.msra.mxu0 %v2394
    %2711 = vmatpush.msra.mxu0 %v2393
    %2712 = vmatpush.msra.mxu0 %v2392
    %2713 = vmatpush.msra.mxu0 %v2391
    %2714 = vmatpush.msra.mxu0 %v2390
    %2715 = vmatpush.msra.mxu0 %v2389
    %2716 = vmatpush.msra.mxu0 %v2388
    %2717 = vmatmul.f32.gmra.mxu0 %v2610
    %v2718 = vpop.f32.mrf.mxu0
    %v2719 = vadd.f32 %v2699, %v2718
    %2720 = vdwg.mxu0
    %2721 = vmatpush.msra.mxu0 %v2419
    %2722 = vmatpush.msra.mxu0 %v2418
    %2723 = vmatpush.msra.mxu0 %v2417
    %2724 = vmatpush.msra.mxu0 %v2416
    %2725 = vmatpush.msra.mxu0 %v2415
    %2726 = vmatpush.msra.mxu0 %v2414
    %2727 = vmatpush.msra.mxu0 %v2413
    %2728 = vmatpush.msra.mxu0 %v2412
    %2729 = vmatpush.msra.mxu0 %v2411
    %2730 = vmatpush.msra.mxu0 %v2410
    %2731 = vmatpush.msra.mxu0 %v2409
    %2732 = vmatpush.msra.mxu0 %v2408
    %2733 = vmatpush.msra.mxu0 %v2407
    %2734 = vmatpush.msra.mxu0 %v2406
    %2735 = vmatpush.msra.mxu0 %v2405
    %2736 = vmatpush.msra.mxu0 %v2404
    %2737 = vmatmul.f32.gmra.mxu0 %v2611
    %v2738 = vpop.f32.mrf.mxu0
    %v2739 = vadd.f32 %v2719, %v2738
    %2740 = vdwg.mxu0
    %2741 = vmatpush.msra.mxu0 %v2435
    %2742 = vmatpush.msra.mxu0 %v2434
    %2743 = vmatpush.msra.mxu0 %v2433
    %2744 = vmatpush.msra.mxu0 %v2432
    %2745 = vmatpush.msra.mxu0 %v2431
    %2746 = vmatpush.msra.mxu0 %v2430
    %2747 = vmatpush.msra.mxu0 %v2429
    %2748 = vmatpush.msra.mxu0 %v2428
    %2749 = vmatpush.msra.mxu0 %v2427
    %2750 = vmatpush.msra.mxu0 %v2426
    %2751 = vmatpush.msra.mxu0 %v2425
    %2752 = vmatpush.msra.mxu0 %v2424
    %2753 = vmatpush.msra.mxu0 %v2423
    %2754 = vmatpush.msra.mxu0 %v2422
    %2755 = vmatpush.msra.mxu0 %v2421
    %2756 = vmatpush.msra.mxu0 %v2420
    %2757 = vmatmul.f32.gmra.mxu0 %v2612
    %v2758 = vpop.f32.mrf.mxu0
    %v2759 = vadd.f32 %v2739, %v2758
    %2760 = vdwg.mxu0
    %2761 = vmatpush.msra.mxu0 %v2451
    %2762 = vmatpush.msra.mxu0 %v2450
    %2763 = vmatpush.msra.mxu0 %v2449
    %2764 = vmatpush.msra.mxu0 %v2448
    %2765 = vmatpush.msra.mxu0 %v2447
    %2766 = vmatpush.msra.mxu0 %v2446
    %2767 = vmatpush.msra.mxu0 %v2445
    %2768 = vmatpush.msra.mxu0 %v2444
    %2769 = vmatpush.msra.mxu0 %v2443
    %2770 = vmatpush.msra.mxu0 %v2442
    %2771 = vmatpush.msra.mxu0 %v2441
    %2772 = vmatpush.msra.mxu0 %v2440
    %2773 = vmatpush.msra.mxu0 %v2439
    %2774 = vmatpush.msra.mxu0 %v2438
    %2775 = vmatpush.msra.mxu0 %v2437
    %2776 = vmatpush.msra.mxu0 %v2436
    %2777 = vmatmul.f32.gmra.mxu0 %v2613
    %v2778 = vpop.f32.mrf.mxu0
    %v2779 = vadd.f32 %v2759, %v2778
    %2780 = vdwg.mxu0
    %2781 = vmatpush.msra.mxu0 %v2467
    %2782 = vmatpush.msra.mxu0 %v2466
    %2783 = vmatpush.msra.mxu0 %v2465
    %2784 = vmatpush.msra.mxu0 %v2464
    %2785 = vmatpush.msra.mxu0 %v2463
    %2786 = vmatpush.msra.mxu0 %v2462
    %2787 = vmatpush.msra.mxu0 %v2461
    %2788 = vmatpush.msra.mxu0 %v2460
    %2789 = vmatpush.msra.mxu0 %v2459
    %2790 = vmatpush.msra.mxu0 %v2458
    %2791 = vmatpush.msra.mxu0 %v2457
    %2792 = vmatpush.msra.mxu0 %v2456
    %2793 = vmatpush.msra.mxu0 %v2455
    %2794 = vmatpush.msra.mxu0 %v2454
    %2795 = vmatpush.msra.mxu0 %v2453
    %2796 = vmatpush.msra.mxu0 %v2452
    %2797 = vmatmul.f32.gmra.mxu0 %v2614
    %v2798 = vpop.f32.mrf.mxu0
    %v2799 = vadd.f32 %v2779, %v2798
    %2800 = vdwg.mxu0
    %2801 = vmatpush.msra.mxu0 %v2483
    %2802 = vmatpush.msra.mxu0 %v2482
    %2803 = vmatpush.msra.mxu0 %v2481
    %2804 = vmatpush.msra.mxu0 %v2480
    %2805 = vmatpush.msra.mxu0 %v2479
    %2806 = vmatpush.msra.mxu0 %v2478
    %2807 = vmatpush.msra.mxu0 %v2477
    %2808 = vmatpush.msra.mxu0 %v2476
    %2809 = vmatpush.msra.mxu0 %v2475
    %2810 = vmatpush.msra.mxu0 %v2474
    %2811 = vmatpush.msra.mxu0 %v2473
    %2812 = vmatpush.msra.mxu0 %v2472
    %2813 = vmatpush.msra.mxu0 %v2471
    %2814 = vmatpush.msra.mxu0 %v2470
    %2815 = vmatpush.msra.mxu0 %v2469
    %2816 = vmatpush.msra.mxu0 %v2468
    %2817 = vmatmul.f32.gmra.mxu0 %v2617
    %v2818 = vpop.f32.mrf.mxu0
    %v2819 = vadd.f32 %v2799, %v2818
    %2820 = vdwg.mxu0
    %2821 = vmatpush.msra.mxu0 %v2499
    %2822 = vmatpush.msra.mxu0 %v2498
    %2823 = vmatpush.msra.mxu0 %v2497
    %2824 = vmatpush.msra.mxu0 %v2496
    %2825 = vmatpush.msra.mxu0 %v2495
    %2826 = vmatpush.msra.mxu0 %v2494
    %2827 = vmatpush.msra.mxu0 %v2493
    %2828 = vmatpush.msra.mxu0 %v2492
    %2829 = vmatpush.msra.mxu0 %v2491
    %2830 = vmatpush.msra.mxu0 %v2490
    %2831 = vmatpush.msra.mxu0 %v2489
    %2832 = vmatpush.msra.mxu0 %v2488
    %2833 = vmatpush.msra.mxu0 %v2487
    %2834 = vmatpush.msra.mxu0 %v2486
    %2835 = vmatpush.msra.mxu0 %v2485
    %2836 = vmatpush.msra.mxu0 %v2484
    %2837 = vmatmul.f32.gmra.mxu0 %v2618
    %v2838 = vpop.f32.mrf.mxu0
    %v2839 = vadd.f32 %v2819, %v2838
    %2840 = vdwg.mxu0
    %2841 = vmatpush.msra.mxu0 %v2515
    %2842 = vmatpush.msra.mxu0 %v2514
    %2843 = vmatpush.msra.mxu0 %v2513
    %2844 = vmatpush.msra.mxu0 %v2512
    %2845 = vmatpush.msra.mxu0 %v2511
    %2846 = vmatpush.msra.mxu0 %v2510
    %2847 = vmatpush.msra.mxu0 %v2509
    %2848 = vmatpush.msra.mxu0 %v2508
    %2849 = vmatpush.msra.mxu0 %v2507
    %2850 = vmatpush.msra.mxu0 %v2506
    %2851 = vmatpush.msra.mxu0 %v2505
    %2852 = vmatpush.msra.mxu0 %v2504
    %2853 = vmatpush.msra.mxu0 %v2503
    %2854 = vmatpush.msra.mxu0 %v2502
    %2855 = vmatpush.msra.mxu0 %v2501
    %2856 = vmatpush.msra.mxu0 %v2500
    %2857 = vmatmul.f32.gmra.mxu0 %v2619
    %v2858 = vpop.f32.mrf.mxu0
    %v2859 = vadd.f32 %v2839, %v2858
    %2860 = vdwg.mxu0
    %2861 = vmatpush.msra.mxu0 %v2531
    %2862 = vmatpush.msra.mxu0 %v2530
    %2863 = vmatpush.msra.mxu0 %v2529
    %2864 = vmatpush.msra.mxu0 %v2528
    %2865 = vmatpush.msra.mxu0 %v2527
    %2866 = vmatpush.msra.mxu0 %v2526
    %2867 = vmatpush.msra.mxu0 %v2525
    %2868 = vmatpush.msra.mxu0 %v2524
    %2869 = vmatpush.msra.mxu0 %v2523
    %2870 = vmatpush.msra.mxu0 %v2522
    %2871 = vmatpush.msra.mxu0 %v2521
    %2872 = vmatpush.msra.mxu0 %v2520
    %2873 = vmatpush.msra.mxu0 %v2519
    %2874 = vmatpush.msra.mxu0 %v2518
    %2875 = vmatpush.msra.mxu0 %v2517
    %2876 = vmatpush.msra.mxu0 %v2516
    %2877 = vmatmul.f32.gmra.mxu0 %v2620
    %v2878 = vpop.f32.mrf.mxu0
    %v2879 = vadd.f32 %v2859, %v2878
    %2880 = vdwg.mxu0
    %2881 = vmatpush.msra.mxu0 %v2547
    %2882 = vmatpush.msra.mxu0 %v2546
    %2883 = vmatpush.msra.mxu0 %v2545
    %2884 = vmatpush.msra.mxu0 %v2544
    %2885 = vmatpush.msra.mxu0 %v2543
    %2886 = vmatpush.msra.mxu0 %v2542
    %2887 = vmatpush.msra.mxu0 %v2541
    %2888 = vmatpush.msra.mxu0 %v2540
    %2889 = vmatpush.msra.mxu0 %v2539
    %2890 = vmatpush.msra.mxu0 %v2538
    %2891 = vmatpush.msra.mxu0 %v2537
    %2892 = vmatpush.msra.mxu0 %v2536
    %2893 = vmatpush.msra.mxu0 %v2535
    %2894 = vmatpush.msra.mxu0 %v2534
    %2895 = vmatpush.msra.mxu0 %v2533
    %2896 = vmatpush.msra.mxu0 %v2532
    %2897 = vmatmul.f32.gmra.mxu0 %v2621
    %v2898 = vpop.f32.mrf.mxu0
    %v2899 = vadd.f32 %v2879, %v2898
    %2900 = vdwg.mxu0
    %2901 = vmatpush.msra.mxu0 %v2563
    %2902 = vmatpush.msra.mxu0 %v2562
    %2903 = vmatpush.msra.mxu0 %v2561
    %2904 = vmatpush.msra.mxu0 %v2560
    %2905 = vmatpush.msra.mxu0 %v2559
    %2906 = vmatpush.msra.mxu0 %v2558
    %2907 = vmatpush.msra.mxu0 %v2557
    %2908 = vmatpush.msra.mxu0 %v2556
    %2909 = vmatpush.msra.mxu0 %v2555
    %2910 = vmatpush.msra.mxu0 %v2554
    %2911 = vmatpush.msra.mxu0 %v2553
    %2912 = vmatpush.msra.mxu0 %v2552
    %2913 = vmatpush.msra.mxu0 %v2551
    %2914 = vmatpush.msra.mxu0 %v2550
    %2915 = vmatpush.msra.mxu0 %v2549
    %2916 = vmatpush.msra.mxu0 %v2548
    %2917 = vmatmul.f32.gmra.mxu0 %v2622
    %v2918 = vpop.f32.mrf.mxu0
    %v2919 = vadd.f32 %v2899, %v2918
    %2920 = vdwg.mxu0
    %2921 = vmatpush.msra.mxu0 %v2579
    %2922 = vmatpush.msra.mxu0 %v2578
    %2923 = vmatpush.msra.mxu0 %v2577
    %2924 = vmatpush.msra.mxu0 %v2576
    %2925 = vmatpush.msra.mxu0 %v2575
    %2926 = vmatpush.msra.mxu0 %v2574
    %2927 = vmatpush.msra.mxu0 %v2573
    %2928 = vmatpush.msra.mxu0 %v2572
    %2929 = vmatpush.msra.mxu0 %v2571
    %2930 = vmatpush.msra.mxu0 %v2570
    %2931 = vmatpush.msra.mxu0 %v2569
    %2932 = vmatpush.msra.mxu0 %v2568
    %2933 = vmatpush.msra.mxu0 %v2567
    %2934 = vmatpush.msra.mxu0 %v2566
    %2935 = vmatpush.msra.mxu0 %v2565
    %2936 = vmatpush.msra.mxu0 %v2564
    %2937 = vmatmul.f32.gmra.mxu0 %v2623
    %v2938 = vpop.f32.mrf.mxu0
    %v2939 = vadd.f32 %v2919, %v2938
    %2940 = vdwg.mxu0
    %2941 = vmatpush.msra.mxu0 %v2595
    %2942 = vmatpush.msra.mxu0 %v2594
    %2943 = vmatpush.msra.mxu0 %v2593
    %2944 = vmatpush.msra.mxu0 %v2592
    %2945 = vmatpush.msra.mxu0 %v2591
    %2946 = vmatpush.msra.mxu0 %v2590
    %2947 = vmatpush.msra.mxu0 %v2589
    %2948 = vmatpush.msra.mxu0 %v2588
    %2949 = vmatpush.msra.mxu0 %v2587
    %2950 = vmatpush.msra.mxu0 %v2586
    %2951 = vmatpush.msra.mxu0 %v2585
    %2952 = vmatpush.msra.mxu0 %v2584
    %2953 = vmatpush.msra.mxu0 %v2583
    %2954 = vmatpush.msra.mxu0 %v2582
    %2955 = vmatpush.msra.mxu0 %v2581
    %2956 = vmatpush.msra.mxu0 %v2580
    %2957 = vmatmul.f32.gmra.mxu0 %v2624
    %v2958 = vpop.f32.mrf.mxu0
    %v2959 = vadd.f32 %v2939, %v2958
    %2960 = vdwg.mxu0
    %2962 = vrot.lane.b32.xlu0 %v2330, 32
    %v2963 = vpop.permute.xlu0 %2962
    %2966 = vrot.lane.b32.xlu0 %v2959, 64
    %v2967 = vpop.permute.xlu0 %2966
    %v2969 = vsel %vm185, %v1888, %v2963
    %vm2970 = vcmask 523264
    %v2971 = vsel %vm2970, %v2969, %v2967
    %v2972 = vld [vmem:[%s59] sm:$0xff]
    %v2973 = vld [vmem:[%s59 + $0x8] sm:$0xff]
    %v2974 = vld [vmem:[%s59 + $0x10] sm:$0xff]
    %v2975 = vld [vmem:[%s59 + $0x18] sm:$0xff]
    %v2976 = vld [vmem:[%s59 + $0x20] sm:$0xff]
    %v2977 = vld [vmem:[%s59 + $0x28] sm:$0xff]
    %v2978 = vld [vmem:[%s59 + $0x30] sm:$0xff]
    %v2979 = vld [vmem:[%s59 + $0x38] sm:$0xff]
    %v2980 = vld [vmem:[%s59 + $0x40] sm:$0xff]
    %v2981 = vld [vmem:[%s59 + $0x48] sm:$0xff]
    %v2982 = vld [vmem:[%s59 + $0x50] sm:$0xff]
    %v2983 = vld [vmem:[%s59 + $0x58] sm:$0xff]
    %v2984 = vld [vmem:[%s61] sm:$0x1]
    %v2986 = vperm.slane %v2984, 0
    %vm2988 = vcmask 785408
    %v2990 = vsel %vm2988, %v2971, 0
    %2992 = vmatpush.msra.mxu0 0.0
    %2993 = vmatpush.msra.mxu0 0.0
    %2994 = vmatpush.msra.mxu0 0.0
    %2995 = vmatpush.msra.mxu0 0.0
    %2996 = vmatpush.msra.mxu0 %v2983
    %2997 = vmatpush.msra.mxu0 %v2982
    %2998 = vmatpush.msra.mxu0 %v2981
    %2999 = vmatpush.msra.mxu0 %v2980
    %3000 = vmatpush.msra.mxu0 %v2979
    %3001 = vmatpush.msra.mxu0 %v2978
    %3002 = vmatpush.msra.mxu0 %v2977
    %3003 = vmatpush.msra.mxu0 %v2976
    %3004 = vmatpush.msra.mxu0 %v2975
    %3005 = vmatpush.msra.mxu0 %v2974
    %3006 = vmatpush.msra.mxu0 %v2973
    %3007 = vmatpush.msra.mxu0 %v2972
    %3008 = vmatmul.f32.gmra.mxu0 %v2990
    %v3009 = vpop.f32.mrf.mxu0
    %v3010 = vadd.f32 %v2986, %v3009
    %3011 = vdwg.mxu0
    %vm3012 = vcmask 17408
    %3013 = vst.msk [vmem:[#allocation4] sm:$0x3] %vm3012, %v3010
    // Predicated region
    $region126: #{mmian_forward.1} parent=1 // pred_check
      _
    $region127: #{mmian_forward.1} parent=1 // pred_check_branch
      %3015 = sbr.rel (0) target = $region129
    $region128: #{mmian_forward.1} parent=1 // pred_region
      %3017 = vsyncadd [#allocation5], 0
      %s3019 = sshll.u32 [#allocation4], 4
      %s3020 = int_to_ptr.vmem [resolvable:$true] %s3019
      %s3021 = sshll.u32 %s63, 4
      %s3022 = int_to_ptr.hbm [resolvable:$true] %s3021
      %3024 = dma.vmem_to_hbm [thread:$0]  %s3020, 32, %s3022, [#allocation5]
    $region129: #{mmian_forward.1} parent=1 // pred_fallthru
      _
    // Predicated region
    $region130: #{mmian_forward.1} parent=1 // pred_check
      _
    $region131: #{mmian_forward.1} parent=1 // pred_check_branch
      %3026 = sbr.rel (0) target = $region133
    $region132: #{mmian_forward.1} parent=1 // pred_region
      %3028 = dma.done [#allocation5], 32
    $region133: #{mmian_forward.1} parent=1 // pred_fallthru
      _
    %3029 = vsyncpa [#allocation5], 1

</llo_original>
